<compile_context>
chip_gen: v5e
topology: v5e:2x2
jax: 0.10.0
libtpu: 0.0.40
codegen_flags: <defaults>
</compile_context>

<pallas_src>
import functools
import math

import jax
import jax.numpy as jnp
from jax.experimental import pallas as pl
from jax.experimental.pallas import tpu as pltpu

# ---------------- model hyper-parameters (small, deterministic) -------------
SEQ = 8          # sequence length
BATCH = 2        # batch size
D_MODEL = 32     # embedding dim
NHEAD = 4        # attention heads
HEAD_DIM = D_MODEL // NHEAD
D_FF = 64        # feed-forward hidden dim
NUM_LAYERS = 2   # number of (weight-shared) encoder layer applications
LN_EPS = 1e-5


def _layer_norm(x, gamma, beta):
    mu = jnp.mean(x, axis=-1, keepdims=True)
    var = jnp.mean((x - mu) * (x - mu), axis=-1, keepdims=True)
    inv = jax.lax.rsqrt(var + LN_EPS)
    return (x - mu) * inv * gamma + beta


def encoder_kernel(x_ref, wqkv_ref, wo_ref, w1_ref, w2_ref, p_ref, out_ref, *,
                   num_layers, nhead, head_dim, d_ff, batch):
    d_model = nhead * head_dim
    bs = x_ref.shape[0]                    # B * S rows

    w_qkv = wqkv_ref[...]                  # (D, 3D) bf16; softmax scale folded into Q cols
    w_o = wo_ref[...]                      # (D, D)  bf16
    w_1 = w1_ref[...]                      # (D, F)  bf16
    w_2 = w2_ref[...]                      # (F, D)  bf16
    P = p_ref[...]                         # (8, 128) f32 packed biases / LN params

    b_qkv = P[0:1, :3 * d_model]
    b_o = P[1:2, :d_model]
    b_1 = P[2:3, :d_ff]
    b_2 = P[3:4, :d_model]
    g_1 = P[4:5, :d_model]
    be_1 = P[5:6, :d_model]
    g_2 = P[6:7, :d_model]
    be_2 = P[7:8, :d_model]

    # Block-diagonal additive mask, computed ONCE before the layer loop.
    # The (S, B, D) activation was flattened row-major, so row r belongs to
    # batch element (r % batch); rows may only attend to same-batch columns.
    row_b = jax.lax.broadcasted_iota(jnp.int32, (bs, bs), 0) % batch
    col_b = jax.lax.broadcasted_iota(jnp.int32, (bs, bs), 1) % batch
    mask_add = jnp.where(row_b == col_b, 0.0, -1e30)[None]     # (1, BS, BS) f32

    def one_layer(x):                                          # x: (BS, D) f32
        xb = x.astype(jnp.bfloat16)

        # ---- fused QKV projection (scale already folded into Q weights) ----
        qkv = jnp.dot(xb, w_qkv, preferred_element_type=jnp.float32) + b_qkv
        q = qkv[:, :d_model].reshape(bs, nhead, head_dim).astype(jnp.bfloat16)
        k = qkv[:, d_model:2 * d_model].reshape(
            bs, nhead, head_dim).astype(jnp.bfloat16)
        v = qkv[:, 2 * d_model:].reshape(
            bs, nhead, head_dim).astype(jnp.bfloat16)

        # ---- batched multi-head attention (all heads in one einsum pair) ---
        s = jnp.einsum('qhd,khd->hqk', q, k,
                       preferred_element_type=jnp.float32)     # (H, BS, BS)
        s = s + mask_add
        s = s - jnp.max(s, axis=-1, keepdims=True)
        p = jnp.exp(s)
        p = p * pl.reciprocal(jnp.sum(p, axis=-1, keepdims=True), approx=True)
        ctx = jnp.einsum('hqk,khd->qhd', p.astype(jnp.bfloat16), v,
                         preferred_element_type=jnp.float32)   # (BS, H, Dh)
        attn = ctx.reshape(bs, d_model)                        # merge heads
        attn = jnp.dot(attn.astype(jnp.bfloat16), w_o,
                       preferred_element_type=jnp.float32) + b_o

        # ---- residual + LayerNorm1 (f32) ----
        y = _layer_norm(x + attn, g_1, be_1)

        # ---- feed forward ----
        h1 = jnp.dot(y.astype(jnp.bfloat16), w_1,
                     preferred_element_type=jnp.float32) + b_1
        h1 = jnp.maximum(h1, 0.0)                              # ReLU
        h2 = jnp.dot(h1.astype(jnp.bfloat16), w_2,
                     preferred_element_type=jnp.float32) + b_2

        # ---- residual + LayerNorm2 (f32) ----
        return _layer_norm(y + h2, g_2, be_2)

    x = x_ref[...]                                             # (BS, D) f32
    # Weight-shared layer reuse; NUM_LAYERS is tiny so static unroll is fine.
    # If num_layers were raised above ~4, switch to lax.fori_loop on x.
    for _ in range(num_layers):
        x = one_layer(x)
    out_ref[...] = x


def pack_params(p):
    """Host-side, one-time parameter packing.

    Weights stay as four separate lane-aligned bf16 arrays; biases and
    LayerNorm parameters go into one (8, 128) f32 slab. The 1/sqrt(head_dim)
    softmax scale is folded into the Q projection."""
    scale = 1.0 / math.sqrt(HEAD_DIM)
    wqkv = p["wqkv"].at[:, :D_MODEL].multiply(scale).astype(jnp.bfloat16)
    bqkv = p["bqkv"].at[:D_MODEL].multiply(scale)

    wo = p["wo"].astype(jnp.bfloat16)
    w1 = p["w1"].astype(jnp.bfloat16)
    w2 = p["w2"].astype(jnp.bfloat16)

    def row(v):
        return jnp.pad(v.astype(jnp.float32), (0, 128 - v.shape[0]))

    p_slab = jnp.stack([
        row(bqkv), row(p["bo"]), row(p["b1"]), row(p["b2"]),
        row(p["ln1_g"]), row(p["ln1_b"]), row(p["ln2_g"]), row(p["ln2_b"]),
    ], axis=0)                                                 # (8, 128) f32
    return wqkv, wo, w1, w2, p_slab


def transformer_encoder(src_sbd, wqkv, wo, w1, w2, p_slab, num_layers):
    """TransformerEncoder.forward. src_sbd: (S, B, D) seq-first like PyTorch."""
    S, B, D = src_sbd.shape
    x = src_sbd.reshape(S * B, D)          # free row-major flatten (no transpose)

    kernel = functools.partial(
        encoder_kernel, num_layers=num_layers, nhead=NHEAD,
        head_dim=HEAD_DIM, d_ff=D_FF, batch=B)

    vmem = pl.BlockSpec(memory_space=pltpu.MemorySpace.VMEM)
    out = pl.pallas_call(
        kernel,
        out_shape=jax.ShapeDtypeStruct((S * B, D), jnp.float32),
        in_specs=[vmem, vmem, vmem, vmem, vmem, vmem],
        out_specs=vmem,
    )(x, wqkv, wo, w1, w2, p_slab)

    # self.norm is None in this instantiation (optional in the module)
    return out.reshape(S, B, D)            # free reshape back to (S, B, D)


def init_params(key):
    ks = jax.random.split(key, 8)
    s = 0.05
    return {
        "wqkv": s * jax.random.normal(ks[0], (D_MODEL, 3 * D_MODEL), jnp.float32),
        "bqkv": s * jax.random.normal(ks[1], (3 * D_MODEL,), jnp.float32),
        "wo":   s * jax.random.normal(ks[2], (D_MODEL, D_MODEL), jnp.float32),
        "bo":   s * jax.random.normal(ks[3], (D_MODEL,), jnp.float32),
        "ln1_g": jnp.ones((D_MODEL,), jnp.float32),
        "ln1_b": jnp.zeros((D_MODEL,), jnp.float32),
        "w1":   s * jax.random.normal(ks[4], (D_MODEL, D_FF), jnp.float32),
        "b1":   s * jax.random.normal(ks[5], (D_FF,), jnp.float32),
        "w2":   s * jax.random.normal(ks[6], (D_FF, D_MODEL), jnp.float32),
        "b2":   s * jax.random.normal(ks[7], (D_MODEL,), jnp.float32),
        "ln2_g": jnp.ones((D_MODEL,), jnp.float32),
        "ln2_b": jnp.zeros((D_MODEL,), jnp.float32),
    }


if __name__ == "__main__":
    key = jax.random.PRNGKey(0)
    k_src, k_par = jax.random.split(key)
    # src in PyTorch layout (S, B, D)
    src = jax.random.normal(k_src, (SEQ, BATCH, D_MODEL), jnp.float32)
    params = init_params(k_par)
    wqkv, wo, w1, w2, p_slab = pack_params(params)   # host-side, once

    out = transformer_encoder(src, wqkv, wo, w1, w2, p_slab, NUM_LAYERS)
    out = jax.block_until_ready(out)
    assert out.shape == (SEQ, BATCH, D_MODEL), out.shape
    assert jnp.all(jnp.isfinite(out))
    print("KERNEL_OK")
</pallas_src>

<mosaic_0001>
module attributes {stable_mosaic.version = 11 : i64} {
  func.func @encoder_kernel(%arg0: memref<16x32xf32, #tpu.memory_space<vmem>>, %arg1: memref<32x96xbf16, #tpu.memory_space<vmem>>, %arg2: memref<32x32xbf16, #tpu.memory_space<vmem>>, %arg3: memref<32x64xbf16, #tpu.memory_space<vmem>>, %arg4: memref<64x32xbf16, #tpu.memory_space<vmem>>, %arg5: memref<8x128xf32, #tpu.memory_space<vmem>>, %arg6: memref<16x32xf32, #tpu.memory_space<vmem>>) attributes {dimension_semantics = [], scalar_prefetch = 0 : i64, scratch_operands = 0 : i64, tpu.core_type = #tpu.core_type<tc>} {
    %c0 = arith.constant 0 : index
    %c0_0 = arith.constant 0 : index
    %0 = vector.load %arg1[%c0, %c0_0] : memref<32x96xbf16, #tpu.memory_space<vmem>>, vector<32x96xbf16>
    %c0_1 = arith.constant 0 : index
    %c0_2 = arith.constant 0 : index
    %1 = vector.load %arg2[%c0_1, %c0_2] : memref<32x32xbf16, #tpu.memory_space<vmem>>, vector<32x32xbf16>
    %c0_3 = arith.constant 0 : index
    %c0_4 = arith.constant 0 : index
    %2 = vector.load %arg3[%c0_3, %c0_4] : memref<32x64xbf16, #tpu.memory_space<vmem>>, vector<32x64xbf16>
    %c0_5 = arith.constant 0 : index
    %c0_6 = arith.constant 0 : index
    %3 = vector.load %arg4[%c0_5, %c0_6] : memref<64x32xbf16, #tpu.memory_space<vmem>>, vector<64x32xbf16>
    %c0_7 = arith.constant 0 : index
    %c0_8 = arith.constant 0 : index
    %4 = vector.load %arg5[%c0_7, %c0_8] : memref<8x128xf32, #tpu.memory_space<vmem>>, vector<8x128xf32>
    %5 = vector.extract_strided_slice %4 {offsets = [0, 0], sizes = [1, 96], strides = [1, 1]} : vector<8x128xf32> to vector<1x96xf32>
    %6 = vector.extract_strided_slice %4 {offsets = [1, 0], sizes = [1, 32], strides = [1, 1]} : vector<8x128xf32> to vector<1x32xf32>
    %7 = vector.extract_strided_slice %4 {offsets = [2, 0], sizes = [1, 64], strides = [1, 1]} : vector<8x128xf32> to vector<1x64xf32>
    %8 = vector.extract_strided_slice %4 {offsets = [3, 0], sizes = [1, 32], strides = [1, 1]} : vector<8x128xf32> to vector<1x32xf32>
    %9 = vector.extract_strided_slice %4 {offsets = [4, 0], sizes = [1, 32], strides = [1, 1]} : vector<8x128xf32> to vector<1x32xf32>
    %10 = vector.extract_strided_slice %4 {offsets = [5, 0], sizes = [1, 32], strides = [1, 1]} : vector<8x128xf32> to vector<1x32xf32>
    %11 = vector.extract_strided_slice %4 {offsets = [6, 0], sizes = [1, 32], strides = [1, 1]} : vector<8x128xf32> to vector<1x32xf32>
    %12 = vector.extract_strided_slice %4 {offsets = [7, 0], sizes = [1, 32], strides = [1, 1]} : vector<8x128xf32> to vector<1x32xf32>
    %13 = tpu.iota {dimensions = array<i32: 0>} : vector<16x16xi32>
    %c2_i32 = arith.constant 2 : i32
    %c0_i32 = arith.constant 0 : i32
    %14 = arith.cmpi eq, %c2_i32, %c0_i32 : i32
    %c1_i32 = arith.constant 1 : i32
    %15 = arith.select %14, %c1_i32, %c2_i32 : i32
    %16 = vector.broadcast %15 : i32 to vector<16x16xi32>
    %17 = arith.remsi %13, %16 : vector<16x16xi32>
    %c0_i32_9 = arith.constant 0 : i32
    %18 = vector.broadcast %c0_i32_9 : i32 to vector<16x16xi32>
    %19 = arith.cmpi ne, %17, %18 : vector<16x16xi32>
    %c0_i32_10 = arith.constant 0 : i32
    %20 = vector.broadcast %c0_i32_10 : i32 to vector<16x16xi32>
    %21 = arith.cmpi slt, %17, %20 : vector<16x16xi32>
    %c0_i32_11 = arith.constant 0 : i32
    %22 = arith.cmpi slt, %15, %c0_i32_11 : i32
    %23 = vector.broadcast %22 : i1 to vector<16x16xi1>
    %24 = vector.broadcast %23 : vector<16x16xi1> to vector<16x16xi1>
    %25 = arith.xori %21, %24 : vector<16x16xi1>
    %26 = arith.andi %25, %19 : vector<16x16xi1>
    %27 = vector.broadcast %15 : i32 to vector<16x16xi32>
    %28 = arith.addi %17, %27 : vector<16x16xi32>
    %29 = arith.select %26, %28, %17 : vector<16x16xi1>, vector<16x16xi32>
    %30 = tpu.iota {dimensions = array<i32: 1>} : vector<16x16xi32>
    %c2_i32_12 = arith.constant 2 : i32
    %c0_i32_13 = arith.constant 0 : i32
    %31 = arith.cmpi eq, %c2_i32_12, %c0_i32_13 : i32
    %c1_i32_14 = arith.constant 1 : i32
    %32 = arith.select %31, %c1_i32_14, %c2_i32_12 : i32
    %33 = vector.broadcast %32 : i32 to vector<16x16xi32>
    %34 = arith.remsi %30, %33 : vector<16x16xi32>
    %c0_i32_15 = arith.constant 0 : i32
    %35 = vector.broadcast %c0_i32_15 : i32 to vector<16x16xi32>
    %36 = arith.cmpi ne, %34, %35 : vector<16x16xi32>
    %c0_i32_16 = arith.constant 0 : i32
    %37 = vector.broadcast %c0_i32_16 : i32 to vector<16x16xi32>
    %38 = arith.cmpi slt, %34, %37 : vector<16x16xi32>
    %c0_i32_17 = arith.constant 0 : i32
    %39 = arith.cmpi slt, %32, %c0_i32_17 : i32
    %40 = vector.broadcast %39 : i1 to vector<16x16xi1>
    %41 = vector.broadcast %40 : vector<16x16xi1> to vector<16x16xi1>
    %42 = arith.xori %38, %41 : vector<16x16xi1>
    %43 = arith.andi %42, %36 : vector<16x16xi1>
    %44 = vector.broadcast %32 : i32 to vector<16x16xi32>
    %45 = arith.addi %34, %44 : vector<16x16xi32>
    %46 = arith.select %43, %45, %34 : vector<16x16xi1>, vector<16x16xi32>
    %47 = arith.cmpi eq, %29, %46 : vector<16x16xi32>
    %cst = arith.constant 0.000000e+00 : f32
    %cst_18 = arith.constant -1.000000e+30 : f32
    %48 = vector.broadcast %cst : f32 to vector<16x16xf32>
    %49 = vector.broadcast %cst_18 : f32 to vector<16x16xf32>
    %50 = arith.select %47, %48, %49 : vector<16x16xi1>, vector<16x16xf32>
    %51 = vector.shape_cast %50 : vector<16x16xf32> to vector<1x16x16xf32>
    %c0_19 = arith.constant 0 : index
    %c0_20 = arith.constant 0 : index
    %52 = vector.load %arg0[%c0_19, %c0_20] : memref<16x32xf32, #tpu.memory_space<vmem>>, vector<16x32xf32>
    %53 = arith.truncf %52 : vector<16x32xf32> to vector<16x32xbf16>
    %cst_21 = arith.constant dense<0.000000e+00> : vector<16x96xf32>
    %54 = tpu.matmul %53, %0, %cst_21 {dimension_numbers = #tpu.dot_dimension_numbers<[1], [0], [0], [1], [0, 0, 1, 1], [], []>} : vector<16x32xbf16>, vector<32x96xbf16>, vector<16x96xf32> -> vector<16x96xf32>
    %55 = vector.broadcast %5 : vector<1x96xf32> to vector<16x96xf32>
    %56 = arith.addf %54, %55 : vector<16x96xf32>
    %57 = vector.extract_strided_slice %56 {offsets = [0, 0], sizes = [16, 32], strides = [1, 1]} : vector<16x96xf32> to vector<16x32xf32>
    %58 = vector.shape_cast %57 : vector<16x32xf32> to vector<16x4x8xf32>
    %59 = arith.truncf %58 : vector<16x4x8xf32> to vector<16x4x8xbf16>
    %60 = vector.extract_strided_slice %56 {offsets = [0, 32], sizes = [16, 32], strides = [1, 1]} : vector<16x96xf32> to vector<16x32xf32>
    %61 = vector.shape_cast %60 : vector<16x32xf32> to vector<16x4x8xf32>
    %62 = arith.truncf %61 : vector<16x4x8xf32> to vector<16x4x8xbf16>
    %63 = vector.extract_strided_slice %56 {offsets = [0, 64], sizes = [16, 32], strides = [1, 1]} : vector<16x96xf32> to vector<16x32xf32>
    %64 = vector.shape_cast %63 : vector<16x32xf32> to vector<16x4x8xf32>
    %65 = arith.truncf %64 : vector<16x4x8xf32> to vector<16x4x8xbf16>
    "tpu.trace_start"() <{level = 10 : i32, message = "qhd,khd->hqk"}> : () -> ()
    %cst_22 = arith.constant dense<0.000000e+00> : vector<4x16x16xf32>
    %66 = tpu.matmul %59, %62, %cst_22 {dimension_numbers = #tpu.dot_dimension_numbers<[2], [2], [0], [0], [0, 1, 0, 0, 1, 0], [1], [1]>} : vector<16x4x8xbf16>, vector<16x4x8xbf16>, vector<4x16x16xf32> -> vector<4x16x16xf32>
    "tpu.trace_stop"() : () -> ()
    %67 = vector.broadcast %51 : vector<1x16x16xf32> to vector<4x16x16xf32>
    %68 = arith.addf %66, %67 : vector<4x16x16xf32>
    %cst_23 = arith.constant dense<0xFF800000> : vector<4x16xf32>
    %69 = vector.multi_reduction <maximumf>, %68, %cst_23 [2] : vector<4x16x16xf32> to vector<4x16xf32>
    %70 = vector.shape_cast %69 : vector<4x16xf32> to vector<4x16x1xf32>
    %71 = vector.broadcast %70 : vector<4x16x1xf32> to vector<4x16x16xf32>
    %72 = arith.subf %68, %71 : vector<4x16x16xf32>
    %73 = math.exp %72 : vector<4x16x16xf32>
    %cst_24 = arith.constant dense<0.000000e+00> : vector<4x16xf32>
    %74 = vector.multi_reduction <add>, %73, %cst_24 [2] : vector<4x16x16xf32> to vector<4x16xf32>
    %75 = vector.shape_cast %74 : vector<4x16xf32> to vector<4x16x1xf32>
    %76 = tpu.reciprocal %75 {approx = true} : vector<4x16x1xf32> -> vector<4x16x1xf32>
    %77 = vector.broadcast %76 : vector<4x16x1xf32> to vector<4x16x16xf32>
    %78 = arith.mulf %73, %77 : vector<4x16x16xf32>
    %79 = arith.truncf %78 : vector<4x16x16xf32> to vector<4x16x16xbf16>
    "tpu.trace_start"() <{level = 10 : i32, message = "hqk,khd->qhd"}> : () -> ()
    %cst_25 = arith.constant dense<0.000000e+00> : vector<4x8x16xf32>
    %80 = tpu.matmul %65, %79, %cst_25 {dimension_numbers = #tpu.dot_dimension_numbers<[0], [2], [2], [1], [0, 1, 0, 2, 1, 1], [1], [0]>} : vector<16x4x8xbf16>, vector<4x16x16xbf16>, vector<4x8x16xf32> -> vector<4x8x16xf32>
    %81 = tpu.transpose %80, [2, 0, 1] : vector<4x8x16xf32> -> vector<16x4x8xf32>
    "tpu.trace_stop"() : () -> ()
    %82 = vector.shape_cast %81 : vector<16x4x8xf32> to vector<16x32xf32>
    %83 = arith.truncf %82 : vector<16x32xf32> to vector<16x32xbf16>
    %cst_26 = arith.constant dense<0.000000e+00> : vector<16x32xf32>
    %84 = tpu.matmul %83, %1, %cst_26 {dimension_numbers = #tpu.dot_dimension_numbers<[1], [0], [0], [1], [0, 0, 1, 1], [], []>} : vector<16x32xbf16>, vector<32x32xbf16>, vector<16x32xf32> -> vector<16x32xf32>
    %85 = vector.broadcast %6 : vector<1x32xf32> to vector<16x32xf32>
    %86 = arith.addf %84, %85 : vector<16x32xf32>
    %87 = arith.addf %52, %86 : vector<16x32xf32>
    %cst_27 = arith.constant dense<0.000000e+00> : vector<16xf32>
    %88 = vector.multi_reduction <add>, %87, %cst_27 [1] : vector<16x32xf32> to vector<16xf32>
    %89 = vector.shape_cast %88 : vector<16xf32> to vector<16x1xf32>
    %cst_28 = arith.constant 3.200000e+01 : f32
    %90 = vector.broadcast %cst_28 : f32 to vector<16x1xf32>
    %91 = arith.divf %89, %90 : vector<16x1xf32>
    %92 = vector.broadcast %91 : vector<16x1xf32> to vector<16x32xf32>
    %93 = arith.subf %87, %92 : vector<16x32xf32>
    %94 = vector.broadcast %91 : vector<16x1xf32> to vector<16x32xf32>
    %95 = arith.subf %87, %94 : vector<16x32xf32>
    %96 = arith.mulf %93, %95 : vector<16x32xf32>
    %cst_29 = arith.constant dense<0.000000e+00> : vector<16xf32>
    %97 = vector.multi_reduction <add>, %96, %cst_29 [1] : vector<16x32xf32> to vector<16xf32>
    %98 = vector.shape_cast %97 : vector<16xf32> to vector<16x1xf32>
    %cst_30 = arith.constant 3.200000e+01 : f32
    %99 = vector.broadcast %cst_30 : f32 to vector<16x1xf32>
    %100 = arith.divf %98, %99 : vector<16x1xf32>
    %cst_31 = arith.constant 9.99999974E-6 : f32
    %101 = vector.broadcast %cst_31 : f32 to vector<16x1xf32>
    %102 = arith.addf %100, %101 : vector<16x1xf32>
    %103 = math.rsqrt %102 : vector<16x1xf32>
    %104 = vector.broadcast %91 : vector<16x1xf32> to vector<16x32xf32>
    %105 = arith.subf %87, %104 : vector<16x32xf32>
    %106 = vector.broadcast %103 : vector<16x1xf32> to vector<16x32xf32>
    %107 = arith.mulf %105, %106 : vector<16x32xf32>
    %108 = vector.broadcast %9 : vector<1x32xf32> to vector<16x32xf32>
    %109 = arith.mulf %107, %108 : vector<16x32xf32>
    %110 = vector.broadcast %10 : vector<1x32xf32> to vector<16x32xf32>
    %111 = arith.addf %109, %110 : vector<16x32xf32>
    %112 = arith.truncf %111 : vector<16x32xf32> to vector<16x32xbf16>
    %cst_32 = arith.constant dense<0.000000e+00> : vector<16x64xf32>
    %113 = tpu.matmul %112, %2, %cst_32 {dimension_numbers = #tpu.dot_dimension_numbers<[1], [0], [0], [1], [0, 0, 1, 1], [], []>} : vector<16x32xbf16>, vector<32x64xbf16>, vector<16x64xf32> -> vector<16x64xf32>
    %114 = vector.broadcast %7 : vector<1x64xf32> to vector<16x64xf32>
    %115 = arith.addf %113, %114 : vector<16x64xf32>
    %cst_33 = arith.constant 0.000000e+00 : f32
    %116 = vector.broadcast %cst_33 : f32 to vector<16x64xf32>
    %117 = arith.maximumf %115, %116 : vector<16x64xf32>
    %118 = arith.truncf %117 : vector<16x64xf32> to vector<16x64xbf16>
    %cst_34 = arith.constant dense<0.000000e+00> : vector<16x32xf32>
    %119 = tpu.matmul %118, %3, %cst_34 {dimension_numbers = #tpu.dot_dimension_numbers<[1], [0], [0], [1], [0, 0, 1, 1], [], []>} : vector<16x64xbf16>, vector<64x32xbf16>, vector<16x32xf32> -> vector<16x32xf32>
    %120 = vector.broadcast %8 : vector<1x32xf32> to vector<16x32xf32>
    %121 = arith.addf %119, %120 : vector<16x32xf32>
    %122 = arith.addf %111, %121 : vector<16x32xf32>
    %cst_35 = arith.constant dense<0.000000e+00> : vector<16xf32>
    %123 = vector.multi_reduction <add>, %122, %cst_35 [1] : vector<16x32xf32> to vector<16xf32>
    %124 = vector.shape_cast %123 : vector<16xf32> to vector<16x1xf32>
    %cst_36 = arith.constant 3.200000e+01 : f32
    %125 = vector.broadcast %cst_36 : f32 to vector<16x1xf32>
    %126 = arith.divf %124, %125 : vector<16x1xf32>
    %127 = vector.broadcast %126 : vector<16x1xf32> to vector<16x32xf32>
    %128 = arith.subf %122, %127 : vector<16x32xf32>
    %129 = vector.broadcast %126 : vector<16x1xf32> to vector<16x32xf32>
    %130 = arith.subf %122, %129 : vector<16x32xf32>
    %131 = arith.mulf %128, %130 : vector<16x32xf32>
    %cst_37 = arith.constant dense<0.000000e+00> : vector<16xf32>
    %132 = vector.multi_reduction <add>, %131, %cst_37 [1] : vector<16x32xf32> to vector<16xf32>
    %133 = vector.shape_cast %132 : vector<16xf32> to vector<16x1xf32>
    %cst_38 = arith.constant 3.200000e+01 : f32
    %134 = vector.broadcast %cst_38 : f32 to vector<16x1xf32>
    %135 = arith.divf %133, %134 : vector<16x1xf32>
    %cst_39 = arith.constant 9.99999974E-6 : f32
    %136 = vector.broadcast %cst_39 : f32 to vector<16x1xf32>
    %137 = arith.addf %135, %136 : vector<16x1xf32>
    %138 = math.rsqrt %137 : vector<16x1xf32>
    %139 = vector.broadcast %126 : vector<16x1xf32> to vector<16x32xf32>
    %140 = arith.subf %122, %139 : vector<16x32xf32>
    %141 = vector.broadcast %138 : vector<16x1xf32> to vector<16x32xf32>
    %142 = arith.mulf %140, %141 : vector<16x32xf32>
    %143 = vector.broadcast %11 : vector<1x32xf32> to vector<16x32xf32>
    %144 = arith.mulf %142, %143 : vector<16x32xf32>
    %145 = vector.broadcast %12 : vector<1x32xf32> to vector<16x32xf32>
    %146 = arith.addf %144, %145 : vector<16x32xf32>
    %147 = arith.truncf %146 : vector<16x32xf32> to vector<16x32xbf16>
    %cst_40 = arith.constant dense<0.000000e+00> : vector<16x96xf32>
    %148 = tpu.matmul %147, %0, %cst_40 {dimension_numbers = #tpu.dot_dimension_numbers<[1], [0], [0], [1], [0, 0, 1, 1], [], []>} : vector<16x32xbf16>, vector<32x96xbf16>, vector<16x96xf32> -> vector<16x96xf32>
    %149 = vector.broadcast %5 : vector<1x96xf32> to vector<16x96xf32>
    %150 = arith.addf %148, %149 : vector<16x96xf32>
    %151 = vector.extract_strided_slice %150 {offsets = [0, 0], sizes = [16, 32], strides = [1, 1]} : vector<16x96xf32> to vector<16x32xf32>
    %152 = vector.shape_cast %151 : vector<16x32xf32> to vector<16x4x8xf32>
    %153 = arith.truncf %152 : vector<16x4x8xf32> to vector<16x4x8xbf16>
    %154 = vector.extract_strided_slice %150 {offsets = [0, 32], sizes = [16, 32], strides = [1, 1]} : vector<16x96xf32> to vector<16x32xf32>
    %155 = vector.shape_cast %154 : vector<16x32xf32> to vector<16x4x8xf32>
    %156 = arith.truncf %155 : vector<16x4x8xf32> to vector<16x4x8xbf16>
    %157 = vector.extract_strided_slice %150 {offsets = [0, 64], sizes = [16, 32], strides = [1, 1]} : vector<16x96xf32> to vector<16x32xf32>
    %158 = vector.shape_cast %157 : vector<16x32xf32> to vector<16x4x8xf32>
    %159 = arith.truncf %158 : vector<16x4x8xf32> to vector<16x4x8xbf16>
    "tpu.trace_start"() <{level = 10 : i32, message = "qhd,khd->hqk"}> : () -> ()
    %cst_41 = arith.constant dense<0.000000e+00> : vector<4x16x16xf32>
    %160 = tpu.matmul %153, %156, %cst_41 {dimension_numbers = #tpu.dot_dimension_numbers<[2], [2], [0], [0], [0, 1, 0, 0, 1, 0], [1], [1]>} : vector<16x4x8xbf16>, vector<16x4x8xbf16>, vector<4x16x16xf32> -> vector<4x16x16xf32>
    "tpu.trace_stop"() : () -> ()
    %161 = vector.broadcast %51 : vector<1x16x16xf32> to vector<4x16x16xf32>
    %162 = arith.addf %160, %161 : vector<4x16x16xf32>
    %cst_42 = arith.constant dense<0xFF800000> : vector<4x16xf32>
    %163 = vector.multi_reduction <maximumf>, %162, %cst_42 [2] : vector<4x16x16xf32> to vector<4x16xf32>
    %164 = vector.shape_cast %163 : vector<4x16xf32> to vector<4x16x1xf32>
    %165 = vector.broadcast %164 : vector<4x16x1xf32> to vector<4x16x16xf32>
    %166 = arith.subf %162, %165 : vector<4x16x16xf32>
    %167 = math.exp %166 : vector<4x16x16xf32>
    %cst_43 = arith.constant dense<0.000000e+00> : vector<4x16xf32>
    %168 = vector.multi_reduction <add>, %167, %cst_43 [2] : vector<4x16x16xf32> to vector<4x16xf32>
    %169 = vector.shape_cast %168 : vector<4x16xf32> to vector<4x16x1xf32>
    %170 = tpu.reciprocal %169 {approx = true} : vector<4x16x1xf32> -> vector<4x16x1xf32>
    %171 = vector.broadcast %170 : vector<4x16x1xf32> to vector<4x16x16xf32>
    %172 = arith.mulf %167, %171 : vector<4x16x16xf32>
    %173 = arith.truncf %172 : vector<4x16x16xf32> to vector<4x16x16xbf16>
    "tpu.trace_start"() <{level = 10 : i32, message = "hqk,khd->qhd"}> : () -> ()
    %cst_44 = arith.constant dense<0.000000e+00> : vector<4x8x16xf32>
    %174 = tpu.matmul %159, %173, %cst_44 {dimension_numbers = #tpu.dot_dimension_numbers<[0], [2], [2], [1], [0, 1, 0, 2, 1, 1], [1], [0]>} : vector<16x4x8xbf16>, vector<4x16x16xbf16>, vector<4x8x16xf32> -> vector<4x8x16xf32>
    %175 = tpu.transpose %174, [2, 0, 1] : vector<4x8x16xf32> -> vector<16x4x8xf32>
    "tpu.trace_stop"() : () -> ()
    %176 = vector.shape_cast %175 : vector<16x4x8xf32> to vector<16x32xf32>
    %177 = arith.truncf %176 : vector<16x32xf32> to vector<16x32xbf16>
    %cst_45 = arith.constant dense<0.000000e+00> : vector<16x32xf32>
    %178 = tpu.matmul %177, %1, %cst_45 {dimension_numbers = #tpu.dot_dimension_numbers<[1], [0], [0], [1], [0, 0, 1, 1], [], []>} : vector<16x32xbf16>, vector<32x32xbf16>, vector<16x32xf32> -> vector<16x32xf32>
    %179 = vector.broadcast %6 : vector<1x32xf32> to vector<16x32xf32>
    %180 = arith.addf %178, %179 : vector<16x32xf32>
    %181 = arith.addf %146, %180 : vector<16x32xf32>
    %cst_46 = arith.constant dense<0.000000e+00> : vector<16xf32>
    %182 = vector.multi_reduction <add>, %181, %cst_46 [1] : vector<16x32xf32> to vector<16xf32>
    %183 = vector.shape_cast %182 : vector<16xf32> to vector<16x1xf32>
    %cst_47 = arith.constant 3.200000e+01 : f32
    %184 = vector.broadcast %cst_47 : f32 to vector<16x1xf32>
    %185 = arith.divf %183, %184 : vector<16x1xf32>
    %186 = vector.broadcast %185 : vector<16x1xf32> to vector<16x32xf32>
    %187 = arith.subf %181, %186 : vector<16x32xf32>
    %188 = vector.broadcast %185 : vector<16x1xf32> to vector<16x32xf32>
    %189 = arith.subf %181, %188 : vector<16x32xf32>
    %190 = arith.mulf %187, %189 : vector<16x32xf32>
    %cst_48 = arith.constant dense<0.000000e+00> : vector<16xf32>
    %191 = vector.multi_reduction <add>, %190, %cst_48 [1] : vector<16x32xf32> to vector<16xf32>
    %192 = vector.shape_cast %191 : vector<16xf32> to vector<16x1xf32>
    %cst_49 = arith.constant 3.200000e+01 : f32
    %193 = vector.broadcast %cst_49 : f32 to vector<16x1xf32>
    %194 = arith.divf %192, %193 : vector<16x1xf32>
    %cst_50 = arith.constant 9.99999974E-6 : f32
    %195 = vector.broadcast %cst_50 : f32 to vector<16x1xf32>
    %196 = arith.addf %194, %195 : vector<16x1xf32>
    %197 = math.rsqrt %196 : vector<16x1xf32>
    %198 = vector.broadcast %185 : vector<16x1xf32> to vector<16x32xf32>
    %199 = arith.subf %181, %198 : vector<16x32xf32>
    %200 = vector.broadcast %197 : vector<16x1xf32> to vector<16x32xf32>
    %201 = arith.mulf %199, %200 : vector<16x32xf32>
    %202 = vector.broadcast %9 : vector<1x32xf32> to vector<16x32xf32>
    %203 = arith.mulf %201, %202 : vector<16x32xf32>
    %204 = vector.broadcast %10 : vector<1x32xf32> to vector<16x32xf32>
    %205 = arith.addf %203, %204 : vector<16x32xf32>
    %206 = arith.truncf %205 : vector<16x32xf32> to vector<16x32xbf16>
    %cst_51 = arith.constant dense<0.000000e+00> : vector<16x64xf32>
    %207 = tpu.matmul %206, %2, %cst_51 {dimension_numbers = #tpu.dot_dimension_numbers<[1], [0], [0], [1], [0, 0, 1, 1], [], []>} : vector<16x32xbf16>, vector<32x64xbf16>, vector<16x64xf32> -> vector<16x64xf32>
    %208 = vector.broadcast %7 : vector<1x64xf32> to vector<16x64xf32>
    %209 = arith.addf %207, %208 : vector<16x64xf32>
    %cst_52 = arith.constant 0.000000e+00 : f32
    %210 = vector.broadcast %cst_52 : f32 to vector<16x64xf32>
    %211 = arith.maximumf %209, %210 : vector<16x64xf32>
    %212 = arith.truncf %211 : vector<16x64xf32> to vector<16x64xbf16>
    %cst_53 = arith.constant dense<0.000000e+00> : vector<16x32xf32>
    %213 = tpu.matmul %212, %3, %cst_53 {dimension_numbers = #tpu.dot_dimension_numbers<[1], [0], [0], [1], [0, 0, 1, 1], [], []>} : vector<16x64xbf16>, vector<64x32xbf16>, vector<16x32xf32> -> vector<16x32xf32>
    %214 = vector.broadcast %8 : vector<1x32xf32> to vector<16x32xf32>
    %215 = arith.addf %213, %214 : vector<16x32xf32>
    %216 = arith.addf %205, %215 : vector<16x32xf32>
    %cst_54 = arith.constant dense<0.000000e+00> : vector<16xf32>
    %217 = vector.multi_reduction <add>, %216, %cst_54 [1] : vector<16x32xf32> to vector<16xf32>
    %218 = vector.shape_cast %217 : vector<16xf32> to vector<16x1xf32>
    %cst_55 = arith.constant 3.200000e+01 : f32
    %219 = vector.broadcast %cst_55 : f32 to vector<16x1xf32>
    %220 = arith.divf %218, %219 : vector<16x1xf32>
    %221 = vector.broadcast %220 : vector<16x1xf32> to vector<16x32xf32>
    %222 = arith.subf %216, %221 : vector<16x32xf32>
    %223 = vector.broadcast %220 : vector<16x1xf32> to vector<16x32xf32>
    %224 = arith.subf %216, %223 : vector<16x32xf32>
    %225 = arith.mulf %222, %224 : vector<16x32xf32>
    %cst_56 = arith.constant dense<0.000000e+00> : vector<16xf32>
    %226 = vector.multi_reduction <add>, %225, %cst_56 [1] : vector<16x32xf32> to vector<16xf32>
    %227 = vector.shape_cast %226 : vector<16xf32> to vector<16x1xf32>
    %cst_57 = arith.constant 3.200000e+01 : f32
    %228 = vector.broadcast %cst_57 : f32 to vector<16x1xf32>
    %229 = arith.divf %227, %228 : vector<16x1xf32>
    %cst_58 = arith.constant 9.99999974E-6 : f32
    %230 = vector.broadcast %cst_58 : f32 to vector<16x1xf32>
    %231 = arith.addf %229, %230 : vector<16x1xf32>
    %232 = math.rsqrt %231 : vector<16x1xf32>
    %233 = vector.broadcast %220 : vector<16x1xf32> to vector<16x32xf32>
    %234 = arith.subf %216, %233 : vector<16x32xf32>
    %235 = vector.broadcast %232 : vector<16x1xf32> to vector<16x32xf32>
    %236 = arith.mulf %234, %235 : vector<16x32xf32>
    %237 = vector.broadcast %11 : vector<1x32xf32> to vector<16x32xf32>
    %238 = arith.mulf %236, %237 : vector<16x32xf32>
    %239 = vector.broadcast %12 : vector<1x32xf32> to vector<16x32xf32>
    %240 = arith.addf %238, %239 : vector<16x32xf32>
    %c0_59 = arith.constant 0 : index
    %c0_60 = arith.constant 0 : index
    %241 = vector.load %arg6[%c0_59, %c0_60] : memref<16x32xf32, #tpu.memory_space<vmem>>, vector<16x32xf32>
    tpu.vector_store %arg6[%c0_59, %c0_60], %240 {strides = array<i32>} : memref<16x32xf32, #tpu.memory_space<vmem>>, vector<16x32xf32>,
    return
  }
}

</mosaic_0001>

<llo_original>
// kernel: tpu_custom_call.1
$region0: #{tpu_custom_call.1}
  #allocation0 [shape = 'u32[]', space=smem, size = 0x4, offset = 0x4, fixed_abs, tag = 'smem constant byte address 0x4 - core index']
  #allocation1 [shape = 'u32[72,128]{1,0:T(1,128)}', space=vmem, size = 0x9000, scoped, tag = 'internal scratch']
  %s0 = inlined_call_operand.vmem [shape: f32[16,32], index: 0, kind: input, shape index: {}]
  %s1 = inlined_call_operand.vmem [shape: bf16[32,96], index: 1, kind: input, shape index: {}]
  %s2 = inlined_call_operand.vmem [shape: bf16[32,32], index: 2, kind: input, shape index: {}]
  %s3 = inlined_call_operand.hbm [shape: bf16[32,64], index: 3, kind: input, shape index: {}]
  %s4 = inlined_call_operand.vmem [shape: bf16[64,32], index: 4, kind: input, shape index: {}]
  %s5 = inlined_call_operand.hbm [shape: f32[8,128], index: 5, kind: input, shape index: {}]
  %s6 = inlined_call_operand.hbm [shape: f32[16,32], index: 6, kind: output, shape index: {}]
  %s7 = sld [smem:[#allocation0]]
  $region42: #{tpu_custom_call.1} parent=0
    _
  %s9 = ssub.s32 1, %s7
  %s10 = scalar_select 0, %s9, %s7
  $region1: #{tpu_custom_call.1} parent=0
    #allocation2 [shape = 'u8[8192]{0}', space=vmem, size = 0x2000, scoped, tag = 'input window, operand 3, single buffered']
    #allocation3 [shape = 's32[1]{0}', space=sflag, size = 0x4, scoped, tag = 'scoped memory for tpu_custom_call.1']
    #allocation4 [shape = 's32[1]{0}', space=sflag, size = 0x4, scoped, tag = 'scoped memory for tpu_custom_call.1']
    #allocation5 [shape = 'u8[4096]{0}', space=vmem, size = 0x1000, scoped, tag = 'input window, operand 5, single buffered']
    #allocation6 [shape = 's32[1]{0}', space=sflag, size = 0x4, scoped, tag = 'scoped memory for tpu_custom_call.1']
    #allocation7 [shape = 'u8[8192]{0}', space=vmem, size = 0x2000, scoped, tag = 'output window, operand 0, single buffered']
    %11 = vsyncpa [#allocation3], 0
    %12 = vsyncpa [#allocation6], 0
    %13 = vsyncpa [#allocation4], 0
    // Predicated region
    $region2: #{tpu_custom_call.1} parent=1 // pred_check
      _
    $region3: #{tpu_custom_call.1} parent=1 // pred_check_branch
      %15 = sbr.rel (0) target = $region5
    $region4: #{tpu_custom_call.1} parent=1 // pred_region
      _
    $region5: #{tpu_custom_call.1} parent=1 // pred_fallthru
      _
    // Predicated region
    $region6: #{tpu_custom_call.1} parent=1 // pred_check
      _
    $region7: #{tpu_custom_call.1} parent=1 // pred_check_branch
      %17 = sbr.rel (0) target = $region9
    $region8: #{tpu_custom_call.1} parent=1 // pred_region
      _
    $region9: #{tpu_custom_call.1} parent=1 // pred_fallthru
      _
    // Predicated region
    $region10: #{tpu_custom_call.1} parent=1 // pred_check
      _
    $region11: #{tpu_custom_call.1} parent=1 // pred_check_branch
      %19 = sbr.rel (0) target = $region13
    $region12: #{tpu_custom_call.1} parent=1 // pred_region
      _
    $region13: #{tpu_custom_call.1} parent=1 // pred_fallthru
      _
    // Predicated region
    $region14: #{tpu_custom_call.1} parent=1 // pred_check
      _
    $region15: #{tpu_custom_call.1} parent=1 // pred_check_branch
      %21 = sbr.rel (0) target = $region17
    $region16: #{tpu_custom_call.1} parent=1 // pred_region
      %23 = vsyncadd [#allocation3], 0
      %s24 = sshll.u32 %s3, 4
      %s25 = int_to_ptr.hbm [resolvable:$true] %s24
      %s26 = sshll.u32 [#allocation2], 4
      %s27 = int_to_ptr.vmem [resolvable:$true] %s26
      %32 = dma.hbm_to_vmem [thread:$0]  %s25, 256, %s27, [#allocation3], 64, 64, 4
    $region17: #{tpu_custom_call.1} parent=1 // pred_fallthru
      _
    // Predicated region
    $region18: #{tpu_custom_call.1} parent=1 // pred_check
      _
    $region19: #{tpu_custom_call.1} parent=1 // pred_check_branch
      %34 = sbr.rel (0) target = $region21
    $region20: #{tpu_custom_call.1} parent=1 // pred_region
      _
    $region21: #{tpu_custom_call.1} parent=1 // pred_fallthru
      _
    // Predicated region
    $region22: #{tpu_custom_call.1} parent=1 // pred_check
      _
    $region23: #{tpu_custom_call.1} parent=1 // pred_check_branch
      %36 = sbr.rel (0) target = $region25
    $region24: #{tpu_custom_call.1} parent=1 // pred_region
      %38 = vsyncadd [#allocation6], 0
      %s40 = sshll.u32 %s5, 4
      %s41 = int_to_ptr.hbm [resolvable:$true] %s40
      %s42 = sshll.u32 [#allocation5], 4
      %s43 = int_to_ptr.vmem [resolvable:$true] %s42
      %45 = dma.hbm_to_vmem [thread:$0]  %s41, 128, %s43, [#allocation6]
    $region25: #{tpu_custom_call.1} parent=1 // pred_fallthru
      _
    // Predicated region
    $region26: #{tpu_custom_call.1} parent=1 // pred_check
      _
    $region27: #{tpu_custom_call.1} parent=1 // pred_check_branch
      %47 = sbr.rel (0) target = $region29
    $region28: #{tpu_custom_call.1} parent=1 // pred_region
      %49 = dma.done [#allocation3], 256
    $region29: #{tpu_custom_call.1} parent=1 // pred_fallthru
      _
    // Predicated region
    $region30: #{tpu_custom_call.1} parent=1 // pred_check
      _
    $region31: #{tpu_custom_call.1} parent=1 // pred_check_branch
      %51 = sbr.rel (0) target = $region33
    $region32: #{tpu_custom_call.1} parent=1 // pred_region
      %53 = dma.done [#allocation6], 128
    $region33: #{tpu_custom_call.1} parent=1 // pred_fallthru
      _
    %v55 = vld [vmem:[%s1] sm:$0xf]
    %v56 = vld [vmem:[%s1 + $0x4] sm:$0xf]
    %v57 = vld [vmem:[%s1 + $0x8] sm:$0xf]
    %v58 = vld [vmem:[%s1 + $0xc] sm:$0xf]
    %v59 = vld [vmem:[%s2] sm:$0xf]
    %v60 = vld [vmem:[%s2 + $0x4] sm:$0xf]
    %v61 = vld [vmem:[%s2 + $0x8] sm:$0xf]
    %v62 = vld [vmem:[%s2 + $0xc] sm:$0xf]
    %v63 = vld [vmem:[#allocation2] sm:$0xf]
    %v64 = vld [vmem:[#allocation2 + $0x4] sm:$0xf]
    %v65 = vld [vmem:[#allocation2 + $0x8] sm:$0xf]
    %v66 = vld [vmem:[#allocation2 + $0xc] sm:$0xf]
    %v67 = vld [vmem:[%s4] sm:$0xf]
    %v68 = vld [vmem:[%s4 + $0x4] sm:$0xf]
    %v69 = vld [vmem:[%s4 + $0x8] sm:$0xf]
    %v70 = vld [vmem:[%s4 + $0xc] sm:$0xf]
    %v71 = vld [vmem:[%s4 + $0x10] sm:$0xf]
    %v72 = vld [vmem:[%s4 + $0x14] sm:$0xf]
    %v73 = vld [vmem:[%s4 + $0x18] sm:$0xf]
    %v74 = vld [vmem:[%s4 + $0x1c] sm:$0xf]
    %v75 = vld [vmem:[#allocation5] sm:$0xff]
    %v76 = vlaneseq
    %v77 = vshrl.u32 %v76, 7
    %v78 = vadd.s32 %v77, 8
    %vm79 = vcmp.lt.s32.totalorder %v77, 0
    %v80 = vsub.s32 0, %v77
    %v81 = vsel %vm79, %v80, %v77
    %v82 = vshrl.u32 %v81, 1
    %v83 = vand.u32 %v81, 1
    %v84 = vsub.s32 0, %v83
    %v85 = vsel %vm79, %v84, %v83
    %vm86 = vcmp.lt.s32.totalorder %v78, 0
    %v87 = vsub.s32 0, %v78
    %v88 = vsel %vm86, %v87, %v78
    %v89 = vshrl.u32 %v88, 1
    %v90 = vand.u32 %v88, 1
    %v91 = vsub.s32 0, %v90
    %v92 = vsel %vm86, %v91, %v90
    %vm93 = vcmp.ne.s32.totalorder %v85, 0
    %vm94 = vcmp.ne.s32.totalorder %v92, 0
    %vm95 = vcmp.lt.s32.totalorder %v85, 0
    %vm96 = vcmp.lt.s32.totalorder %v92, 0
    %vm97 = vmand %vm95, %vm93
    %vm98 = vmand %vm96, %vm94
    %v99 = vadd.s32 %v85, 2
    %v100 = vadd.s32 %v92, 2
    %v101 = vsel %vm97, %v99, %v85
    %v102 = vsel %vm98, %v100, %v92
    %v103 = vlaneseq
    %v104 = vand.u32 %v103, 127
    %vm105 = vcmp.lt.s32.totalorder %v104, 0
    %v106 = vsub.s32 0, %v104
    %v107 = vsel %vm105, %v106, %v104
    %v108 = vshrl.u32 %v107, 1
    %v109 = vand.u32 %v107, 1
    %v110 = vsub.s32 0, %v109
    %v111 = vsel %vm105, %v110, %v109
    %vm112 = vcmp.ne.s32.totalorder %v111, 0
    %vm113 = vcmp.lt.s32.totalorder %v111, 0
    %vm114 = vmand %vm113, %vm112
    %v115 = vadd.s32 %v111, 2
    %v116 = vsel %vm114, %v115, %v111
    %vm117 = vcmp.eq.s32.totalorder %v101, %v116
    %vm118 = vcmp.eq.s32.totalorder %v102, %v116
    %v119 = vsel %vm117, 0.0, -1e+30
    %v120 = vsel %vm118, 0.0, -1e+30
    %v121 = vld [vmem:[%s0] sm:$0xff]
    %v122 = vld [vmem:[%s0 + $0x8] sm:$0xff]
    %v123 = vpack.c.bf16 %v122, %v121
    %v124 = vperm.slane %v75, 0
    %v129 = vunpack.c.l.b16 %v55
    %v130 = vunpack.c.l.b16 %v56
    %v131 = vunpack.c.l.b16 %v57
    %v132 = vunpack.c.l.b16 %v58
    %v133 = vpack.c.b16 %v130, %v129
    %v134 = vpack.c.b16 %v132, %v131
    %vm137 = vcmask 261120
    %v139 = vsel %vm137, %v123, 0
    %141 = vmatpush.bf16.msra.mxu0 0
    %142 = vmatpush.bf16.msra.mxu0 0
    %143 = vmatpush.bf16.msra.mxu0 0
    %144 = vmatpush.bf16.msra.mxu0 0
    %145 = vmatpush.bf16.msra.mxu0 0
    %146 = vmatpush.bf16.msra.mxu0 0
    %147 = vmatpush.bf16.msra.mxu0 %v134
    %148 = vmatpush.bf16.msra.mxu0 %v133
    %149 = vmatmul.bf16.gmra.mxu0 %v139
    %v150 = vpop.f32.mrf.mxu0
    %v151 = vadd.f32 %v124, %v150
    %v152 = vpop.f32.mrf.mxu0
    %v153 = vadd.f32 %v124, %v152
    %154 = vdwg.mxu0
    %157 = vrot.lane.b32.xlu0 %v151, 120
    %v158 = vpop.permute.xlu0 %157
    %159 = vrot.lane.b32.xlu0 %v153, 120
    %v160 = vpop.permute.xlu0 %159
    %163 = vrot.lane.b32.xlu0 %v151, 112
    %v164 = vpop.permute.xlu0 %163
    %165 = vrot.lane.b32.xlu0 %v153, 112
    %v166 = vpop.permute.xlu0 %165
    %169 = vrot.lane.b32.xlu0 %v151, 104
    %v170 = vpop.permute.xlu0 %169
    %171 = vrot.lane.b32.xlu0 %v153, 104
    %v172 = vpop.permute.xlu0 %171
    %v175 = vrot.slane %v164, 4
    %vm176 = vcmask 1047556
    %v177 = vsel %vm176, %v175, %v151
    %v178 = vrot.slane %v151, 4
    %v179 = vsel %vm176, %v164, %v178
    %v181 = vunpack.c.l.s4 1983009808
    %v182 = vunpack.c.0.s8 %v181
    %v183 = vperm.slane %v177, %v182
    %v185 = vunpack.c.l.s4 1983009808
    %v186 = vunpack.c.0.s8 %v185
    %v187 = vperm.slane %v179, %v186
    %v188 = vrot.slane %v170, 4
    %v189 = vsel %vm176, %v188, %v158
    %v190 = vrot.slane %v158, 4
    %v191 = vsel %vm176, %v170, %v190
    %v193 = vunpack.c.l.s4 1983009808
    %v194 = vunpack.c.0.s8 %v193
    %v195 = vperm.slane %v189, %v194
    %v197 = vunpack.c.l.s4 1983009808
    %v198 = vunpack.c.0.s8 %v197
    %v199 = vperm.slane %v191, %v198
    %v200 = vrot.slane %v195, 4
    %v201 = vsel %vm176, %v200, %v183
    %v202 = vrot.slane %v183, 4
    %v203 = vsel %vm176, %v195, %v202
    %v205 = vunpack.c.l.s4 1934713408
    %v206 = vunpack.c.0.s8 %v205
    %v207 = vperm.slane %v201, %v206
    %v209 = vunpack.c.l.s4 1934713408
    %v210 = vunpack.c.0.s8 %v209
    %v211 = vperm.slane %v203, %v210
    %v212 = vrot.slane %v199, 4
    %v213 = vsel %vm176, %v212, %v187
    %v214 = vrot.slane %v187, 4
    %v215 = vsel %vm176, %v199, %v214
    %v217 = vunpack.c.l.s4 1934713408
    %v218 = vunpack.c.0.s8 %v217
    %v219 = vperm.slane %v213, %v218
    %v221 = vunpack.c.l.s4 1934713408
    %v222 = vunpack.c.0.s8 %v221
    %v223 = vperm.slane %v215, %v222
    %v224 = vrot.slane %v207, 4
    %v225 = vsel %vm176, 0.0, %v224
    %v226 = vrot.slane %v211, 4
    %v227 = vsel %vm176, 0.0, %v226
    %v228 = vrot.slane %v219, 4
    %v229 = vsel %vm176, 0.0, %v228
    %v230 = vrot.slane %v223, 4
    %v231 = vsel %vm176, 0.0, %v230
    %v232 = vrot.slane %v166, 4
    %v233 = vsel %vm176, %v232, %v153
    %v234 = vrot.slane %v153, 4
    %v235 = vsel %vm176, %v166, %v234
    %v237 = vunpack.c.l.s4 1983009808
    %v238 = vunpack.c.0.s8 %v237
    %v239 = vperm.slane %v233, %v238
    %v241 = vunpack.c.l.s4 1983009808
    %v242 = vunpack.c.0.s8 %v241
    %v243 = vperm.slane %v235, %v242
    %v244 = vrot.slane %v172, 4
    %v245 = vsel %vm176, %v244, %v160
    %v246 = vrot.slane %v160, 4
    %v247 = vsel %vm176, %v172, %v246
    %v249 = vunpack.c.l.s4 1983009808
    %v250 = vunpack.c.0.s8 %v249
    %v251 = vperm.slane %v245, %v250
    %v253 = vunpack.c.l.s4 1983009808
    %v254 = vunpack.c.0.s8 %v253
    %v255 = vperm.slane %v247, %v254
    %v256 = vrot.slane %v251, 4
    %v257 = vsel %vm176, %v256, %v239
    %v258 = vrot.slane %v239, 4
    %v259 = vsel %vm176, %v251, %v258
    %v261 = vunpack.c.l.s4 1934713408
    %v262 = vunpack.c.0.s8 %v261
    %v263 = vperm.slane %v257, %v262
    %v265 = vunpack.c.l.s4 1934713408
    %v266 = vunpack.c.0.s8 %v265
    %v267 = vperm.slane %v259, %v266
    %v268 = vrot.slane %v255, 4
    %v269 = vsel %vm176, %v268, %v243
    %v270 = vrot.slane %v243, 4
    %v271 = vsel %vm176, %v255, %v270
    %v273 = vunpack.c.l.s4 1934713408
    %v274 = vunpack.c.0.s8 %v273
    %v275 = vperm.slane %v269, %v274
    %v277 = vunpack.c.l.s4 1934713408
    %v278 = vunpack.c.0.s8 %v277
    %v279 = vperm.slane %v271, %v278
    %v280 = vrot.slane %v263, 4
    %v281 = vsel %vm176, 0.0, %v280
    %v282 = vrot.slane %v267, 4
    %v283 = vsel %vm176, 0.0, %v282
    %v284 = vrot.slane %v275, 4
    %v285 = vsel %vm176, 0.0, %v284
    %v286 = vrot.slane %v279, 4
    %v287 = vsel %vm176, 0.0, %v286
    %v288 = vpack.c.bf16 %v207, %v207
    %v289 = vpack.c.bf16 %v225, %v225
    %v290 = vpack.c.bf16 %v211, %v211
    %v291 = vpack.c.bf16 %v227, %v227
    %v292 = vpack.c.bf16 %v219, %v219
    %v293 = vpack.c.bf16 %v229, %v229
    %v294 = vpack.c.bf16 %v223, %v223
    %v295 = vpack.c.bf16 %v231, %v231
    %v296 = vpack.c.bf16 %v263, %v263
    %v297 = vpack.c.bf16 %v281, %v281
    %v298 = vpack.c.bf16 %v267, %v267
    %v299 = vpack.c.bf16 %v283, %v283
    %v300 = vpack.c.bf16 %v275, %v275
    %v301 = vpack.c.bf16 %v285, %v285
    %v302 = vpack.c.bf16 %v279, %v279
    %v303 = vpack.c.bf16 %v287, %v287
    %304 = vrot.lane.b32.xlu0 %v151, 96
    %v305 = vpop.permute.xlu0 %304
    %306 = vrot.lane.b32.xlu0 %v153, 96
    %v307 = vpop.permute.xlu0 %306
    %308 = vrot.lane.b32.xlu0 %v158, 96
    %v309 = vpop.permute.xlu0 %308
    %310 = vrot.lane.b32.xlu0 %v160, 96
    %v311 = vpop.permute.xlu0 %310
    %312 = vrot.lane.b32.xlu0 %v164, 96
    %v313 = vpop.permute.xlu0 %312
    %314 = vrot.lane.b32.xlu0 %v166, 96
    %v315 = vpop.permute.xlu0 %314
    %316 = vrot.lane.b32.xlu0 %v170, 96
    %v317 = vpop.permute.xlu0 %316
    %318 = vrot.lane.b32.xlu0 %v172, 96
    %v319 = vpop.permute.xlu0 %318
    %v328 = vrot.slane %v313, 4
    %v329 = vsel %vm176, %v328, %v305
    %v330 = vrot.slane %v305, 4
    %v331 = vsel %vm176, %v313, %v330
    %v333 = vunpack.c.l.s4 1983009808
    %v334 = vunpack.c.0.s8 %v333
    %v335 = vperm.slane %v329, %v334
    %v337 = vunpack.c.l.s4 1983009808
    %v338 = vunpack.c.0.s8 %v337
    %v339 = vperm.slane %v331, %v338
    %v340 = vrot.slane %v317, 4
    %v341 = vsel %vm176, %v340, %v309
    %v342 = vrot.slane %v309, 4
    %v343 = vsel %vm176, %v317, %v342
    %v345 = vunpack.c.l.s4 1983009808
    %v346 = vunpack.c.0.s8 %v345
    %v347 = vperm.slane %v341, %v346
    %v349 = vunpack.c.l.s4 1983009808
    %v350 = vunpack.c.0.s8 %v349
    %v351 = vperm.slane %v343, %v350
    %v352 = vrot.slane %v347, 4
    %v353 = vsel %vm176, %v352, %v335
    %v354 = vrot.slane %v335, 4
    %v355 = vsel %vm176, %v347, %v354
    %v357 = vunpack.c.l.s4 1934713408
    %v358 = vunpack.c.0.s8 %v357
    %v359 = vperm.slane %v353, %v358
    %v361 = vunpack.c.l.s4 1934713408
    %v362 = vunpack.c.0.s8 %v361
    %v363 = vperm.slane %v355, %v362
    %v364 = vrot.slane %v351, 4
    %v365 = vsel %vm176, %v364, %v339
    %v366 = vrot.slane %v339, 4
    %v367 = vsel %vm176, %v351, %v366
    %v369 = vunpack.c.l.s4 1934713408
    %v370 = vunpack.c.0.s8 %v369
    %v371 = vperm.slane %v365, %v370
    %v373 = vunpack.c.l.s4 1934713408
    %v374 = vunpack.c.0.s8 %v373
    %v375 = vperm.slane %v367, %v374
    %v376 = vrot.slane %v359, 4
    %v377 = vsel %vm176, 0.0, %v376
    %v378 = vrot.slane %v363, 4
    %v379 = vsel %vm176, 0.0, %v378
    %v380 = vrot.slane %v371, 4
    %v381 = vsel %vm176, 0.0, %v380
    %v382 = vrot.slane %v375, 4
    %v383 = vsel %vm176, 0.0, %v382
    %v384 = vrot.slane %v315, 4
    %v385 = vsel %vm176, %v384, %v307
    %v386 = vrot.slane %v307, 4
    %v387 = vsel %vm176, %v315, %v386
    %v389 = vunpack.c.l.s4 1983009808
    %v390 = vunpack.c.0.s8 %v389
    %v391 = vperm.slane %v385, %v390
    %v393 = vunpack.c.l.s4 1983009808
    %v394 = vunpack.c.0.s8 %v393
    %v395 = vperm.slane %v387, %v394
    %v396 = vrot.slane %v319, 4
    %v397 = vsel %vm176, %v396, %v311
    %v398 = vrot.slane %v311, 4
    %v399 = vsel %vm176, %v319, %v398
    %v401 = vunpack.c.l.s4 1983009808
    %v402 = vunpack.c.0.s8 %v401
    %v403 = vperm.slane %v397, %v402
    %v405 = vunpack.c.l.s4 1983009808
    %v406 = vunpack.c.0.s8 %v405
    %v407 = vperm.slane %v399, %v406
    %v408 = vrot.slane %v403, 4
    %v409 = vsel %vm176, %v408, %v391
    %v410 = vrot.slane %v391, 4
    %v411 = vsel %vm176, %v403, %v410
    %v413 = vunpack.c.l.s4 1934713408
    %v414 = vunpack.c.0.s8 %v413
    %v415 = vperm.slane %v409, %v414
    %v417 = vunpack.c.l.s4 1934713408
    %v418 = vunpack.c.0.s8 %v417
    %v419 = vperm.slane %v411, %v418
    %v420 = vrot.slane %v407, 4
    %v421 = vsel %vm176, %v420, %v395
    %v422 = vrot.slane %v395, 4
    %v423 = vsel %vm176, %v407, %v422
    %v425 = vunpack.c.l.s4 1934713408
    %v426 = vunpack.c.0.s8 %v425
    %v427 = vperm.slane %v421, %v426
    %v429 = vunpack.c.l.s4 1934713408
    %v430 = vunpack.c.0.s8 %v429
    %v431 = vperm.slane %v423, %v430
    %v432 = vrot.slane %v415, 4
    %v433 = vsel %vm176, 0.0, %v432
    %v434 = vrot.slane %v419, 4
    %v435 = vsel %vm176, 0.0, %v434
    %v436 = vrot.slane %v427, 4
    %v437 = vsel %vm176, 0.0, %v436
    %v438 = vrot.slane %v431, 4
    %v439 = vsel %vm176, 0.0, %v438
    %v440 = vpack.c.bf16 %v359, %v359
    %v441 = vpack.c.bf16 %v377, %v377
    %v442 = vpack.c.bf16 %v363, %v363
    %v443 = vpack.c.bf16 %v379, %v379
    %v444 = vpack.c.bf16 %v371, %v371
    %v445 = vpack.c.bf16 %v381, %v381
    %v446 = vpack.c.bf16 %v375, %v375
    %v447 = vpack.c.bf16 %v383, %v383
    %v448 = vpack.c.bf16 %v415, %v415
    %v449 = vpack.c.bf16 %v433, %v433
    %v450 = vpack.c.bf16 %v419, %v419
    %v451 = vpack.c.bf16 %v435, %v435
    %v452 = vpack.c.bf16 %v427, %v427
    %v453 = vpack.c.bf16 %v437, %v437
    %v454 = vpack.c.bf16 %v431, %v431
    %v455 = vpack.c.bf16 %v439, %v439
    %456 = vrot.lane.b32.xlu0 %v151, 64
    %v457 = vpop.permute.xlu0 %456
    %458 = vrot.lane.b32.xlu0 %v153, 64
    %v459 = vpop.permute.xlu0 %458
    %460 = vrot.lane.b32.xlu0 %v158, 64
    %v461 = vpop.permute.xlu0 %460
    %462 = vrot.lane.b32.xlu0 %v160, 64
    %v463 = vpop.permute.xlu0 %462
    %464 = vrot.lane.b32.xlu0 %v164, 64
    %v465 = vpop.permute.xlu0 %464
    %466 = vrot.lane.b32.xlu0 %v166, 64
    %v467 = vpop.permute.xlu0 %466
    %468 = vrot.lane.b32.xlu0 %v170, 64
    %v469 = vpop.permute.xlu0 %468
    %470 = vrot.lane.b32.xlu0 %v172, 64
    %v471 = vpop.permute.xlu0 %470
    %v480 = vrot.slane %v465, 4
    %v481 = vsel %vm176, %v480, %v457
    %v482 = vrot.slane %v457, 4
    %v483 = vsel %vm176, %v465, %v482
    %v485 = vunpack.c.l.s4 1983009808
    %v486 = vunpack.c.0.s8 %v485
    %v487 = vperm.slane %v481, %v486
    %v489 = vunpack.c.l.s4 1983009808
    %v490 = vunpack.c.0.s8 %v489
    %v491 = vperm.slane %v483, %v490
    %v492 = vrot.slane %v469, 4
    %v493 = vsel %vm176, %v492, %v461
    %v494 = vrot.slane %v461, 4
    %v495 = vsel %vm176, %v469, %v494
    %v497 = vunpack.c.l.s4 1983009808
    %v498 = vunpack.c.0.s8 %v497
    %v499 = vperm.slane %v493, %v498
    %v501 = vunpack.c.l.s4 1983009808
    %v502 = vunpack.c.0.s8 %v501
    %v503 = vperm.slane %v495, %v502
    %v504 = vrot.slane %v499, 4
    %v505 = vsel %vm176, %v504, %v487
    %v506 = vrot.slane %v487, 4
    %v507 = vsel %vm176, %v499, %v506
    %v509 = vunpack.c.l.s4 1934713408
    %v510 = vunpack.c.0.s8 %v509
    %v511 = vperm.slane %v505, %v510
    %v513 = vunpack.c.l.s4 1934713408
    %v514 = vunpack.c.0.s8 %v513
    %v515 = vperm.slane %v507, %v514
    %v516 = vrot.slane %v503, 4
    %v517 = vsel %vm176, %v516, %v491
    %v518 = vrot.slane %v491, 4
    %v519 = vsel %vm176, %v503, %v518
    %v521 = vunpack.c.l.s4 1934713408
    %v522 = vunpack.c.0.s8 %v521
    %v523 = vperm.slane %v517, %v522
    %v525 = vunpack.c.l.s4 1934713408
    %v526 = vunpack.c.0.s8 %v525
    %v527 = vperm.slane %v519, %v526
    %v528 = vrot.slane %v511, 4
    %v529 = vsel %vm176, 0.0, %v528
    %v530 = vrot.slane %v515, 4
    %v531 = vsel %vm176, 0.0, %v530
    %v532 = vrot.slane %v523, 4
    %v533 = vsel %vm176, 0.0, %v532
    %v534 = vrot.slane %v527, 4
    %v535 = vsel %vm176, 0.0, %v534
    %v536 = vrot.slane %v467, 4
    %v537 = vsel %vm176, %v536, %v459
    %v538 = vrot.slane %v459, 4
    %v539 = vsel %vm176, %v467, %v538
    %v541 = vunpack.c.l.s4 1983009808
    %v542 = vunpack.c.0.s8 %v541
    %v543 = vperm.slane %v537, %v542
    %v545 = vunpack.c.l.s4 1983009808
    %v546 = vunpack.c.0.s8 %v545
    %v547 = vperm.slane %v539, %v546
    %v548 = vrot.slane %v471, 4
    %v549 = vsel %vm176, %v548, %v463
    %v550 = vrot.slane %v463, 4
    %v551 = vsel %vm176, %v471, %v550
    %v553 = vunpack.c.l.s4 1983009808
    %v554 = vunpack.c.0.s8 %v553
    %v555 = vperm.slane %v549, %v554
    %v557 = vunpack.c.l.s4 1983009808
    %v558 = vunpack.c.0.s8 %v557
    %v559 = vperm.slane %v551, %v558
    %v560 = vrot.slane %v555, 4
    %v561 = vsel %vm176, %v560, %v543
    %v562 = vrot.slane %v543, 4
    %v563 = vsel %vm176, %v555, %v562
    %v565 = vunpack.c.l.s4 1934713408
    %v566 = vunpack.c.0.s8 %v565
    %v567 = vperm.slane %v561, %v566
    %v569 = vunpack.c.l.s4 1934713408
    %v570 = vunpack.c.0.s8 %v569
    %v571 = vperm.slane %v563, %v570
    %v572 = vrot.slane %v559, 4
    %v573 = vsel %vm176, %v572, %v547
    %v574 = vrot.slane %v547, 4
    %v575 = vsel %vm176, %v559, %v574
    %v577 = vunpack.c.l.s4 1934713408
    %v578 = vunpack.c.0.s8 %v577
    %v579 = vperm.slane %v573, %v578
    %v581 = vunpack.c.l.s4 1934713408
    %v582 = vunpack.c.0.s8 %v581
    %v583 = vperm.slane %v575, %v582
    %v584 = vrot.slane %v567, 4
    %v585 = vsel %vm176, 0.0, %v584
    %v586 = vrot.slane %v571, 4
    %v587 = vsel %vm176, 0.0, %v586
    %v588 = vrot.slane %v579, 4
    %v589 = vsel %vm176, 0.0, %v588
    %v590 = vrot.slane %v583, 4
    %v591 = vsel %vm176, 0.0, %v590
    %v592 = vpack.c.bf16 %v511, %v511
    %v593 = vpack.c.bf16 %v529, %v529
    %v594 = vpack.c.bf16 %v515, %v515
    %v595 = vpack.c.bf16 %v531, %v531
    %v596 = vpack.c.bf16 %v523, %v523
    %v597 = vpack.c.bf16 %v533, %v533
    %v598 = vpack.c.bf16 %v527, %v527
    %v599 = vpack.c.bf16 %v535, %v535
    %v600 = vpack.c.bf16 %v567, %v567
    %v601 = vpack.c.bf16 %v585, %v585
    %v602 = vpack.c.bf16 %v571, %v571
    %v603 = vpack.c.bf16 %v587, %v587
    %v604 = vpack.c.bf16 %v579, %v579
    %v605 = vpack.c.bf16 %v589, %v589
    %v606 = vpack.c.bf16 %v583, %v583
    %v607 = vpack.c.bf16 %v591, %v591
    %v608 = vrot.slane %v292, 4
    %vm609 = vcmask 1047556
    %v610 = vsel %vm609, %v608, %v288
    %v612 = vunpack.c.l.s4 1983009808
    %v613 = vunpack.c.0.s8 %v612
    %v614 = vperm.slane %v610, %v613
    %v615 = vrot.slane %v294, 4
    %v616 = vsel %vm609, %v615, %v290
    %v618 = vunpack.c.l.s4 1983009808
    %v619 = vunpack.c.0.s8 %v618
    %v620 = vperm.slane %v616, %v619
    %v621 = vrot.slane %v620, 4
    %v622 = vsel %vm609, %v621, %v614
    %v624 = vunpack.c.l.s4 1934713408
    %v625 = vunpack.c.0.s8 %v624
    %v626 = vperm.slane %v622, %v625
    %v627 = vrot.slane %v626, 4
    %v628 = vsel %vm609, 0, %v627
    %v629 = vrot.slane %v293, 4
    %v630 = vsel %vm609, %v629, %v289
    %v632 = vunpack.c.l.s4 1983009808
    %v633 = vunpack.c.0.s8 %v632
    %v634 = vperm.slane %v630, %v633
    %v635 = vrot.slane %v295, 4
    %v636 = vsel %vm609, %v635, %v291
    %v638 = vunpack.c.l.s4 1983009808
    %v639 = vunpack.c.0.s8 %v638
    %v640 = vperm.slane %v636, %v639
    %v641 = vrot.slane %v640, 4
    %v642 = vsel %vm609, %v641, %v634
    %v644 = vunpack.c.l.s4 1934713408
    %v645 = vunpack.c.0.s8 %v644
    %v646 = vperm.slane %v642, %v645
    %v647 = vrot.slane %v646, 4
    %v648 = vsel %vm609, 0, %v647
    %v649 = vrot.slane %v300, 4
    %v650 = vsel %vm609, %v649, %v296
    %v652 = vunpack.c.l.s4 1983009808
    %v653 = vunpack.c.0.s8 %v652
    %v654 = vperm.slane %v650, %v653
    %v655 = vrot.slane %v302, 4
    %v656 = vsel %vm609, %v655, %v298
    %v658 = vunpack.c.l.s4 1983009808
    %v659 = vunpack.c.0.s8 %v658
    %v660 = vperm.slane %v656, %v659
    %v661 = vrot.slane %v660, 4
    %v662 = vsel %vm609, %v661, %v654
    %v664 = vunpack.c.l.s4 1934713408
    %v665 = vunpack.c.0.s8 %v664
    %v666 = vperm.slane %v662, %v665
    %v667 = vrot.slane %v666, 4
    %v668 = vsel %vm609, 0, %v667
    %v669 = vrot.slane %v301, 4
    %v670 = vsel %vm609, %v669, %v297
    %v672 = vunpack.c.l.s4 1983009808
    %v673 = vunpack.c.0.s8 %v672
    %v674 = vperm.slane %v670, %v673
    %v675 = vrot.slane %v303, 4
    %v676 = vsel %vm609, %v675, %v299
    %v678 = vunpack.c.l.s4 1983009808
    %v679 = vunpack.c.0.s8 %v678
    %v680 = vperm.slane %v676, %v679
    %v681 = vrot.slane %v680, 4
    %v682 = vsel %vm609, %v681, %v674
    %v684 = vunpack.c.l.s4 1934713408
    %v685 = vunpack.c.0.s8 %v684
    %v686 = vperm.slane %v682, %v685
    %v687 = vrot.slane %v686, 4
    %v688 = vsel %vm609, 0, %v687
    %v691 = vpack.i.b16 %v646, %v626
    %v692 = vshrl.u32 %v626, 16
    %v693 = vshrl.u32 %v646, 16
    %v694 = vpack.i.b16 %v693, %v692
    %v697 = vpack.i.b16 %v648, %v628
    %v698 = vshrl.u32 %v628, 16
    %v699 = vshrl.u32 %v648, 16
    %v700 = vpack.i.b16 %v699, %v698
    %v703 = vpack.i.b16 %v686, %v666
    %v704 = vshrl.u32 %v666, 16
    %v705 = vshrl.u32 %v686, 16
    %v706 = vpack.i.b16 %v705, %v704
    %v709 = vpack.i.b16 %v688, %v668
    %v710 = vshrl.u32 %v668, 16
    %v711 = vshrl.u32 %v688, 16
    %v712 = vpack.i.b16 %v711, %v710
    %713 = vxpose.xlu0.c.b16.start [1/8] %v440, 128
    %714 = vxpose.xlu0.c.b16.cont [2/8] 0, 128
    %715 = vxpose.xlu0.c.b16.cont [3/8] 0, 128
    %716 = vxpose.xlu0.c.b16.cont [4/8] 0, 128
    %717 = vxpose.xlu0.c.b16.cont [5/8] 0, 128
    %718 = vxpose.xlu0.c.b16.cont [6/8] 0, 128
    %719 = vxpose.xlu0.c.b16.cont [7/8] 0, 128
    %720 = vxpose.xlu0.c.b16.end [8/8] 0, 128
    %v721 = vpop.trf.xlu0
    %v722 = vpop.trf.xlu0
    %v723 = vpop.trf.xlu0
    %v724 = vpop.trf.xlu0
    %v725 = vpop.trf.xlu0
    %v726 = vpop.trf.xlu0
    %v727 = vpop.trf.xlu0
    %v728 = vpop.trf.xlu0
    %729 = vxpose.xlu0.c.b16.start [1/8] %v441, 128
    %730 = vxpose.xlu0.c.b16.cont [2/8] 0, 128
    %731 = vxpose.xlu0.c.b16.cont [3/8] 0, 128
    %732 = vxpose.xlu0.c.b16.cont [4/8] 0, 128
    %733 = vxpose.xlu0.c.b16.cont [5/8] 0, 128
    %734 = vxpose.xlu0.c.b16.cont [6/8] 0, 128
    %735 = vxpose.xlu0.c.b16.cont [7/8] 0, 128
    %736 = vxpose.xlu0.c.b16.end [8/8] 0, 128
    %v737 = vpop.trf.xlu0
    %v738 = vpop.trf.xlu0
    %v739 = vpop.trf.xlu0
    %v740 = vpop.trf.xlu0
    %v741 = vpop.trf.xlu0
    %v742 = vpop.trf.xlu0
    %v743 = vpop.trf.xlu0
    %v744 = vpop.trf.xlu0
    %745 = vxpose.xlu0.c.b16.start [1/8] %v442, 128
    %746 = vxpose.xlu0.c.b16.cont [2/8] 0, 128
    %747 = vxpose.xlu0.c.b16.cont [3/8] 0, 128
    %748 = vxpose.xlu0.c.b16.cont [4/8] 0, 128
    %749 = vxpose.xlu0.c.b16.cont [5/8] 0, 128
    %750 = vxpose.xlu0.c.b16.cont [6/8] 0, 128
    %751 = vxpose.xlu0.c.b16.cont [7/8] 0, 128
    %752 = vxpose.xlu0.c.b16.end [8/8] 0, 128
    %v753 = vpop.trf.xlu0
    %v754 = vpop.trf.xlu0
    %v755 = vpop.trf.xlu0
    %v756 = vpop.trf.xlu0
    %v757 = vpop.trf.xlu0
    %v758 = vpop.trf.xlu0
    %v759 = vpop.trf.xlu0
    %v760 = vpop.trf.xlu0
    %761 = vxpose.xlu0.c.b16.start [1/8] %v443, 128
    %762 = vxpose.xlu0.c.b16.cont [2/8] 0, 128
    %763 = vxpose.xlu0.c.b16.cont [3/8] 0, 128
    %764 = vxpose.xlu0.c.b16.cont [4/8] 0, 128
    %765 = vxpose.xlu0.c.b16.cont [5/8] 0, 128
    %766 = vxpose.xlu0.c.b16.cont [6/8] 0, 128
    %767 = vxpose.xlu0.c.b16.cont [7/8] 0, 128
    %768 = vxpose.xlu0.c.b16.end [8/8] 0, 128
    %v769 = vpop.trf.xlu0
    %v770 = vpop.trf.xlu0
    %v771 = vpop.trf.xlu0
    %v772 = vpop.trf.xlu0
    %v773 = vpop.trf.xlu0
    %v774 = vpop.trf.xlu0
    %v775 = vpop.trf.xlu0
    %v776 = vpop.trf.xlu0
    %777 = vxpose.xlu0.c.b16.start [1/8] %v444, 128
    %778 = vxpose.xlu0.c.b16.cont [2/8] 0, 128
    %779 = vxpose.xlu0.c.b16.cont [3/8] 0, 128
    %780 = vxpose.xlu0.c.b16.cont [4/8] 0, 128
    %781 = vxpose.xlu0.c.b16.cont [5/8] 0, 128
    %782 = vxpose.xlu0.c.b16.cont [6/8] 0, 128
    %783 = vxpose.xlu0.c.b16.cont [7/8] 0, 128
    %784 = vxpose.xlu0.c.b16.end [8/8] 0, 128
    %v785 = vpop.trf.xlu0
    %v786 = vpop.trf.xlu0
    %v787 = vpop.trf.xlu0
    %v788 = vpop.trf.xlu0
    %v789 = vpop.trf.xlu0
    %v790 = vpop.trf.xlu0
    %v791 = vpop.trf.xlu0
    %v792 = vpop.trf.xlu0
    %793 = vxpose.xlu0.c.b16.start [1/8] %v445, 128
    %794 = vxpose.xlu0.c.b16.cont [2/8] 0, 128
    %795 = vxpose.xlu0.c.b16.cont [3/8] 0, 128
    %796 = vxpose.xlu0.c.b16.cont [4/8] 0, 128
    %797 = vxpose.xlu0.c.b16.cont [5/8] 0, 128
    %798 = vxpose.xlu0.c.b16.cont [6/8] 0, 128
    %799 = vxpose.xlu0.c.b16.cont [7/8] 0, 128
    %800 = vxpose.xlu0.c.b16.end [8/8] 0, 128
    %v801 = vpop.trf.xlu0
    %v802 = vpop.trf.xlu0
    %v803 = vpop.trf.xlu0
    %v804 = vpop.trf.xlu0
    %v805 = vpop.trf.xlu0
    %v806 = vpop.trf.xlu0
    %v807 = vpop.trf.xlu0
    %v808 = vpop.trf.xlu0
    %809 = vxpose.xlu0.c.b16.start [1/8] %v446, 128
    %810 = vxpose.xlu0.c.b16.cont [2/8] 0, 128
    %811 = vxpose.xlu0.c.b16.cont [3/8] 0, 128
    %812 = vxpose.xlu0.c.b16.cont [4/8] 0, 128
    %813 = vxpose.xlu0.c.b16.cont [5/8] 0, 128
    %814 = vxpose.xlu0.c.b16.cont [6/8] 0, 128
    %815 = vxpose.xlu0.c.b16.cont [7/8] 0, 128
    %816 = vxpose.xlu0.c.b16.end [8/8] 0, 128
    %v817 = vpop.trf.xlu0
    %v818 = vpop.trf.xlu0
    %v819 = vpop.trf.xlu0
    %v820 = vpop.trf.xlu0
    %v821 = vpop.trf.xlu0
    %v822 = vpop.trf.xlu0
    %v823 = vpop.trf.xlu0
    %v824 = vpop.trf.xlu0
    %825 = vxpose.xlu0.c.b16.start [1/8] %v447, 128
    %826 = vxpose.xlu0.c.b16.cont [2/8] 0, 128
    %827 = vxpose.xlu0.c.b16.cont [3/8] 0, 128
    %828 = vxpose.xlu0.c.b16.cont [4/8] 0, 128
    %829 = vxpose.xlu0.c.b16.cont [5/8] 0, 128
    %830 = vxpose.xlu0.c.b16.cont [6/8] 0, 128
    %831 = vxpose.xlu0.c.b16.cont [7/8] 0, 128
    %832 = vxpose.xlu0.c.b16.end [8/8] 0, 128
    %v833 = vpop.trf.xlu0
    %v834 = vpop.trf.xlu0
    %v835 = vpop.trf.xlu0
    %v836 = vpop.trf.xlu0
    %v837 = vpop.trf.xlu0
    %v838 = vpop.trf.xlu0
    %v839 = vpop.trf.xlu0
    %v840 = vpop.trf.xlu0
    %841 = vxpose.xlu0.c.b16.start [1/8] %v448, 128
    %842 = vxpose.xlu0.c.b16.cont [2/8] 0, 128
    %843 = vxpose.xlu0.c.b16.cont [3/8] 0, 128
    %844 = vxpose.xlu0.c.b16.cont [4/8] 0, 128
    %845 = vxpose.xlu0.c.b16.cont [5/8] 0, 128
    %846 = vxpose.xlu0.c.b16.cont [6/8] 0, 128
    %847 = vxpose.xlu0.c.b16.cont [7/8] 0, 128
    %848 = vxpose.xlu0.c.b16.end [8/8] 0, 128
    %v849 = vpop.trf.xlu0
    %v850 = vpop.trf.xlu0
    %v851 = vpop.trf.xlu0
    %v852 = vpop.trf.xlu0
    %v853 = vpop.trf.xlu0
    %v854 = vpop.trf.xlu0
    %v855 = vpop.trf.xlu0
    %v856 = vpop.trf.xlu0
    %857 = vxpose.xlu0.c.b16.start [1/8] %v449, 128
    %858 = vxpose.xlu0.c.b16.cont [2/8] 0, 128
    %859 = vxpose.xlu0.c.b16.cont [3/8] 0, 128
    %860 = vxpose.xlu0.c.b16.cont [4/8] 0, 128
    %861 = vxpose.xlu0.c.b16.cont [5/8] 0, 128
    %862 = vxpose.xlu0.c.b16.cont [6/8] 0, 128
    %863 = vxpose.xlu0.c.b16.cont [7/8] 0, 128
    %864 = vxpose.xlu0.c.b16.end [8/8] 0, 128
    %v865 = vpop.trf.xlu0
    %v866 = vpop.trf.xlu0
    %v867 = vpop.trf.xlu0
    %v868 = vpop.trf.xlu0
    %v869 = vpop.trf.xlu0
    %v870 = vpop.trf.xlu0
    %v871 = vpop.trf.xlu0
    %v872 = vpop.trf.xlu0
    %873 = vxpose.xlu0.c.b16.start [1/8] %v450, 128
    %874 = vxpose.xlu0.c.b16.cont [2/8] 0, 128
    %875 = vxpose.xlu0.c.b16.cont [3/8] 0, 128
    %876 = vxpose.xlu0.c.b16.cont [4/8] 0, 128
    %877 = vxpose.xlu0.c.b16.cont [5/8] 0, 128
    %878 = vxpose.xlu0.c.b16.cont [6/8] 0, 128
    %879 = vxpose.xlu0.c.b16.cont [7/8] 0, 128
    %880 = vxpose.xlu0.c.b16.end [8/8] 0, 128
    %v881 = vpop.trf.xlu0
    %v882 = vpop.trf.xlu0
    %v883 = vpop.trf.xlu0
    %v884 = vpop.trf.xlu0
    %v885 = vpop.trf.xlu0
    %v886 = vpop.trf.xlu0
    %v887 = vpop.trf.xlu0
    %v888 = vpop.trf.xlu0
    %889 = vxpose.xlu0.c.b16.start [1/8] %v451, 128
    %890 = vxpose.xlu0.c.b16.cont [2/8] 0, 128
    %891 = vxpose.xlu0.c.b16.cont [3/8] 0, 128
    %892 = vxpose.xlu0.c.b16.cont [4/8] 0, 128
    %893 = vxpose.xlu0.c.b16.cont [5/8] 0, 128
    %894 = vxpose.xlu0.c.b16.cont [6/8] 0, 128
    %895 = vxpose.xlu0.c.b16.cont [7/8] 0, 128
    %896 = vxpose.xlu0.c.b16.end [8/8] 0, 128
    %v897 = vpop.trf.xlu0
    %v898 = vpop.trf.xlu0
    %v899 = vpop.trf.xlu0
    %v900 = vpop.trf.xlu0
    %v901 = vpop.trf.xlu0
    %v902 = vpop.trf.xlu0
    %v903 = vpop.trf.xlu0
    %v904 = vpop.trf.xlu0
    %905 = vxpose.xlu0.c.b16.start [1/8] %v452, 128
    %906 = vxpose.xlu0.c.b16.cont [2/8] 0, 128
    %907 = vxpose.xlu0.c.b16.cont [3/8] 0, 128
    %908 = vxpose.xlu0.c.b16.cont [4/8] 0, 128
    %909 = vxpose.xlu0.c.b16.cont [5/8] 0, 128
    %910 = vxpose.xlu0.c.b16.cont [6/8] 0, 128
    %911 = vxpose.xlu0.c.b16.cont [7/8] 0, 128
    %912 = vxpose.xlu0.c.b16.end [8/8] 0, 128
    %v913 = vpop.trf.xlu0
    %v914 = vpop.trf.xlu0
    %v915 = vpop.trf.xlu0
    %v916 = vpop.trf.xlu0
    %v917 = vpop.trf.xlu0
    %v918 = vpop.trf.xlu0
    %v919 = vpop.trf.xlu0
    %v920 = vpop.trf.xlu0
    %921 = vxpose.xlu0.c.b16.start [1/8] %v453, 128
    %922 = vxpose.xlu0.c.b16.cont [2/8] 0, 128
    %923 = vxpose.xlu0.c.b16.cont [3/8] 0, 128
    %924 = vxpose.xlu0.c.b16.cont [4/8] 0, 128
    %925 = vxpose.xlu0.c.b16.cont [5/8] 0, 128
    %926 = vxpose.xlu0.c.b16.cont [6/8] 0, 128
    %927 = vxpose.xlu0.c.b16.cont [7/8] 0, 128
    %928 = vxpose.xlu0.c.b16.end [8/8] 0, 128
    %v929 = vpop.trf.xlu0
    %v930 = vpop.trf.xlu0
    %v931 = vpop.trf.xlu0
    %v932 = vpop.trf.xlu0
    %v933 = vpop.trf.xlu0
    %v934 = vpop.trf.xlu0
    %v935 = vpop.trf.xlu0
    %v936 = vpop.trf.xlu0
    %937 = vxpose.xlu0.c.b16.start [1/8] %v454, 128
    %938 = vxpose.xlu0.c.b16.cont [2/8] 0, 128
    %939 = vxpose.xlu0.c.b16.cont [3/8] 0, 128
    %940 = vxpose.xlu0.c.b16.cont [4/8] 0, 128
    %941 = vxpose.xlu0.c.b16.cont [5/8] 0, 128
    %942 = vxpose.xlu0.c.b16.cont [6/8] 0, 128
    %943 = vxpose.xlu0.c.b16.cont [7/8] 0, 128
    %944 = vxpose.xlu0.c.b16.end [8/8] 0, 128
    %v945 = vpop.trf.xlu0
    %v946 = vpop.trf.xlu0
    %v947 = vpop.trf.xlu0
    %v948 = vpop.trf.xlu0
    %v949 = vpop.trf.xlu0
    %v950 = vpop.trf.xlu0
    %v951 = vpop.trf.xlu0
    %v952 = vpop.trf.xlu0
    %953 = vxpose.xlu0.c.b16.start [1/8] %v455, 128
    %954 = vxpose.xlu0.c.b16.cont [2/8] 0, 128
    %955 = vxpose.xlu0.c.b16.cont [3/8] 0, 128
    %956 = vxpose.xlu0.c.b16.cont [4/8] 0, 128
    %957 = vxpose.xlu0.c.b16.cont [5/8] 0, 128
    %958 = vxpose.xlu0.c.b16.cont [6/8] 0, 128
    %959 = vxpose.xlu0.c.b16.cont [7/8] 0, 128
    %960 = vxpose.xlu0.c.b16.end [8/8] 0, 128
    %v961 = vpop.trf.xlu0
    %v962 = vpop.trf.xlu0
    %v963 = vpop.trf.xlu0
    %v964 = vpop.trf.xlu0
    %v965 = vpop.trf.xlu0
    %v966 = vpop.trf.xlu0
    %v967 = vpop.trf.xlu0
    %v968 = vpop.trf.xlu0
    %v969 = vrot.slane %v785, 4
    %v970 = vsel %vm609, %v969, %v721
    %v972 = vunpack.c.l.s4 1983009808
    %v973 = vunpack.c.0.s8 %v972
    %v974 = vperm.slane %v970, %v973
    %v975 = vrot.slane %v817, 4
    %v976 = vsel %vm609, %v975, %v753
    %v978 = vunpack.c.l.s4 1983009808
    %v979 = vunpack.c.0.s8 %v978
    %v980 = vperm.slane %v976, %v979
    %v981 = vrot.slane %v913, 4
    %v982 = vsel %vm609, %v981, %v849
    %v984 = vunpack.c.l.s4 1983009808
    %v985 = vunpack.c.0.s8 %v984
    %v986 = vperm.slane %v982, %v985
    %v987 = vrot.slane %v945, 4
    %v988 = vsel %vm609, %v987, %v881
    %v990 = vunpack.c.l.s4 1983009808
    %v991 = vunpack.c.0.s8 %v990
    %v992 = vperm.slane %v988, %v991
    %v993 = vrot.slane %v980, 4
    %v994 = vsel %vm609, %v993, %v974
    %v995 = vrot.slane %v974, 4
    %v996 = vsel %vm609, %v980, %v995
    %v998 = vunpack.c.l.s4 1934713408
    %v999 = vunpack.c.0.s8 %v998
    %v1000 = vperm.slane %v994, %v999
    %v1002 = vunpack.c.l.s4 1934713408
    %v1003 = vunpack.c.0.s8 %v1002
    %v1004 = vperm.slane %v996, %v1003
    %v1005 = vrot.slane %v992, 4
    %v1006 = vsel %vm609, %v1005, %v986
    %v1007 = vrot.slane %v986, 4
    %v1008 = vsel %vm609, %v992, %v1007
    %v1010 = vunpack.c.l.s4 1934713408
    %v1011 = vunpack.c.0.s8 %v1010
    %v1012 = vperm.slane %v1006, %v1011
    %v1014 = vunpack.c.l.s4 1934713408
    %v1015 = vunpack.c.0.s8 %v1014
    %v1016 = vperm.slane %v1008, %v1015
    %v1017 = vrot.slane %v1012, 4
    %v1018 = vsel %vm609, %v1017, %v1000
    %v1019 = vrot.slane %v1000, 4
    %v1020 = vsel %vm609, %v1012, %v1019
    %v1021 = vrot.slane %v1016, 4
    %v1022 = vsel %vm609, %v1021, %v1004
    %v1023 = vrot.slane %v1004, 4
    %v1024 = vsel %vm609, %v1016, %v1023
    %v1025 = vrot.slane %v801, 4
    %v1026 = vsel %vm609, %v1025, %v737
    %v1028 = vunpack.c.l.s4 1983009808
    %v1029 = vunpack.c.0.s8 %v1028
    %v1030 = vperm.slane %v1026, %v1029
    %v1031 = vrot.slane %v833, 4
    %v1032 = vsel %vm609, %v1031, %v769
    %v1034 = vunpack.c.l.s4 1983009808
    %v1035 = vunpack.c.0.s8 %v1034
    %v1036 = vperm.slane %v1032, %v1035
    %v1037 = vrot.slane %v929, 4
    %v1038 = vsel %vm609, %v1037, %v865
    %v1040 = vunpack.c.l.s4 1983009808
    %v1041 = vunpack.c.0.s8 %v1040
    %v1042 = vperm.slane %v1038, %v1041
    %v1043 = vrot.slane %v961, 4
    %v1044 = vsel %vm609, %v1043, %v897
    %v1046 = vunpack.c.l.s4 1983009808
    %v1047 = vunpack.c.0.s8 %v1046
    %v1048 = vperm.slane %v1044, %v1047
    %v1049 = vrot.slane %v1036, 4
    %v1050 = vsel %vm609, %v1049, %v1030
    %v1051 = vrot.slane %v1030, 4
    %v1052 = vsel %vm609, %v1036, %v1051
    %v1054 = vunpack.c.l.s4 1934713408
    %v1055 = vunpack.c.0.s8 %v1054
    %v1056 = vperm.slane %v1050, %v1055
    %v1058 = vunpack.c.l.s4 1934713408
    %v1059 = vunpack.c.0.s8 %v1058
    %v1060 = vperm.slane %v1052, %v1059
    %v1061 = vrot.slane %v1048, 4
    %v1062 = vsel %vm609, %v1061, %v1042
    %v1063 = vrot.slane %v1042, 4
    %v1064 = vsel %vm609, %v1048, %v1063
    %v1066 = vunpack.c.l.s4 1934713408
    %v1067 = vunpack.c.0.s8 %v1066
    %v1068 = vperm.slane %v1062, %v1067
    %v1070 = vunpack.c.l.s4 1934713408
    %v1071 = vunpack.c.0.s8 %v1070
    %v1072 = vperm.slane %v1064, %v1071
    %v1073 = vrot.slane %v1068, 4
    %v1074 = vsel %vm609, %v1073, %v1056
    %v1075 = vrot.slane %v1056, 4
    %v1076 = vsel %vm609, %v1068, %v1075
    %v1077 = vrot.slane %v1072, 4
    %v1078 = vsel %vm609, %v1077, %v1060
    %v1079 = vrot.slane %v1060, 4
    %v1080 = vsel %vm609, %v1072, %v1079
    %v1083 = vpack.i.b16 %v1074, %v1018
    %v1085 = vshrl.u32 %v1018, 16
    %v1086 = vshrl.u32 %v1074, 16
    %v1087 = vpack.i.b16 %v1086, %v1085
    %v1091 = vpack.i.b16 %v1076, %v1020
    %v1093 = vshrl.u32 %v1020, 16
    %v1094 = vshrl.u32 %v1076, 16
    %v1095 = vpack.i.b16 %v1094, %v1093
    %v1099 = vpack.i.b16 %v1078, %v1022
    %v1101 = vshrl.u32 %v1022, 16
    %v1102 = vshrl.u32 %v1078, 16
    %v1103 = vpack.i.b16 %v1102, %v1101
    %v1107 = vpack.i.b16 %v1080, %v1024
    %v1109 = vshrl.u32 %v1024, 16
    %v1110 = vshrl.u32 %v1080, 16
    %v1111 = vpack.i.b16 %v1110, %v1109
    %1113 = vxpose.xlu0.c.b16.start [1/8] %v1083, 128
    %1114 = vxpose.xlu0.c.b16.cont [2/8] 0, 128
    %1115 = vxpose.xlu0.c.b16.cont [3/8] 0, 128
    %1116 = vxpose.xlu0.c.b16.cont [4/8] 0, 128
    %1117 = vxpose.xlu0.c.b16.cont [5/8] 0, 128
    %1118 = vxpose.xlu0.c.b16.cont [6/8] 0, 128
    %1119 = vxpose.xlu0.c.b16.cont [7/8] 0, 128
    %1120 = vxpose.xlu0.c.b16.end [8/8] 0, 128
    %v1121 = vpop.trf.xlu0
    %v1122 = vpop.trf.xlu0
    %v1123 = vpop.trf.xlu0
    %v1124 = vpop.trf.xlu0
    %v1125 = vpop.trf.xlu0
    %v1126 = vpop.trf.xlu0
    %v1127 = vpop.trf.xlu0
    %v1128 = vpop.trf.xlu0
    %1129 = vxpose.xlu0.c.b16.start [1/8] %v1087, 128
    %1130 = vxpose.xlu0.c.b16.cont [2/8] 0, 128
    %1131 = vxpose.xlu0.c.b16.cont [3/8] 0, 128
    %1132 = vxpose.xlu0.c.b16.cont [4/8] 0, 128
    %1133 = vxpose.xlu0.c.b16.cont [5/8] 0, 128
    %1134 = vxpose.xlu0.c.b16.cont [6/8] 0, 128
    %1135 = vxpose.xlu0.c.b16.cont [7/8] 0, 128
    %1136 = vxpose.xlu0.c.b16.end [8/8] 0, 128
    %v1137 = vpop.trf.xlu0
    %v1138 = vpop.trf.xlu0
    %v1139 = vpop.trf.xlu0
    %v1140 = vpop.trf.xlu0
    %v1141 = vpop.trf.xlu0
    %v1142 = vpop.trf.xlu0
    %v1143 = vpop.trf.xlu0
    %v1144 = vpop.trf.xlu0
    %1145 = vxpose.xlu0.c.b16.start [1/8] %v1091, 128
    %1146 = vxpose.xlu0.c.b16.cont [2/8] 0, 128
    %1147 = vxpose.xlu0.c.b16.cont [3/8] 0, 128
    %1148 = vxpose.xlu0.c.b16.cont [4/8] 0, 128
    %1149 = vxpose.xlu0.c.b16.cont [5/8] 0, 128
    %1150 = vxpose.xlu0.c.b16.cont [6/8] 0, 128
    %1151 = vxpose.xlu0.c.b16.cont [7/8] 0, 128
    %1152 = vxpose.xlu0.c.b16.end [8/8] 0, 128
    %v1153 = vpop.trf.xlu0
    %v1154 = vpop.trf.xlu0
    %v1155 = vpop.trf.xlu0
    %v1156 = vpop.trf.xlu0
    %v1157 = vpop.trf.xlu0
    %v1158 = vpop.trf.xlu0
    %v1159 = vpop.trf.xlu0
    %v1160 = vpop.trf.xlu0
    %1161 = vxpose.xlu0.c.b16.start [1/8] %v1095, 128
    %1162 = vxpose.xlu0.c.b16.cont [2/8] 0, 128
    %1163 = vxpose.xlu0.c.b16.cont [3/8] 0, 128
    %1164 = vxpose.xlu0.c.b16.cont [4/8] 0, 128
    %1165 = vxpose.xlu0.c.b16.cont [5/8] 0, 128
    %1166 = vxpose.xlu0.c.b16.cont [6/8] 0, 128
    %1167 = vxpose.xlu0.c.b16.cont [7/8] 0, 128
    %1168 = vxpose.xlu0.c.b16.end [8/8] 0, 128
    %v1169 = vpop.trf.xlu0
    %v1170 = vpop.trf.xlu0
    %v1171 = vpop.trf.xlu0
    %v1172 = vpop.trf.xlu0
    %v1173 = vpop.trf.xlu0
    %v1174 = vpop.trf.xlu0
    %v1175 = vpop.trf.xlu0
    %v1176 = vpop.trf.xlu0
    %1177 = vxpose.xlu0.c.b16.start [1/8] %v1099, 128
    %1178 = vxpose.xlu0.c.b16.cont [2/8] 0, 128
    %1179 = vxpose.xlu0.c.b16.cont [3/8] 0, 128
    %1180 = vxpose.xlu0.c.b16.cont [4/8] 0, 128
    %1181 = vxpose.xlu0.c.b16.cont [5/8] 0, 128
    %1182 = vxpose.xlu0.c.b16.cont [6/8] 0, 128
    %1183 = vxpose.xlu0.c.b16.cont [7/8] 0, 128
    %1184 = vxpose.xlu0.c.b16.end [8/8] 0, 128
    %v1185 = vpop.trf.xlu0
    %v1186 = vpop.trf.xlu0
    %v1187 = vpop.trf.xlu0
    %v1188 = vpop.trf.xlu0
    %v1189 = vpop.trf.xlu0
    %v1190 = vpop.trf.xlu0
    %v1191 = vpop.trf.xlu0
    %v1192 = vpop.trf.xlu0
    %1193 = vxpose.xlu0.c.b16.start [1/8] %v1103, 128
    %1194 = vxpose.xlu0.c.b16.cont [2/8] 0, 128
    %1195 = vxpose.xlu0.c.b16.cont [3/8] 0, 128
    %1196 = vxpose.xlu0.c.b16.cont [4/8] 0, 128
    %1197 = vxpose.xlu0.c.b16.cont [5/8] 0, 128
    %1198 = vxpose.xlu0.c.b16.cont [6/8] 0, 128
    %1199 = vxpose.xlu0.c.b16.cont [7/8] 0, 128
    %1200 = vxpose.xlu0.c.b16.end [8/8] 0, 128
    %v1201 = vpop.trf.xlu0
    %v1202 = vpop.trf.xlu0
    %v1203 = vpop.trf.xlu0
    %v1204 = vpop.trf.xlu0
    %v1205 = vpop.trf.xlu0
    %v1206 = vpop.trf.xlu0
    %v1207 = vpop.trf.xlu0
    %v1208 = vpop.trf.xlu0
    %1209 = vxpose.xlu0.c.b16.start [1/8] %v1107, 128
    %1210 = vxpose.xlu0.c.b16.cont [2/8] 0, 128
    %1211 = vxpose.xlu0.c.b16.cont [3/8] 0, 128
    %1212 = vxpose.xlu0.c.b16.cont [4/8] 0, 128
    %1213 = vxpose.xlu0.c.b16.cont [5/8] 0, 128
    %1214 = vxpose.xlu0.c.b16.cont [6/8] 0, 128
    %1215 = vxpose.xlu0.c.b16.cont [7/8] 0, 128
    %1216 = vxpose.xlu0.c.b16.end [8/8] 0, 128
    %v1217 = vpop.trf.xlu0
    %v1218 = vpop.trf.xlu0
    %v1219 = vpop.trf.xlu0
    %v1220 = vpop.trf.xlu0
    %v1221 = vpop.trf.xlu0
    %v1222 = vpop.trf.xlu0
    %v1223 = vpop.trf.xlu0
    %v1224 = vpop.trf.xlu0
    %1225 = vxpose.xlu0.c.b16.start [1/8] %v1111, 128
    %1226 = vxpose.xlu0.c.b16.cont [2/8] 0, 128
    %1227 = vxpose.xlu0.c.b16.cont [3/8] 0, 128
    %1228 = vxpose.xlu0.c.b16.cont [4/8] 0, 128
    %1229 = vxpose.xlu0.c.b16.cont [5/8] 0, 128
    %1230 = vxpose.xlu0.c.b16.cont [6/8] 0, 128
    %1231 = vxpose.xlu0.c.b16.cont [7/8] 0, 128
    %1232 = vxpose.xlu0.c.b16.end [8/8] 0, 128
    %v1233 = vpop.trf.xlu0
    %v1234 = vpop.trf.xlu0
    %v1235 = vpop.trf.xlu0
    %v1236 = vpop.trf.xlu0
    %v1237 = vpop.trf.xlu0
    %v1238 = vpop.trf.xlu0
    %v1239 = vpop.trf.xlu0
    %v1240 = vpop.trf.xlu0
    %v1241 = vrot.slane %v1185, 4
    %v1242 = vsel %vm609, %v1241, %v1121
    %v1244 = vunpack.c.l.s4 1983009808
    %v1245 = vunpack.c.0.s8 %v1244
    %v1246 = vperm.slane %v1242, %v1245
    %v1247 = vrot.slane %v1217, 4
    %v1248 = vsel %vm609, %v1247, %v1153
    %v1250 = vunpack.c.l.s4 1983009808
    %v1251 = vunpack.c.0.s8 %v1250
    %v1252 = vperm.slane %v1248, %v1251
    %v1253 = vrot.slane %v1252, 4
    %v1254 = vsel %vm609, %v1253, %v1246
    %v1256 = vunpack.c.l.s4 1934713408
    %v1257 = vunpack.c.0.s8 %v1256
    %v1258 = vperm.slane %v1254, %v1257
    %v1259 = vrot.slane %v1258, 4
    %v1260 = vsel %vm609, 0, %v1259
    %v1261 = vrot.slane %v1201, 4
    %v1262 = vsel %vm609, %v1261, %v1137
    %v1264 = vunpack.c.l.s4 1983009808
    %v1265 = vunpack.c.0.s8 %v1264
    %v1266 = vperm.slane %v1262, %v1265
    %v1267 = vrot.slane %v1233, 4
    %v1268 = vsel %vm609, %v1267, %v1169
    %v1270 = vunpack.c.l.s4 1983009808
    %v1271 = vunpack.c.0.s8 %v1270
    %v1272 = vperm.slane %v1268, %v1271
    %v1273 = vrot.slane %v1272, 4
    %v1274 = vsel %vm609, %v1273, %v1266
    %v1276 = vunpack.c.l.s4 1934713408
    %v1277 = vunpack.c.0.s8 %v1276
    %v1278 = vperm.slane %v1274, %v1277
    %v1279 = vrot.slane %v1278, 4
    %v1280 = vsel %vm609, 0, %v1279
    %v1283 = vpack.i.b16 %v1278, %v1258
    %v1284 = vshrl.u32 %v1258, 16
    %v1285 = vshrl.u32 %v1278, 16
    %v1286 = vpack.i.b16 %v1285, %v1284
    %v1289 = vpack.i.b16 %v1280, %v1260
    %v1290 = vshrl.u32 %v1260, 16
    %v1291 = vshrl.u32 %v1280, 16
    %v1292 = vpack.i.b16 %v1291, %v1290
    %v1293 = vunpack.c.l.b16 %v691
    %v1294 = vunpack.c.l.b16 %v703
    %v1295 = vpack.c.b16 %v1294, %v1293
    %vm1296 = vcmask 64512
    %v1298 = vsel %vm1296, %v1295, 0
    %vm1300 = vcmask 1043456
    %v1302 = vsel %vm1300, %v1283, 0
    %1304 = vmatpush.bf16.msra.mxu0 0
    %1305 = vmatpush.bf16.msra.mxu0 0
    %1306 = vmatpush.bf16.msra.mxu0 0
    %1307 = vmatpush.bf16.msra.mxu0 0
    %1308 = vmatpush.bf16.msra.mxu0 0
    %1309 = vmatpush.bf16.msra.mxu0 0
    %1310 = vmatpush.bf16.msra.mxu0 0
    %1311 = vmatpush.bf16.msra.mxu0 %v1302
    %1312 = vmatmul.bf16.gmra.mxu0 %v1298
    %v1313 = vpop.f32.mrf.mxu0
    %v1314 = vadd.f32 %v119, %v1313
    %v1315 = vpop.f32.mrf.mxu0
    %v1316 = vadd.f32 %v120, %v1315
    %1317 = vdwg.mxu0
    %v1318 = vunpack.c.l.b16 %v694
    %v1319 = vunpack.c.l.b16 %v706
    %v1320 = vpack.c.b16 %v1319, %v1318
    %v1322 = vsel %vm1296, %v1320, 0
    %v1325 = vsel %vm1300, %v1286, 0
    %1327 = vmatpush.bf16.msra.mxu0 0
    %1328 = vmatpush.bf16.msra.mxu0 0
    %1329 = vmatpush.bf16.msra.mxu0 0
    %1330 = vmatpush.bf16.msra.mxu0 0
    %1331 = vmatpush.bf16.msra.mxu0 0
    %1332 = vmatpush.bf16.msra.mxu0 0
    %1333 = vmatpush.bf16.msra.mxu0 0
    %1334 = vmatpush.bf16.msra.mxu0 %v1325
    %1335 = vmatmul.bf16.gmra.mxu0 %v1322
    %v1336 = vpop.f32.mrf.mxu0
    %v1337 = vadd.f32 %v119, %v1336
    %v1338 = vpop.f32.mrf.mxu0
    %v1339 = vadd.f32 %v120, %v1338
    %1340 = vdwg.mxu0
    %v1341 = vunpack.c.l.b16 %v697
    %v1342 = vunpack.c.l.b16 %v709
    %v1343 = vpack.c.b16 %v1342, %v1341
    %v1345 = vsel %vm1296, %v1343, 0
    %v1348 = vsel %vm1300, %v1289, 0
    %1350 = vmatpush.bf16.msra.mxu0 0
    %1351 = vmatpush.bf16.msra.mxu0 0
    %1352 = vmatpush.bf16.msra.mxu0 0
    %1353 = vmatpush.bf16.msra.mxu0 0
    %1354 = vmatpush.bf16.msra.mxu0 0
    %1355 = vmatpush.bf16.msra.mxu0 0
    %1356 = vmatpush.bf16.msra.mxu0 0
    %1357 = vmatpush.bf16.msra.mxu0 %v1348
    %1358 = vmatmul.bf16.gmra.mxu0 %v1345
    %v1359 = vpop.f32.mrf.mxu0
    %v1360 = vadd.f32 %v119, %v1359
    %v1361 = vpop.f32.mrf.mxu0
    %v1362 = vadd.f32 %v120, %v1361
    %1363 = vdwg.mxu0
    %v1364 = vunpack.c.l.b16 %v700
    %v1365 = vunpack.c.l.b16 %v712
    %v1366 = vpack.c.b16 %v1365, %v1364
    %v1368 = vsel %vm1296, %v1366, 0
    %v1371 = vsel %vm1300, %v1292, 0
    %1373 = vmatpush.bf16.msra.mxu0 0
    %1374 = vmatpush.bf16.msra.mxu0 0
    %1375 = vmatpush.bf16.msra.mxu0 0
    %1376 = vmatpush.bf16.msra.mxu0 0
    %1377 = vmatpush.bf16.msra.mxu0 0
    %1378 = vmatpush.bf16.msra.mxu0 0
    %1379 = vmatpush.bf16.msra.mxu0 0
    %1380 = vmatpush.bf16.msra.mxu0 %v1371
    %1381 = vmatmul.bf16.gmra.mxu0 %v1368
    %v1382 = vpop.f32.mrf.mxu0
    %v1383 = vadd.f32 %v119, %v1382
    %v1384 = vpop.f32.mrf.mxu0
    %v1385 = vadd.f32 %v120, %v1384
    %1386 = vdwg.mxu0
    %vm1387 = vcmask 130048
    %v1388 = vsel %vm1387, %v1314, -inf
    %1389 = vmax.xlane.f32.xlu0 %v1388
    %v1390 = vpop.xlane.xlu0 %1389
    %v1391 = vsel %vm1387, %v1316, -inf
    %1392 = vmax.xlane.f32.xlu0 %v1391
    %v1393 = vpop.xlane.xlu0 %1392
    %v1394 = vsel %vm1387, %v1337, -inf
    %1395 = vmax.xlane.f32.xlu0 %v1394
    %v1396 = vpop.xlane.xlu0 %1395
    %v1397 = vsel %vm1387, %v1339, -inf
    %1398 = vmax.xlane.f32.xlu0 %v1397
    %v1399 = vpop.xlane.xlu0 %1398
    %v1400 = vsel %vm1387, %v1360, -inf
    %1401 = vmax.xlane.f32.xlu0 %v1400
    %v1402 = vpop.xlane.xlu0 %1401
    %v1403 = vsel %vm1387, %v1362, -inf
    %1404 = vmax.xlane.f32.xlu0 %v1403
    %v1405 = vpop.xlane.xlu0 %1404
    %v1406 = vsel %vm1387, %v1383, -inf
    %1407 = vmax.xlane.f32.xlu0 %v1406
    %v1408 = vpop.xlane.xlu0 %1407
    %v1409 = vsel %vm1387, %v1385, -inf
    %1410 = vmax.xlane.f32.xlu0 %v1409
    %v1411 = vpop.xlane.xlu0 %1410
    %v1412 = vsub.f32 %v1314, %v1390
    %v1413 = vsub.f32 %v1316, %v1393
    %v1414 = vsub.f32 %v1337, %v1396
    %v1415 = vsub.f32 %v1339, %v1399
    %v1416 = vsub.f32 %v1360, %v1402
    %v1417 = vsub.f32 %v1362, %v1405
    %v1418 = vsub.f32 %v1383, %v1408
    %v1419 = vsub.f32 %v1385, %v1411
    %v1420 = vmul.f32 %v1412, 1.442695
    %v1421 = vpow.pop %v1420
    %v1422 = vmul.f32 %v1413, 1.442695
    %v1423 = vpow.pop %v1422
    %v1424 = vmul.f32 %v1414, 1.442695
    %v1425 = vpow.pop %v1424
    %v1426 = vmul.f32 %v1415, 1.442695
    %v1427 = vpow.pop %v1426
    %v1428 = vmul.f32 %v1416, 1.442695
    %v1429 = vpow.pop %v1428
    %v1430 = vmul.f32 %v1417, 1.442695
    %v1431 = vpow.pop %v1430
    %v1432 = vmul.f32 %v1418, 1.442695
    %v1433 = vpow.pop %v1432
    %v1434 = vmul.f32 %v1419, 1.442695
    %v1435 = vpow.pop %v1434
    %v1436 = vsel %vm1387, %v1421, 0.0
    %1437 = vadd.xlane.f32.xlu0 %v1436
    %v1438 = vpop.xlane.xlu0 %1437
    %v1439 = vsel %vm1387, %v1423, 0.0
    %1440 = vadd.xlane.f32.xlu0 %v1439
    %v1441 = vpop.xlane.xlu0 %1440
    %v1442 = vsel %vm1387, %v1425, 0.0
    %1443 = vadd.xlane.f32.xlu0 %v1442
    %v1444 = vpop.xlane.xlu0 %1443
    %v1445 = vsel %vm1387, %v1427, 0.0
    %1446 = vadd.xlane.f32.xlu0 %v1445
    %v1447 = vpop.xlane.xlu0 %1446
    %v1448 = vsel %vm1387, %v1429, 0.0
    %1449 = vadd.xlane.f32.xlu0 %v1448
    %v1450 = vpop.xlane.xlu0 %1449
    %v1451 = vsel %vm1387, %v1431, 0.0
    %1452 = vadd.xlane.f32.xlu0 %v1451
    %v1453 = vpop.xlane.xlu0 %1452
    %v1454 = vsel %vm1387, %v1433, 0.0
    %1455 = vadd.xlane.f32.xlu0 %v1454
    %v1456 = vpop.xlane.xlu0 %1455
    %v1457 = vsel %vm1387, %v1435, 0.0
    %1458 = vadd.xlane.f32.xlu0 %v1457
    %v1459 = vpop.xlane.xlu0 %1458
    %v1460 = vrcp.pop %v1438
    %v1461 = vrcp.pop %v1441
    %v1462 = vrcp.pop %v1444
    %v1463 = vrcp.pop %v1447
    %v1464 = vrcp.pop %v1450
    %v1465 = vrcp.pop %v1453
    %v1466 = vrcp.pop %v1456
    %v1467 = vrcp.pop %v1459
    %v1468 = vmul.f32 %v1421, %v1460
    %v1469 = vmul.f32 %v1423, %v1461
    %v1470 = vmul.f32 %v1425, %v1462
    %v1471 = vmul.f32 %v1427, %v1463
    %v1472 = vmul.f32 %v1429, %v1464
    %v1473 = vmul.f32 %v1431, %v1465
    %v1474 = vmul.f32 %v1433, %v1466
    %v1475 = vmul.f32 %v1435, %v1467
    %v1476 = vpack.c.bf16 %v1468, %v1468
    %v1477 = vpack.c.bf16 %v1469, %v1469
    %v1478 = vpack.c.bf16 %v1470, %v1470
    %v1479 = vpack.c.bf16 %v1471, %v1471
    %v1480 = vpack.c.bf16 %v1472, %v1472
    %v1481 = vpack.c.bf16 %v1473, %v1473
    %v1482 = vpack.c.bf16 %v1474, %v1474
    %v1483 = vpack.c.bf16 %v1475, %v1475
    %1484 = vxpose.xlu0.c.b16.start [1/8] %v592, 128
    %1485 = vxpose.xlu0.c.b16.cont [2/8] 0, 128
    %1486 = vxpose.xlu0.c.b16.cont [3/8] 0, 128
    %1487 = vxpose.xlu0.c.b16.cont [4/8] 0, 128
    %1488 = vxpose.xlu0.c.b16.cont [5/8] 0, 128
    %1489 = vxpose.xlu0.c.b16.cont [6/8] 0, 128
    %1490 = vxpose.xlu0.c.b16.cont [7/8] 0, 128
    %1491 = vxpose.xlu0.c.b16.end [8/8] 0, 128
    %v1492 = vpop.trf.xlu0
    %v1493 = vpop.trf.xlu0
    %v1494 = vpop.trf.xlu0
    %v1495 = vpop.trf.xlu0
    %v1496 = vpop.trf.xlu0
    %v1497 = vpop.trf.xlu0
    %v1498 = vpop.trf.xlu0
    %v1499 = vpop.trf.xlu0
    %1500 = vxpose.xlu0.c.b16.start [1/8] %v593, 128
    %1501 = vxpose.xlu0.c.b16.cont [2/8] 0, 128
    %1502 = vxpose.xlu0.c.b16.cont [3/8] 0, 128
    %1503 = vxpose.xlu0.c.b16.cont [4/8] 0, 128
    %1504 = vxpose.xlu0.c.b16.cont [5/8] 0, 128
    %1505 = vxpose.xlu0.c.b16.cont [6/8] 0, 128
    %1506 = vxpose.xlu0.c.b16.cont [7/8] 0, 128
    %1507 = vxpose.xlu0.c.b16.end [8/8] 0, 128
    %v1508 = vpop.trf.xlu0
    %v1509 = vpop.trf.xlu0
    %v1510 = vpop.trf.xlu0
    %v1511 = vpop.trf.xlu0
    %v1512 = vpop.trf.xlu0
    %v1513 = vpop.trf.xlu0
    %v1514 = vpop.trf.xlu0
    %v1515 = vpop.trf.xlu0
    %1516 = vxpose.xlu0.c.b16.start [1/8] %v594, 128
    %1517 = vxpose.xlu0.c.b16.cont [2/8] 0, 128
    %1518 = vxpose.xlu0.c.b16.cont [3/8] 0, 128
    %1519 = vxpose.xlu0.c.b16.cont [4/8] 0, 128
    %1520 = vxpose.xlu0.c.b16.cont [5/8] 0, 128
    %1521 = vxpose.xlu0.c.b16.cont [6/8] 0, 128
    %1522 = vxpose.xlu0.c.b16.cont [7/8] 0, 128
    %1523 = vxpose.xlu0.c.b16.end [8/8] 0, 128
    %v1524 = vpop.trf.xlu0
    %v1525 = vpop.trf.xlu0
    %v1526 = vpop.trf.xlu0
    %v1527 = vpop.trf.xlu0
    %v1528 = vpop.trf.xlu0
    %v1529 = vpop.trf.xlu0
    %v1530 = vpop.trf.xlu0
    %v1531 = vpop.trf.xlu0
    %1532 = vxpose.xlu0.c.b16.start [1/8] %v595, 128
    %1533 = vxpose.xlu0.c.b16.cont [2/8] 0, 128
    %1534 = vxpose.xlu0.c.b16.cont [3/8] 0, 128
    %1535 = vxpose.xlu0.c.b16.cont [4/8] 0, 128
    %1536 = vxpose.xlu0.c.b16.cont [5/8] 0, 128
    %1537 = vxpose.xlu0.c.b16.cont [6/8] 0, 128
    %1538 = vxpose.xlu0.c.b16.cont [7/8] 0, 128
    %1539 = vxpose.xlu0.c.b16.end [8/8] 0, 128
    %v1540 = vpop.trf.xlu0
    %v1541 = vpop.trf.xlu0
    %v1542 = vpop.trf.xlu0
    %v1543 = vpop.trf.xlu0
    %v1544 = vpop.trf.xlu0
    %v1545 = vpop.trf.xlu0
    %v1546 = vpop.trf.xlu0
    %v1547 = vpop.trf.xlu0
    %1548 = vxpose.xlu0.c.b16.start [1/8] %v596, 128
    %1549 = vxpose.xlu0.c.b16.cont [2/8] 0, 128
    %1550 = vxpose.xlu0.c.b16.cont [3/8] 0, 128
    %1551 = vxpose.xlu0.c.b16.cont [4/8] 0, 128
    %1552 = vxpose.xlu0.c.b16.cont [5/8] 0, 128
    %1553 = vxpose.xlu0.c.b16.cont [6/8] 0, 128
    %1554 = vxpose.xlu0.c.b16.cont [7/8] 0, 128
    %1555 = vxpose.xlu0.c.b16.end [8/8] 0, 128
    %v1556 = vpop.trf.xlu0
    %v1557 = vpop.trf.xlu0
    %v1558 = vpop.trf.xlu0
    %v1559 = vpop.trf.xlu0
    %v1560 = vpop.trf.xlu0
    %v1561 = vpop.trf.xlu0
    %v1562 = vpop.trf.xlu0
    %v1563 = vpop.trf.xlu0
    %1564 = vxpose.xlu0.c.b16.start [1/8] %v597, 128
    %1565 = vxpose.xlu0.c.b16.cont [2/8] 0, 128
    %1566 = vxpose.xlu0.c.b16.cont [3/8] 0, 128
    %1567 = vxpose.xlu0.c.b16.cont [4/8] 0, 128
    %1568 = vxpose.xlu0.c.b16.cont [5/8] 0, 128
    %1569 = vxpose.xlu0.c.b16.cont [6/8] 0, 128
    %1570 = vxpose.xlu0.c.b16.cont [7/8] 0, 128
    %1571 = vxpose.xlu0.c.b16.end [8/8] 0, 128
    %v1572 = vpop.trf.xlu0
    %v1573 = vpop.trf.xlu0
    %v1574 = vpop.trf.xlu0
    %v1575 = vpop.trf.xlu0
    %v1576 = vpop.trf.xlu0
    %v1577 = vpop.trf.xlu0
    %v1578 = vpop.trf.xlu0
    %v1579 = vpop.trf.xlu0
    %1580 = vxpose.xlu0.c.b16.start [1/8] %v598, 128
    %1581 = vxpose.xlu0.c.b16.cont [2/8] 0, 128
    %1582 = vxpose.xlu0.c.b16.cont [3/8] 0, 128
    %1583 = vxpose.xlu0.c.b16.cont [4/8] 0, 128
    %1584 = vxpose.xlu0.c.b16.cont [5/8] 0, 128
    %1585 = vxpose.xlu0.c.b16.cont [6/8] 0, 128
    %1586 = vxpose.xlu0.c.b16.cont [7/8] 0, 128
    %1587 = vxpose.xlu0.c.b16.end [8/8] 0, 128
    %v1588 = vpop.trf.xlu0
    %v1589 = vpop.trf.xlu0
    %v1590 = vpop.trf.xlu0
    %v1591 = vpop.trf.xlu0
    %v1592 = vpop.trf.xlu0
    %v1593 = vpop.trf.xlu0
    %v1594 = vpop.trf.xlu0
    %v1595 = vpop.trf.xlu0
    %1596 = vxpose.xlu0.c.b16.start [1/8] %v599, 128
    %1597 = vxpose.xlu0.c.b16.cont [2/8] 0, 128
    %1598 = vxpose.xlu0.c.b16.cont [3/8] 0, 128
    %1599 = vxpose.xlu0.c.b16.cont [4/8] 0, 128
    %1600 = vxpose.xlu0.c.b16.cont [5/8] 0, 128
    %1601 = vxpose.xlu0.c.b16.cont [6/8] 0, 128
    %1602 = vxpose.xlu0.c.b16.cont [7/8] 0, 128
    %1603 = vxpose.xlu0.c.b16.end [8/8] 0, 128
    %v1604 = vpop.trf.xlu0
    %v1605 = vpop.trf.xlu0
    %v1606 = vpop.trf.xlu0
    %v1607 = vpop.trf.xlu0
    %v1608 = vpop.trf.xlu0
    %v1609 = vpop.trf.xlu0
    %v1610 = vpop.trf.xlu0
    %v1611 = vpop.trf.xlu0
    %1612 = vxpose.xlu0.c.b16.start [1/8] %v600, 128
    %1613 = vxpose.xlu0.c.b16.cont [2/8] 0, 128
    %1614 = vxpose.xlu0.c.b16.cont [3/8] 0, 128
    %1615 = vxpose.xlu0.c.b16.cont [4/8] 0, 128
    %1616 = vxpose.xlu0.c.b16.cont [5/8] 0, 128
    %1617 = vxpose.xlu0.c.b16.cont [6/8] 0, 128
    %1618 = vxpose.xlu0.c.b16.cont [7/8] 0, 128
    %1619 = vxpose.xlu0.c.b16.end [8/8] 0, 128
    %v1620 = vpop.trf.xlu0
    %v1621 = vpop.trf.xlu0
    %v1622 = vpop.trf.xlu0
    %v1623 = vpop.trf.xlu0
    %v1624 = vpop.trf.xlu0
    %v1625 = vpop.trf.xlu0
    %v1626 = vpop.trf.xlu0
    %v1627 = vpop.trf.xlu0
    %1628 = vxpose.xlu0.c.b16.start [1/8] %v601, 128
    %1629 = vxpose.xlu0.c.b16.cont [2/8] 0, 128
    %1630 = vxpose.xlu0.c.b16.cont [3/8] 0, 128
    %1631 = vxpose.xlu0.c.b16.cont [4/8] 0, 128
    %1632 = vxpose.xlu0.c.b16.cont [5/8] 0, 128
    %1633 = vxpose.xlu0.c.b16.cont [6/8] 0, 128
    %1634 = vxpose.xlu0.c.b16.cont [7/8] 0, 128
    %1635 = vxpose.xlu0.c.b16.end [8/8] 0, 128
    %v1636 = vpop.trf.xlu0
    %v1637 = vpop.trf.xlu0
    %v1638 = vpop.trf.xlu0
    %v1639 = vpop.trf.xlu0
    %v1640 = vpop.trf.xlu0
    %v1641 = vpop.trf.xlu0
    %v1642 = vpop.trf.xlu0
    %v1643 = vpop.trf.xlu0
    %1644 = vxpose.xlu0.c.b16.start [1/8] %v602, 128
    %1645 = vxpose.xlu0.c.b16.cont [2/8] 0, 128
    %1646 = vxpose.xlu0.c.b16.cont [3/8] 0, 128
    %1647 = vxpose.xlu0.c.b16.cont [4/8] 0, 128
    %1648 = vxpose.xlu0.c.b16.cont [5/8] 0, 128
    %1649 = vxpose.xlu0.c.b16.cont [6/8] 0, 128
    %1650 = vxpose.xlu0.c.b16.cont [7/8] 0, 128
    %1651 = vxpose.xlu0.c.b16.end [8/8] 0, 128
    %v1652 = vpop.trf.xlu0
    %v1653 = vpop.trf.xlu0
    %v1654 = vpop.trf.xlu0
    %v1655 = vpop.trf.xlu0
    %v1656 = vpop.trf.xlu0
    %v1657 = vpop.trf.xlu0
    %v1658 = vpop.trf.xlu0
    %v1659 = vpop.trf.xlu0
    %1660 = vxpose.xlu0.c.b16.start [1/8] %v603, 128
    %1661 = vxpose.xlu0.c.b16.cont [2/8] 0, 128
    %1662 = vxpose.xlu0.c.b16.cont [3/8] 0, 128
    %1663 = vxpose.xlu0.c.b16.cont [4/8] 0, 128
    %1664 = vxpose.xlu0.c.b16.cont [5/8] 0, 128
    %1665 = vxpose.xlu0.c.b16.cont [6/8] 0, 128
    %1666 = vxpose.xlu0.c.b16.cont [7/8] 0, 128
    %1667 = vxpose.xlu0.c.b16.end [8/8] 0, 128
    %v1668 = vpop.trf.xlu0
    %v1669 = vpop.trf.xlu0
    %v1670 = vpop.trf.xlu0
    %v1671 = vpop.trf.xlu0
    %v1672 = vpop.trf.xlu0
    %v1673 = vpop.trf.xlu0
    %v1674 = vpop.trf.xlu0
    %v1675 = vpop.trf.xlu0
    %1676 = vxpose.xlu0.c.b16.start [1/8] %v604, 128
    %1677 = vxpose.xlu0.c.b16.cont [2/8] 0, 128
    %1678 = vxpose.xlu0.c.b16.cont [3/8] 0, 128
    %1679 = vxpose.xlu0.c.b16.cont [4/8] 0, 128
    %1680 = vxpose.xlu0.c.b16.cont [5/8] 0, 128
    %1681 = vxpose.xlu0.c.b16.cont [6/8] 0, 128
    %1682 = vxpose.xlu0.c.b16.cont [7/8] 0, 128
    %1683 = vxpose.xlu0.c.b16.end [8/8] 0, 128
    %v1684 = vpop.trf.xlu0
    %v1685 = vpop.trf.xlu0
    %v1686 = vpop.trf.xlu0
    %v1687 = vpop.trf.xlu0
    %v1688 = vpop.trf.xlu0
    %v1689 = vpop.trf.xlu0
    %v1690 = vpop.trf.xlu0
    %v1691 = vpop.trf.xlu0
    %1692 = vxpose.xlu0.c.b16.start [1/8] %v605, 128
    %1693 = vxpose.xlu0.c.b16.cont [2/8] 0, 128
    %1694 = vxpose.xlu0.c.b16.cont [3/8] 0, 128
    %1695 = vxpose.xlu0.c.b16.cont [4/8] 0, 128
    %1696 = vxpose.xlu0.c.b16.cont [5/8] 0, 128
    %1697 = vxpose.xlu0.c.b16.cont [6/8] 0, 128
    %1698 = vxpose.xlu0.c.b16.cont [7/8] 0, 128
    %1699 = vxpose.xlu0.c.b16.end [8/8] 0, 128
    %v1700 = vpop.trf.xlu0
    %v1701 = vpop.trf.xlu0
    %v1702 = vpop.trf.xlu0
    %v1703 = vpop.trf.xlu0
    %v1704 = vpop.trf.xlu0
    %v1705 = vpop.trf.xlu0
    %v1706 = vpop.trf.xlu0
    %v1707 = vpop.trf.xlu0
    %1708 = vxpose.xlu0.c.b16.start [1/8] %v606, 128
    %1709 = vxpose.xlu0.c.b16.cont [2/8] 0, 128
    %1710 = vxpose.xlu0.c.b16.cont [3/8] 0, 128
    %1711 = vxpose.xlu0.c.b16.cont [4/8] 0, 128
    %1712 = vxpose.xlu0.c.b16.cont [5/8] 0, 128
    %1713 = vxpose.xlu0.c.b16.cont [6/8] 0, 128
    %1714 = vxpose.xlu0.c.b16.cont [7/8] 0, 128
    %1715 = vxpose.xlu0.c.b16.end [8/8] 0, 128
    %v1716 = vpop.trf.xlu0
    %v1717 = vpop.trf.xlu0
    %v1718 = vpop.trf.xlu0
    %v1719 = vpop.trf.xlu0
    %v1720 = vpop.trf.xlu0
    %v1721 = vpop.trf.xlu0
    %v1722 = vpop.trf.xlu0
    %v1723 = vpop.trf.xlu0
    %1724 = vxpose.xlu0.c.b16.start [1/8] %v607, 128
    %1725 = vxpose.xlu0.c.b16.cont [2/8] 0, 128
    %1726 = vxpose.xlu0.c.b16.cont [3/8] 0, 128
    %1727 = vxpose.xlu0.c.b16.cont [4/8] 0, 128
    %1728 = vxpose.xlu0.c.b16.cont [5/8] 0, 128
    %1729 = vxpose.xlu0.c.b16.cont [6/8] 0, 128
    %1730 = vxpose.xlu0.c.b16.cont [7/8] 0, 128
    %1731 = vxpose.xlu0.c.b16.end [8/8] 0, 128
    %v1732 = vpop.trf.xlu0
    %v1733 = vpop.trf.xlu0
    %v1734 = vpop.trf.xlu0
    %v1735 = vpop.trf.xlu0
    %v1736 = vpop.trf.xlu0
    %v1737 = vpop.trf.xlu0
    %v1738 = vpop.trf.xlu0
    %v1739 = vpop.trf.xlu0
    %v1740 = vrot.slane %v1556, 4
    %v1741 = vsel %vm609, %v1740, %v1492
    %v1743 = vunpack.c.l.s4 1983009808
    %v1744 = vunpack.c.0.s8 %v1743
    %v1745 = vperm.slane %v1741, %v1744
    %v1746 = vrot.slane %v1588, 4
    %v1747 = vsel %vm609, %v1746, %v1524
    %v1749 = vunpack.c.l.s4 1983009808
    %v1750 = vunpack.c.0.s8 %v1749
    %v1751 = vperm.slane %v1747, %v1750
    %v1752 = vrot.slane %v1684, 4
    %v1753 = vsel %vm609, %v1752, %v1620
    %v1755 = vunpack.c.l.s4 1983009808
    %v1756 = vunpack.c.0.s8 %v1755
    %v1757 = vperm.slane %v1753, %v1756
    %v1758 = vrot.slane %v1716, 4
    %v1759 = vsel %vm609, %v1758, %v1652
    %v1761 = vunpack.c.l.s4 1983009808
    %v1762 = vunpack.c.0.s8 %v1761
    %v1763 = vperm.slane %v1759, %v1762
    %v1764 = vrot.slane %v1751, 4
    %v1765 = vsel %vm609, %v1764, %v1745
    %v1766 = vrot.slane %v1745, 4
    %v1767 = vsel %vm609, %v1751, %v1766
    %v1769 = vunpack.c.l.s4 1934713408
    %v1770 = vunpack.c.0.s8 %v1769
    %v1771 = vperm.slane %v1765, %v1770
    %v1773 = vunpack.c.l.s4 1934713408
    %v1774 = vunpack.c.0.s8 %v1773
    %v1775 = vperm.slane %v1767, %v1774
    %v1776 = vrot.slane %v1763, 4
    %v1777 = vsel %vm609, %v1776, %v1757
    %v1778 = vrot.slane %v1757, 4
    %v1779 = vsel %vm609, %v1763, %v1778
    %v1781 = vunpack.c.l.s4 1934713408
    %v1782 = vunpack.c.0.s8 %v1781
    %v1783 = vperm.slane %v1777, %v1782
    %v1785 = vunpack.c.l.s4 1934713408
    %v1786 = vunpack.c.0.s8 %v1785
    %v1787 = vperm.slane %v1779, %v1786
    %v1788 = vrot.slane %v1783, 4
    %v1789 = vsel %vm609, %v1788, %v1771
    %v1790 = vrot.slane %v1771, 4
    %v1791 = vsel %vm609, %v1783, %v1790
    %v1792 = vrot.slane %v1787, 4
    %v1793 = vsel %vm609, %v1792, %v1775
    %v1794 = vrot.slane %v1775, 4
    %v1795 = vsel %vm609, %v1787, %v1794
    %v1796 = vrot.slane %v1572, 4
    %v1797 = vsel %vm609, %v1796, %v1508
    %v1799 = vunpack.c.l.s4 1983009808
    %v1800 = vunpack.c.0.s8 %v1799
    %v1801 = vperm.slane %v1797, %v1800
    %v1802 = vrot.slane %v1604, 4
    %v1803 = vsel %vm609, %v1802, %v1540
    %v1805 = vunpack.c.l.s4 1983009808
    %v1806 = vunpack.c.0.s8 %v1805
    %v1807 = vperm.slane %v1803, %v1806
    %v1808 = vrot.slane %v1700, 4
    %v1809 = vsel %vm609, %v1808, %v1636
    %v1811 = vunpack.c.l.s4 1983009808
    %v1812 = vunpack.c.0.s8 %v1811
    %v1813 = vperm.slane %v1809, %v1812
    %v1814 = vrot.slane %v1732, 4
    %v1815 = vsel %vm609, %v1814, %v1668
    %v1817 = vunpack.c.l.s4 1983009808
    %v1818 = vunpack.c.0.s8 %v1817
    %v1819 = vperm.slane %v1815, %v1818
    %v1820 = vrot.slane %v1807, 4
    %v1821 = vsel %vm609, %v1820, %v1801
    %v1822 = vrot.slane %v1801, 4
    %v1823 = vsel %vm609, %v1807, %v1822
    %v1825 = vunpack.c.l.s4 1934713408
    %v1826 = vunpack.c.0.s8 %v1825
    %v1827 = vperm.slane %v1821, %v1826
    %v1829 = vunpack.c.l.s4 1934713408
    %v1830 = vunpack.c.0.s8 %v1829
    %v1831 = vperm.slane %v1823, %v1830
    %v1832 = vrot.slane %v1819, 4
    %v1833 = vsel %vm609, %v1832, %v1813
    %v1834 = vrot.slane %v1813, 4
    %v1835 = vsel %vm609, %v1819, %v1834
    %v1837 = vunpack.c.l.s4 1934713408
    %v1838 = vunpack.c.0.s8 %v1837
    %v1839 = vperm.slane %v1833, %v1838
    %v1841 = vunpack.c.l.s4 1934713408
    %v1842 = vunpack.c.0.s8 %v1841
    %v1843 = vperm.slane %v1835, %v1842
    %v1844 = vrot.slane %v1839, 4
    %v1845 = vsel %vm609, %v1844, %v1827
    %v1846 = vrot.slane %v1827, 4
    %v1847 = vsel %vm609, %v1839, %v1846
    %v1848 = vrot.slane %v1843, 4
    %v1849 = vsel %vm609, %v1848, %v1831
    %v1850 = vrot.slane %v1831, 4
    %v1851 = vsel %vm609, %v1843, %v1850
    %v1854 = vpack.i.b16 %v1845, %v1789
    %v1856 = vshrl.u32 %v1789, 16
    %v1857 = vshrl.u32 %v1845, 16
    %v1858 = vpack.i.b16 %v1857, %v1856
    %v1862 = vpack.i.b16 %v1847, %v1791
    %v1864 = vshrl.u32 %v1791, 16
    %v1865 = vshrl.u32 %v1847, 16
    %v1866 = vpack.i.b16 %v1865, %v1864
    %v1870 = vpack.i.b16 %v1849, %v1793
    %v1872 = vshrl.u32 %v1793, 16
    %v1873 = vshrl.u32 %v1849, 16
    %v1874 = vpack.i.b16 %v1873, %v1872
    %v1878 = vpack.i.b16 %v1851, %v1795
    %v1880 = vshrl.u32 %v1795, 16
    %v1881 = vshrl.u32 %v1851, 16
    %v1882 = vpack.i.b16 %v1881, %v1880
    %1884 = vxpose.xlu0.c.b16.start [1/8] %v1854, 128
    %1885 = vxpose.xlu0.c.b16.cont [2/8] 0, 128
    %1886 = vxpose.xlu0.c.b16.cont [3/8] 0, 128
    %1887 = vxpose.xlu0.c.b16.cont [4/8] 0, 128
    %1888 = vxpose.xlu0.c.b16.cont [5/8] 0, 128
    %1889 = vxpose.xlu0.c.b16.cont [6/8] 0, 128
    %1890 = vxpose.xlu0.c.b16.cont [7/8] 0, 128
    %1891 = vxpose.xlu0.c.b16.end [8/8] 0, 128
    %v1892 = vpop.trf.xlu0
    %v1893 = vpop.trf.xlu0
    %v1894 = vpop.trf.xlu0
    %v1895 = vpop.trf.xlu0
    %v1896 = vpop.trf.xlu0
    %v1897 = vpop.trf.xlu0
    %v1898 = vpop.trf.xlu0
    %v1899 = vpop.trf.xlu0
    %1900 = vxpose.xlu0.c.b16.start [1/8] %v1858, 128
    %1901 = vxpose.xlu0.c.b16.cont [2/8] 0, 128
    %1902 = vxpose.xlu0.c.b16.cont [3/8] 0, 128
    %1903 = vxpose.xlu0.c.b16.cont [4/8] 0, 128
    %1904 = vxpose.xlu0.c.b16.cont [5/8] 0, 128
    %1905 = vxpose.xlu0.c.b16.cont [6/8] 0, 128
    %1906 = vxpose.xlu0.c.b16.cont [7/8] 0, 128
    %1907 = vxpose.xlu0.c.b16.end [8/8] 0, 128
    %v1908 = vpop.trf.xlu0
    %v1909 = vpop.trf.xlu0
    %v1910 = vpop.trf.xlu0
    %v1911 = vpop.trf.xlu0
    %v1912 = vpop.trf.xlu0
    %v1913 = vpop.trf.xlu0
    %v1914 = vpop.trf.xlu0
    %v1915 = vpop.trf.xlu0
    %1916 = vxpose.xlu0.c.b16.start [1/8] %v1862, 128
    %1917 = vxpose.xlu0.c.b16.cont [2/8] 0, 128
    %1918 = vxpose.xlu0.c.b16.cont [3/8] 0, 128
    %1919 = vxpose.xlu0.c.b16.cont [4/8] 0, 128
    %1920 = vxpose.xlu0.c.b16.cont [5/8] 0, 128
    %1921 = vxpose.xlu0.c.b16.cont [6/8] 0, 128
    %1922 = vxpose.xlu0.c.b16.cont [7/8] 0, 128
    %1923 = vxpose.xlu0.c.b16.end [8/8] 0, 128
    %v1924 = vpop.trf.xlu0
    %v1925 = vpop.trf.xlu0
    %v1926 = vpop.trf.xlu0
    %v1927 = vpop.trf.xlu0
    %v1928 = vpop.trf.xlu0
    %v1929 = vpop.trf.xlu0
    %v1930 = vpop.trf.xlu0
    %v1931 = vpop.trf.xlu0
    %1932 = vxpose.xlu0.c.b16.start [1/8] %v1866, 128
    %1933 = vxpose.xlu0.c.b16.cont [2/8] 0, 128
    %1934 = vxpose.xlu0.c.b16.cont [3/8] 0, 128
    %1935 = vxpose.xlu0.c.b16.cont [4/8] 0, 128
    %1936 = vxpose.xlu0.c.b16.cont [5/8] 0, 128
    %1937 = vxpose.xlu0.c.b16.cont [6/8] 0, 128
    %1938 = vxpose.xlu0.c.b16.cont [7/8] 0, 128
    %1939 = vxpose.xlu0.c.b16.end [8/8] 0, 128
    %v1940 = vpop.trf.xlu0
    %v1941 = vpop.trf.xlu0
    %v1942 = vpop.trf.xlu0
    %v1943 = vpop.trf.xlu0
    %v1944 = vpop.trf.xlu0
    %v1945 = vpop.trf.xlu0
    %v1946 = vpop.trf.xlu0
    %v1947 = vpop.trf.xlu0
    %1948 = vxpose.xlu0.c.b16.start [1/8] %v1870, 128
    %1949 = vxpose.xlu0.c.b16.cont [2/8] 0, 128
    %1950 = vxpose.xlu0.c.b16.cont [3/8] 0, 128
    %1951 = vxpose.xlu0.c.b16.cont [4/8] 0, 128
    %1952 = vxpose.xlu0.c.b16.cont [5/8] 0, 128
    %1953 = vxpose.xlu0.c.b16.cont [6/8] 0, 128
    %1954 = vxpose.xlu0.c.b16.cont [7/8] 0, 128
    %1955 = vxpose.xlu0.c.b16.end [8/8] 0, 128
    %v1956 = vpop.trf.xlu0
    %v1957 = vpop.trf.xlu0
    %v1958 = vpop.trf.xlu0
    %v1959 = vpop.trf.xlu0
    %v1960 = vpop.trf.xlu0
    %v1961 = vpop.trf.xlu0
    %v1962 = vpop.trf.xlu0
    %v1963 = vpop.trf.xlu0
    %1964 = vxpose.xlu0.c.b16.start [1/8] %v1874, 128
    %1965 = vxpose.xlu0.c.b16.cont [2/8] 0, 128
    %1966 = vxpose.xlu0.c.b16.cont [3/8] 0, 128
    %1967 = vxpose.xlu0.c.b16.cont [4/8] 0, 128
    %1968 = vxpose.xlu0.c.b16.cont [5/8] 0, 128
    %1969 = vxpose.xlu0.c.b16.cont [6/8] 0, 128
    %1970 = vxpose.xlu0.c.b16.cont [7/8] 0, 128
    %1971 = vxpose.xlu0.c.b16.end [8/8] 0, 128
    %v1972 = vpop.trf.xlu0
    %v1973 = vpop.trf.xlu0
    %v1974 = vpop.trf.xlu0
    %v1975 = vpop.trf.xlu0
    %v1976 = vpop.trf.xlu0
    %v1977 = vpop.trf.xlu0
    %v1978 = vpop.trf.xlu0
    %v1979 = vpop.trf.xlu0
    %1980 = vxpose.xlu0.c.b16.start [1/8] %v1878, 128
    %1981 = vxpose.xlu0.c.b16.cont [2/8] 0, 128
    %1982 = vxpose.xlu0.c.b16.cont [3/8] 0, 128
    %1983 = vxpose.xlu0.c.b16.cont [4/8] 0, 128
    %1984 = vxpose.xlu0.c.b16.cont [5/8] 0, 128
    %1985 = vxpose.xlu0.c.b16.cont [6/8] 0, 128
    %1986 = vxpose.xlu0.c.b16.cont [7/8] 0, 128
    %1987 = vxpose.xlu0.c.b16.end [8/8] 0, 128
    %v1988 = vpop.trf.xlu0
    %v1989 = vpop.trf.xlu0
    %v1990 = vpop.trf.xlu0
    %v1991 = vpop.trf.xlu0
    %v1992 = vpop.trf.xlu0
    %v1993 = vpop.trf.xlu0
    %v1994 = vpop.trf.xlu0
    %v1995 = vpop.trf.xlu0
    %1996 = vxpose.xlu0.c.b16.start [1/8] %v1882, 128
    %1997 = vxpose.xlu0.c.b16.cont [2/8] 0, 128
    %1998 = vxpose.xlu0.c.b16.cont [3/8] 0, 128
    %1999 = vxpose.xlu0.c.b16.cont [4/8] 0, 128
    %2000 = vxpose.xlu0.c.b16.cont [5/8] 0, 128
    %2001 = vxpose.xlu0.c.b16.cont [6/8] 0, 128
    %2002 = vxpose.xlu0.c.b16.cont [7/8] 0, 128
    %2003 = vxpose.xlu0.c.b16.end [8/8] 0, 128
    %v2004 = vpop.trf.xlu0
    %v2005 = vpop.trf.xlu0
    %v2006 = vpop.trf.xlu0
    %v2007 = vpop.trf.xlu0
    %v2008 = vpop.trf.xlu0
    %v2009 = vpop.trf.xlu0
    %v2010 = vpop.trf.xlu0
    %v2011 = vpop.trf.xlu0
    %v2012 = vrot.slane %v1956, 4
    %v2013 = vsel %vm609, %v2012, %v1892
    %v2015 = vunpack.c.l.s4 1983009808
    %v2016 = vunpack.c.0.s8 %v2015
    %v2017 = vperm.slane %v2013, %v2016
    %v2018 = vrot.slane %v1988, 4
    %v2019 = vsel %vm609, %v2018, %v1924
    %v2021 = vunpack.c.l.s4 1983009808
    %v2022 = vunpack.c.0.s8 %v2021
    %v2023 = vperm.slane %v2019, %v2022
    %v2024 = vrot.slane %v2023, 4
    %v2025 = vsel %vm609, %v2024, %v2017
    %v2027 = vunpack.c.l.s4 1934713408
    %v2028 = vunpack.c.0.s8 %v2027
    %v2029 = vperm.slane %v2025, %v2028
    %v2030 = vrot.slane %v2029, 4
    %v2031 = vsel %vm609, 0, %v2030
    %v2032 = vrot.slane %v1972, 4
    %v2033 = vsel %vm609, %v2032, %v1908
    %v2035 = vunpack.c.l.s4 1983009808
    %v2036 = vunpack.c.0.s8 %v2035
    %v2037 = vperm.slane %v2033, %v2036
    %v2038 = vrot.slane %v2004, 4
    %v2039 = vsel %vm609, %v2038, %v1940
    %v2041 = vunpack.c.l.s4 1983009808
    %v2042 = vunpack.c.0.s8 %v2041
    %v2043 = vperm.slane %v2039, %v2042
    %v2044 = vrot.slane %v2043, 4
    %v2045 = vsel %vm609, %v2044, %v2037
    %v2047 = vunpack.c.l.s4 1934713408
    %v2048 = vunpack.c.0.s8 %v2047
    %v2049 = vperm.slane %v2045, %v2048
    %v2050 = vrot.slane %v2049, 4
    %v2051 = vsel %vm609, 0, %v2050
    %v2054 = vpack.i.b16 %v2049, %v2029
    %v2055 = vshrl.u32 %v2029, 16
    %v2056 = vshrl.u32 %v2049, 16
    %v2057 = vpack.i.b16 %v2056, %v2055
    %v2060 = vpack.i.b16 %v2051, %v2031
    %v2061 = vshrl.u32 %v2031, 16
    %v2062 = vshrl.u32 %v2051, 16
    %v2063 = vpack.i.b16 %v2062, %v2061
    %v2066 = vunpack.c.l.b16 %v1476
    %v2067 = vunpack.c.l.b16 %v1477
    %v2068 = vpack.c.b16 %v2067, %v2066
    %v2070 = vsel %vm1387, %v2054, 0
    %v2073 = vsel %vm1387, %v2068, 0
    %2075 = vmatpush.bf16.xpose.msra.mxu0 0
    %2076 = vmatpush.bf16.xpose.msra.mxu0 0
    %2077 = vmatpush.bf16.xpose.msra.mxu0 0
    %2078 = vmatpush.bf16.xpose.msra.mxu0 0
    %2079 = vmatpush.bf16.xpose.msra.mxu0 0
    %2080 = vmatpush.bf16.xpose.msra.mxu0 0
    %2081 = vmatpush.bf16.xpose.msra.mxu0 0
    %2082 = vmatpush.bf16.xpose.msra.mxu0 %v2073
    %2083 = vmatmul.bf16.gmra.mxu0 %v2070
    %v2084 = vpop.f32.mrf.mxu0
    %v2085 = vadd.f32 0.0, %v2084
    %v2086 = vpop.f32.mrf.mxu0
    %2087 = vdwg.mxu0
    %v2090 = vunpack.c.l.b16 %v1478
    %v2091 = vunpack.c.l.b16 %v1479
    %v2092 = vpack.c.b16 %v2091, %v2090
    %v2094 = vsel %vm1387, %v2057, 0
    %v2097 = vsel %vm1387, %v2092, 0
    %2099 = vmatpush.bf16.xpose.msra.mxu0 0
    %2100 = vmatpush.bf16.xpose.msra.mxu0 0
    %2101 = vmatpush.bf16.xpose.msra.mxu0 0
    %2102 = vmatpush.bf16.xpose.msra.mxu0 0
    %2103 = vmatpush.bf16.xpose.msra.mxu0 0
    %2104 = vmatpush.bf16.xpose.msra.mxu0 0
    %2105 = vmatpush.bf16.xpose.msra.mxu0 0
    %2106 = vmatpush.bf16.xpose.msra.mxu0 %v2097
    %2107 = vmatmul.bf16.gmra.mxu0 %v2094
    %v2108 = vpop.f32.mrf.mxu0
    %v2109 = vadd.f32 0.0, %v2108
    %v2110 = vpop.f32.mrf.mxu0
    %2111 = vdwg.mxu0
    %v2114 = vunpack.c.l.b16 %v1480
    %v2115 = vunpack.c.l.b16 %v1481
    %v2116 = vpack.c.b16 %v2115, %v2114
    %v2118 = vsel %vm1387, %v2060, 0
    %v2121 = vsel %vm1387, %v2116, 0
    %2123 = vmatpush.bf16.xpose.msra.mxu0 0
    %2124 = vmatpush.bf16.xpose.msra.mxu0 0
    %2125 = vmatpush.bf16.xpose.msra.mxu0 0
    %2126 = vmatpush.bf16.xpose.msra.mxu0 0
    %2127 = vmatpush.bf16.xpose.msra.mxu0 0
    %2128 = vmatpush.bf16.xpose.msra.mxu0 0
    %2129 = vmatpush.bf16.xpose.msra.mxu0 0
    %2130 = vmatpush.bf16.xpose.msra.mxu0 %v2121
    %2131 = vmatmul.bf16.gmra.mxu0 %v2118
    %v2132 = vpop.f32.mrf.mxu0
    %v2133 = vadd.f32 0.0, %v2132
    %v2134 = vpop.f32.mrf.mxu0
    %2135 = vdwg.mxu0
    %v2138 = vunpack.c.l.b16 %v1482
    %v2139 = vunpack.c.l.b16 %v1483
    %v2140 = vpack.c.b16 %v2139, %v2138
    %v2142 = vsel %vm1387, %v2063, 0
    %v2145 = vsel %vm1387, %v2140, 0
    %2147 = vmatpush.bf16.xpose.msra.mxu0 0
    %2148 = vmatpush.bf16.xpose.msra.mxu0 0
    %2149 = vmatpush.bf16.xpose.msra.mxu0 0
    %2150 = vmatpush.bf16.xpose.msra.mxu0 0
    %2151 = vmatpush.bf16.xpose.msra.mxu0 0
    %2152 = vmatpush.bf16.xpose.msra.mxu0 0
    %2153 = vmatpush.bf16.xpose.msra.mxu0 0
    %2154 = vmatpush.bf16.xpose.msra.mxu0 %v2145
    %2155 = vmatmul.bf16.gmra.mxu0 %v2142
    %v2156 = vpop.f32.mrf.mxu0
    %v2157 = vadd.f32 0.0, %v2156
    %v2158 = vpop.f32.mrf.mxu0
    %2159 = vdwg.mxu0
    %2160 = vxpose.xlu0.b32.start [1/16] %v2085, 128
    %2161 = vxpose.xlu0.b32.cont [2/16] 0.0, 128
    %2162 = vxpose.xlu0.b32.cont [3/16] 0.0, 128
    %2163 = vxpose.xlu0.b32.cont [4/16] 0.0, 128
    %2164 = vxpose.xlu0.b32.cont [5/16] 0.0, 128
    %2165 = vxpose.xlu0.b32.cont [6/16] 0.0, 128
    %2166 = vxpose.xlu0.b32.cont [7/16] 0.0, 128
    %2167 = vxpose.xlu0.b32.cont [8/16] 0.0, 128
    %2168 = vxpose.xlu0.b32.cont [9/16] 0.0, 128
    %2169 = vxpose.xlu0.b32.cont [10/16] 0.0, 128
    %2170 = vxpose.xlu0.b32.cont [11/16] 0.0, 128
    %2171 = vxpose.xlu0.b32.cont [12/16] 0.0, 128
    %2172 = vxpose.xlu0.b32.cont [13/16] 0.0, 128
    %2173 = vxpose.xlu0.b32.cont [14/16] 0.0, 128
    %2174 = vxpose.xlu0.b32.cont [15/16] 0.0, 128
    %2175 = vxpose.xlu0.b32.end [16/16] 0.0, 128
    %v2176 = vpop.trf.xlu0
    %v2177 = vpop.trf.xlu0
    %v2178 = vpop.trf.xlu0
    %v2179 = vpop.trf.xlu0
    %v2180 = vpop.trf.xlu0
    %v2181 = vpop.trf.xlu0
    %v2182 = vpop.trf.xlu0
    %v2183 = vpop.trf.xlu0
    %v2184 = vpop.trf.xlu0
    %v2185 = vpop.trf.xlu0
    %v2186 = vpop.trf.xlu0
    %v2187 = vpop.trf.xlu0
    %v2188 = vpop.trf.xlu0
    %v2189 = vpop.trf.xlu0
    %v2190 = vpop.trf.xlu0
    %v2191 = vpop.trf.xlu0
    %2192 = vxpose.xlu0.b32.start [1/16] %v2109, 128
    %2193 = vxpose.xlu0.b32.cont [2/16] 0.0, 128
    %2194 = vxpose.xlu0.b32.cont [3/16] 0.0, 128
    %2195 = vxpose.xlu0.b32.cont [4/16] 0.0, 128
    %2196 = vxpose.xlu0.b32.cont [5/16] 0.0, 128
    %2197 = vxpose.xlu0.b32.cont [6/16] 0.0, 128
    %2198 = vxpose.xlu0.b32.cont [7/16] 0.0, 128
    %2199 = vxpose.xlu0.b32.cont [8/16] 0.0, 128
    %2200 = vxpose.xlu0.b32.cont [9/16] 0.0, 128
    %2201 = vxpose.xlu0.b32.cont [10/16] 0.0, 128
    %2202 = vxpose.xlu0.b32.cont [11/16] 0.0, 128
    %2203 = vxpose.xlu0.b32.cont [12/16] 0.0, 128
    %2204 = vxpose.xlu0.b32.cont [13/16] 0.0, 128
    %2205 = vxpose.xlu0.b32.cont [14/16] 0.0, 128
    %2206 = vxpose.xlu0.b32.cont [15/16] 0.0, 128
    %2207 = vxpose.xlu0.b32.end [16/16] 0.0, 128
    %v2208 = vpop.trf.xlu0
    %v2209 = vpop.trf.xlu0
    %v2210 = vpop.trf.xlu0
    %v2211 = vpop.trf.xlu0
    %v2212 = vpop.trf.xlu0
    %v2213 = vpop.trf.xlu0
    %v2214 = vpop.trf.xlu0
    %v2215 = vpop.trf.xlu0
    %v2216 = vpop.trf.xlu0
    %v2217 = vpop.trf.xlu0
    %v2218 = vpop.trf.xlu0
    %v2219 = vpop.trf.xlu0
    %v2220 = vpop.trf.xlu0
    %v2221 = vpop.trf.xlu0
    %v2222 = vpop.trf.xlu0
    %v2223 = vpop.trf.xlu0
    %2224 = vxpose.xlu0.b32.start [1/16] %v2133, 128
    %2225 = vxpose.xlu0.b32.cont [2/16] 0.0, 128
    %2226 = vxpose.xlu0.b32.cont [3/16] 0.0, 128
    %2227 = vxpose.xlu0.b32.cont [4/16] 0.0, 128
    %2228 = vxpose.xlu0.b32.cont [5/16] 0.0, 128
    %2229 = vxpose.xlu0.b32.cont [6/16] 0.0, 128
    %2230 = vxpose.xlu0.b32.cont [7/16] 0.0, 128
    %2231 = vxpose.xlu0.b32.cont [8/16] 0.0, 128
    %2232 = vxpose.xlu0.b32.cont [9/16] 0.0, 128
    %2233 = vxpose.xlu0.b32.cont [10/16] 0.0, 128
    %2234 = vxpose.xlu0.b32.cont [11/16] 0.0, 128
    %2235 = vxpose.xlu0.b32.cont [12/16] 0.0, 128
    %2236 = vxpose.xlu0.b32.cont [13/16] 0.0, 128
    %2237 = vxpose.xlu0.b32.cont [14/16] 0.0, 128
    %2238 = vxpose.xlu0.b32.cont [15/16] 0.0, 128
    %2239 = vxpose.xlu0.b32.end [16/16] 0.0, 128
    %v2240 = vpop.trf.xlu0
    %v2241 = vpop.trf.xlu0
    %v2242 = vpop.trf.xlu0
    %v2243 = vpop.trf.xlu0
    %v2244 = vpop.trf.xlu0
    %v2245 = vpop.trf.xlu0
    %v2246 = vpop.trf.xlu0
    %v2247 = vpop.trf.xlu0
    %v2248 = vpop.trf.xlu0
    %v2249 = vpop.trf.xlu0
    %v2250 = vpop.trf.xlu0
    %v2251 = vpop.trf.xlu0
    %v2252 = vpop.trf.xlu0
    %v2253 = vpop.trf.xlu0
    %v2254 = vpop.trf.xlu0
    %v2255 = vpop.trf.xlu0
    %2256 = vxpose.xlu0.b32.start [1/16] %v2157, 128
    %2257 = vxpose.xlu0.b32.cont [2/16] 0.0, 128
    %2258 = vxpose.xlu0.b32.cont [3/16] 0.0, 128
    %2259 = vxpose.xlu0.b32.cont [4/16] 0.0, 128
    %2260 = vxpose.xlu0.b32.cont [5/16] 0.0, 128
    %2261 = vxpose.xlu0.b32.cont [6/16] 0.0, 128
    %2262 = vxpose.xlu0.b32.cont [7/16] 0.0, 128
    %2263 = vxpose.xlu0.b32.cont [8/16] 0.0, 128
    %2264 = vxpose.xlu0.b32.cont [9/16] 0.0, 128
    %2265 = vxpose.xlu0.b32.cont [10/16] 0.0, 128
    %2266 = vxpose.xlu0.b32.cont [11/16] 0.0, 128
    %2267 = vxpose.xlu0.b32.cont [12/16] 0.0, 128
    %2268 = vxpose.xlu0.b32.cont [13/16] 0.0, 128
    %2269 = vxpose.xlu0.b32.cont [14/16] 0.0, 128
    %2270 = vxpose.xlu0.b32.cont [15/16] 0.0, 128
    %2271 = vxpose.xlu0.b32.end [16/16] 0.0, 128
    %v2272 = vpop.trf.xlu0
    %v2273 = vpop.trf.xlu0
    %v2274 = vpop.trf.xlu0
    %v2275 = vpop.trf.xlu0
    %v2276 = vpop.trf.xlu0
    %v2277 = vpop.trf.xlu0
    %v2278 = vpop.trf.xlu0
    %v2279 = vpop.trf.xlu0
    %v2280 = vpop.trf.xlu0
    %v2281 = vpop.trf.xlu0
    %v2282 = vpop.trf.xlu0
    %v2283 = vpop.trf.xlu0
    %v2284 = vpop.trf.xlu0
    %v2285 = vpop.trf.xlu0
    %v2286 = vpop.trf.xlu0
    %v2287 = vpop.trf.xlu0
    %v2288 = vrot.slane %v2240, 4
    %v2289 = vsel %vm176, %v2288, %v2176
    %v2290 = vrot.slane %v2176, 4
    %v2291 = vsel %vm176, %v2240, %v2290
    %v2293 = vunpack.c.l.s4 1983009808
    %v2294 = vunpack.c.0.s8 %v2293
    %v2295 = vperm.slane %v2289, %v2294
    %v2297 = vunpack.c.l.s4 1983009808
    %v2298 = vunpack.c.0.s8 %v2297
    %v2299 = vperm.slane %v2291, %v2298
    %v2300 = vrot.slane %v2272, 4
    %v2301 = vsel %vm176, %v2300, %v2208
    %v2302 = vrot.slane %v2208, 4
    %v2303 = vsel %vm176, %v2272, %v2302
    %v2305 = vunpack.c.l.s4 1983009808
    %v2306 = vunpack.c.0.s8 %v2305
    %v2307 = vperm.slane %v2301, %v2306
    %v2309 = vunpack.c.l.s4 1983009808
    %v2310 = vunpack.c.0.s8 %v2309
    %v2311 = vperm.slane %v2303, %v2310
    %v2312 = vrot.slane %v2307, 4
    %v2313 = vsel %vm176, %v2312, %v2295
    %v2314 = vrot.slane %v2295, 4
    %v2315 = vsel %vm176, %v2307, %v2314
    %v2317 = vunpack.c.l.s4 1934713408
    %v2318 = vunpack.c.0.s8 %v2317
    %v2319 = vperm.slane %v2313, %v2318
    %v2321 = vunpack.c.l.s4 1934713408
    %v2322 = vunpack.c.0.s8 %v2321
    %v2323 = vperm.slane %v2315, %v2322
    %v2324 = vrot.slane %v2311, 4
    %v2325 = vsel %vm176, %v2324, %v2299
    %v2326 = vrot.slane %v2299, 4
    %v2327 = vsel %vm176, %v2311, %v2326
    %v2329 = vunpack.c.l.s4 1934713408
    %v2330 = vunpack.c.0.s8 %v2329
    %v2331 = vperm.slane %v2325, %v2330
    %v2333 = vunpack.c.l.s4 1934713408
    %v2334 = vunpack.c.0.s8 %v2333
    %v2335 = vperm.slane %v2327, %v2334
    %v2336 = vrot.slane %v2319, 4
    %v2337 = vsel %vm176, 0.0, %v2336
    %v2338 = vrot.slane %v2323, 4
    %v2339 = vsel %vm176, 0.0, %v2338
    %v2340 = vrot.slane %v2331, 4
    %v2341 = vsel %vm176, 0.0, %v2340
    %v2342 = vrot.slane %v2335, 4
    %v2343 = vsel %vm176, 0.0, %v2342
    %v2344 = vrot.slane %v2241, 4
    %v2345 = vsel %vm176, %v2344, %v2177
    %v2346 = vrot.slane %v2177, 4
    %v2347 = vsel %vm176, %v2241, %v2346
    %v2349 = vunpack.c.l.s4 1983009808
    %v2350 = vunpack.c.0.s8 %v2349
    %v2351 = vperm.slane %v2345, %v2350
    %v2353 = vunpack.c.l.s4 1983009808
    %v2354 = vunpack.c.0.s8 %v2353
    %v2355 = vperm.slane %v2347, %v2354
    %v2356 = vrot.slane %v2273, 4
    %v2357 = vsel %vm176, %v2356, %v2209
    %v2358 = vrot.slane %v2209, 4
    %v2359 = vsel %vm176, %v2273, %v2358
    %v2361 = vunpack.c.l.s4 1983009808
    %v2362 = vunpack.c.0.s8 %v2361
    %v2363 = vperm.slane %v2357, %v2362
    %v2365 = vunpack.c.l.s4 1983009808
    %v2366 = vunpack.c.0.s8 %v2365
    %v2367 = vperm.slane %v2359, %v2366
    %v2368 = vrot.slane %v2363, 4
    %v2369 = vsel %vm176, %v2368, %v2351
    %v2370 = vrot.slane %v2351, 4
    %v2371 = vsel %vm176, %v2363, %v2370
    %v2373 = vunpack.c.l.s4 1934713408
    %v2374 = vunpack.c.0.s8 %v2373
    %v2375 = vperm.slane %v2369, %v2374
    %v2377 = vunpack.c.l.s4 1934713408
    %v2378 = vunpack.c.0.s8 %v2377
    %v2379 = vperm.slane %v2371, %v2378
    %v2380 = vrot.slane %v2367, 4
    %v2381 = vsel %vm176, %v2380, %v2355
    %v2382 = vrot.slane %v2355, 4
    %v2383 = vsel %vm176, %v2367, %v2382
    %v2385 = vunpack.c.l.s4 1934713408
    %v2386 = vunpack.c.0.s8 %v2385
    %v2387 = vperm.slane %v2381, %v2386
    %v2389 = vunpack.c.l.s4 1934713408
    %v2390 = vunpack.c.0.s8 %v2389
    %v2391 = vperm.slane %v2383, %v2390
    %v2392 = vrot.slane %v2375, 4
    %v2393 = vsel %vm176, 0.0, %v2392
    %v2394 = vrot.slane %v2379, 4
    %v2395 = vsel %vm176, 0.0, %v2394
    %v2396 = vrot.slane %v2387, 4
    %v2397 = vsel %vm176, 0.0, %v2396
    %v2398 = vrot.slane %v2391, 4
    %v2399 = vsel %vm176, 0.0, %v2398
    %v2400 = vsel %vm176, %v2338, %v2319
    %v2402 = vunpack.c.l.s4 1983009808
    %v2403 = vunpack.c.0.s8 %v2402
    %v2404 = vperm.slane %v2400, %v2403
    %v2405 = vrot.slane %v2339, 4
    %v2406 = vsel %vm176, %v2405, %v2337
    %v2408 = vunpack.c.l.s4 1983009808
    %v2409 = vunpack.c.0.s8 %v2408
    %v2410 = vperm.slane %v2406, %v2409
    %v2411 = vsel %vm176, %v2342, %v2331
    %v2413 = vunpack.c.l.s4 1983009808
    %v2414 = vunpack.c.0.s8 %v2413
    %v2415 = vperm.slane %v2411, %v2414
    %v2416 = vrot.slane %v2343, 4
    %v2417 = vsel %vm176, %v2416, %v2341
    %v2419 = vunpack.c.l.s4 1983009808
    %v2420 = vunpack.c.0.s8 %v2419
    %v2421 = vperm.slane %v2417, %v2420
    %v2422 = vrot.slane %v2410, 4
    %v2423 = vsel %vm176, %v2422, %v2404
    %v2424 = vrot.slane %v2404, 4
    %v2425 = vsel %vm176, %v2410, %v2424
    %v2427 = vunpack.c.l.s4 1934713408
    %v2428 = vunpack.c.0.s8 %v2427
    %v2429 = vperm.slane %v2423, %v2428
    %v2431 = vunpack.c.l.s4 1934713408
    %v2432 = vunpack.c.0.s8 %v2431
    %v2433 = vperm.slane %v2425, %v2432
    %v2434 = vrot.slane %v2421, 4
    %v2435 = vsel %vm176, %v2434, %v2415
    %v2436 = vrot.slane %v2415, 4
    %v2437 = vsel %vm176, %v2421, %v2436
    %v2439 = vunpack.c.l.s4 1934713408
    %v2440 = vunpack.c.0.s8 %v2439
    %v2441 = vperm.slane %v2435, %v2440
    %v2443 = vunpack.c.l.s4 1934713408
    %v2444 = vunpack.c.0.s8 %v2443
    %v2445 = vperm.slane %v2437, %v2444
    %v2446 = vrot.slane %v2441, 4
    %v2447 = vsel %vm176, %v2446, %v2429
    %v2448 = vrot.slane %v2429, 4
    %v2449 = vsel %vm176, %v2441, %v2448
    %v2450 = vrot.slane %v2445, 4
    %v2451 = vsel %vm176, %v2450, %v2433
    %v2452 = vrot.slane %v2433, 4
    %v2453 = vsel %vm176, %v2445, %v2452
    %v2454 = vsel %vm176, %v2394, %v2375
    %v2456 = vunpack.c.l.s4 1983009808
    %v2457 = vunpack.c.0.s8 %v2456
    %v2458 = vperm.slane %v2454, %v2457
    %v2459 = vrot.slane %v2395, 4
    %v2460 = vsel %vm176, %v2459, %v2393
    %v2462 = vunpack.c.l.s4 1983009808
    %v2463 = vunpack.c.0.s8 %v2462
    %v2464 = vperm.slane %v2460, %v2463
    %v2465 = vsel %vm176, %v2398, %v2387
    %v2467 = vunpack.c.l.s4 1983009808
    %v2468 = vunpack.c.0.s8 %v2467
    %v2469 = vperm.slane %v2465, %v2468
    %v2470 = vrot.slane %v2399, 4
    %v2471 = vsel %vm176, %v2470, %v2397
    %v2473 = vunpack.c.l.s4 1983009808
    %v2474 = vunpack.c.0.s8 %v2473
    %v2475 = vperm.slane %v2471, %v2474
    %v2476 = vrot.slane %v2464, 4
    %v2477 = vsel %vm176, %v2476, %v2458
    %v2478 = vrot.slane %v2458, 4
    %v2479 = vsel %vm176, %v2464, %v2478
    %v2481 = vunpack.c.l.s4 1934713408
    %v2482 = vunpack.c.0.s8 %v2481
    %v2483 = vperm.slane %v2477, %v2482
    %v2485 = vunpack.c.l.s4 1934713408
    %v2486 = vunpack.c.0.s8 %v2485
    %v2487 = vperm.slane %v2479, %v2486
    %v2488 = vrot.slane %v2475, 4
    %v2489 = vsel %vm176, %v2488, %v2469
    %v2490 = vrot.slane %v2469, 4
    %v2491 = vsel %vm176, %v2475, %v2490
    %v2493 = vunpack.c.l.s4 1934713408
    %v2494 = vunpack.c.0.s8 %v2493
    %v2495 = vperm.slane %v2489, %v2494
    %v2497 = vunpack.c.l.s4 1934713408
    %v2498 = vunpack.c.0.s8 %v2497
    %v2499 = vperm.slane %v2491, %v2498
    %v2500 = vrot.slane %v2495, 4
    %v2501 = vsel %vm176, %v2500, %v2483
    %v2502 = vrot.slane %v2483, 4
    %v2503 = vsel %vm176, %v2495, %v2502
    %v2504 = vrot.slane %v2499, 4
    %v2505 = vsel %vm176, %v2504, %v2487
    %v2506 = vrot.slane %v2487, 4
    %v2507 = vsel %vm176, %v2499, %v2506
    %2510 = vrot.lane.b32.xlu0 %v2449, 8
    %v2511 = vpop.permute.xlu0 %2510
    %2512 = vrot.lane.b32.xlu0 %v2503, 8
    %v2513 = vpop.permute.xlu0 %2512
    %2518 = vrot.lane.b32.xlu0 %v2451, 16
    %v2519 = vpop.permute.xlu0 %2518
    %2520 = vrot.lane.b32.xlu0 %v2505, 16
    %v2521 = vpop.permute.xlu0 %2520
    %2526 = vrot.lane.b32.xlu0 %v2453, 24
    %v2527 = vpop.permute.xlu0 %2526
    %2528 = vrot.lane.b32.xlu0 %v2507, 24
    %v2529 = vpop.permute.xlu0 %2528
    %v2532 = vsel %vm1296, %v2447, %v2511
    %v2533 = vsel %vm1296, %v2501, %v2513
    %v2534 = vsel %vm1387, %v2532, %v2519
    %v2535 = vsel %vm1387, %v2533, %v2521
    %vm2536 = vcmask 195584
    %v2537 = vsel %vm2536, %v2534, %v2527
    %v2538 = vsel %vm2536, %v2535, %v2529
    %v2539 = vpack.c.bf16 %v2538, %v2537
    %v2540 = vperm.slane %v75, 1
    %v2545 = vunpack.c.l.b16 %v59
    %v2546 = vunpack.c.l.b16 %v60
    %v2547 = vunpack.c.l.b16 %v61
    %v2548 = vunpack.c.l.b16 %v62
    %v2549 = vpack.c.b16 %v2546, %v2545
    %v2550 = vpack.c.b16 %v2548, %v2547
    %v2554 = vsel %vm137, %v2539, 0
    %2556 = vmatpush.bf16.msra.mxu0 0
    %2557 = vmatpush.bf16.msra.mxu0 0
    %2558 = vmatpush.bf16.msra.mxu0 0
    %2559 = vmatpush.bf16.msra.mxu0 0
    %2560 = vmatpush.bf16.msra.mxu0 0
    %2561 = vmatpush.bf16.msra.mxu0 0
    %2562 = vmatpush.bf16.msra.mxu0 %v2550
    %2563 = vmatpush.bf16.msra.mxu0 %v2549
    %2564 = vmatmul.bf16.gmra.mxu0 %v2554
    %v2565 = vpop.f32.mrf.mxu0
    %v2566 = vadd.f32 %v2540, %v2565
    %v2567 = vpop.f32.mrf.mxu0
    %v2568 = vadd.f32 %v2540, %v2567
    %2569 = vdwg.mxu0
    %v2570 = vadd.f32 %v121, %v2566
    %v2571 = vadd.f32 %v122, %v2568
    %v2572 = vsel %vm137, %v2570, 0.0
    %2573 = vadd.xlane.f32.xlu0 %v2572
    %v2574 = vpop.xlane.xlu0 %2573
    %v2575 = vsel %vm137, %v2571, 0.0
    %2576 = vadd.xlane.f32.xlu0 %v2575
    %v2577 = vpop.xlane.xlu0 %2576
    %v2578 = vrcp.pop 32.0
    %v2579 = vmul.f32 32.0, %v2578
    %v2580 = vsub.f32 1.0, %v2579
    %v2581 = vmul.f32 %v2578, %v2580
    %v2582 = vadd.f32 %v2578, %v2581
    %vm2583 = vweird.f32 %v2578
    %v2584 = vsel %vm2583, %v2578, %v2582
    %v2585 = vmul.f32 %v2574, %v2584
    %v2586 = vmul.f32 %v2577, %v2584
    %v2587 = vsub.f32 %v2570, %v2585
    %v2588 = vsub.f32 %v2571, %v2586
    %v2589 = vmul.f32 %v2587, %v2587
    %v2590 = vmul.f32 %v2588, %v2588
    %v2591 = vsel %vm137, %v2589, 0.0
    %2592 = vadd.xlane.f32.xlu0 %v2591
    %v2593 = vpop.xlane.xlu0 %2592
    %v2594 = vsel %vm137, %v2590, 0.0
    %2595 = vadd.xlane.f32.xlu0 %v2594
    %v2596 = vpop.xlane.xlu0 %2595
    %v2597 = vmul.f32 %v2593, %v2584
    %v2598 = vmul.f32 %v2596, %v2584
    %v2599 = vadd.f32 %v2597, 1e-05
    %v2600 = vadd.f32 %v2598, 1e-05
    %v2601 = vrsqrt.pop %v2599
    %v2602 = vmul.f32 %v2601, %v2599
    %v2603 = vmul.f32 %v2602, %v2601
    %v2604 = vmul.f32 0.5, %v2603
    %v2605 = vsub.f32 1.5, %v2604
    %v2606 = vmul.f32 %v2601, %v2605
    %vm2607 = vweird.f32 %v2599
    %vm2608 = vweird.f32 %v2601
    %vm2609 = vmor %vm2607, %vm2608
    %v2610 = vsel %vm2609, %v2601, %v2606
    %v2611 = vrsqrt.pop %v2600
    %v2612 = vmul.f32 %v2611, %v2600
    %v2613 = vmul.f32 %v2612, %v2611
    %v2614 = vmul.f32 0.5, %v2613
    %v2615 = vsub.f32 1.5, %v2614
    %v2616 = vmul.f32 %v2611, %v2615
    %vm2617 = vweird.f32 %v2600
    %vm2618 = vweird.f32 %v2611
    %vm2619 = vmor %vm2617, %vm2618
    %v2620 = vsel %vm2619, %v2611, %v2616
    %v2621 = vmul.f32 %v2587, %v2610
    %v2622 = vmul.f32 %v2588, %v2620
    %v2623 = vperm.slane %v75, 4
    %v2624 = vmul.f32 %v2621, %v2623
    %v2625 = vmul.f32 %v2622, %v2623
    %v2626 = vperm.slane %v75, 5
    %v2627 = vadd.f32 %v2624, %v2626
    %v2628 = vadd.f32 %v2625, %v2626
    %v2629 = vpack.c.bf16 %v2628, %v2627
    %v2630 = vperm.slane %v75, 2
    %v2635 = vunpack.c.l.b16 %v63
    %v2636 = vunpack.c.l.b16 %v64
    %v2637 = vunpack.c.l.b16 %v65
    %v2638 = vunpack.c.l.b16 %v66
    %v2639 = vpack.c.b16 %v2636, %v2635
    %v2640 = vpack.c.b16 %v2638, %v2637
    %v2644 = vsel %vm137, %v2629, 0
    %2646 = vmatpush.bf16.msra.mxu0 0
    %2647 = vmatpush.bf16.msra.mxu0 0
    %2648 = vmatpush.bf16.msra.mxu0 0
    %2649 = vmatpush.bf16.msra.mxu0 0
    %2650 = vmatpush.bf16.msra.mxu0 0
    %2651 = vmatpush.bf16.msra.mxu0 0
    %2652 = vmatpush.bf16.msra.mxu0 %v2640
    %2653 = vmatpush.bf16.msra.mxu0 %v2639
    %2654 = vmatmul.bf16.gmra.mxu0 %v2644
    %v2655 = vpop.f32.mrf.mxu0
    %v2656 = vadd.f32 %v2630, %v2655
    %v2657 = vpop.f32.mrf.mxu0
    %v2658 = vadd.f32 %v2630, %v2657
    %2659 = vdwg.mxu0
    %v2660 = vmax.f32 %v2656, 0.0
    %v2661 = vmax.f32 %v2658, 0.0
    %v2662 = vpack.c.bf16 %v2661, %v2660
    %v2663 = vperm.slane %v75, 3
    %v2672 = vunpack.c.l.b16 %v67
    %v2673 = vunpack.c.l.b16 %v68
    %v2674 = vunpack.c.l.b16 %v69
    %v2675 = vunpack.c.l.b16 %v70
    %v2676 = vunpack.c.l.b16 %v71
    %v2677 = vunpack.c.l.b16 %v72
    %v2678 = vunpack.c.l.b16 %v73
    %v2679 = vunpack.c.l.b16 %v74
    %v2680 = vpack.c.b16 %v2673, %v2672
    %v2681 = vpack.c.b16 %v2675, %v2674
    %v2682 = vpack.c.b16 %v2677, %v2676
    %v2683 = vpack.c.b16 %v2679, %v2678
    %vm2688 = vcmask 523264
    %v2690 = vsel %vm2688, %v2662, 0
    %2692 = vmatpush.bf16.msra.mxu0 0
    %2693 = vmatpush.bf16.msra.mxu0 0
    %2694 = vmatpush.bf16.msra.mxu0 0
    %2695 = vmatpush.bf16.msra.mxu0 0
    %2696 = vmatpush.bf16.msra.mxu0 %v2683
    %2697 = vmatpush.bf16.msra.mxu0 %v2682
    %2698 = vmatpush.bf16.msra.mxu0 %v2681
    %2699 = vmatpush.bf16.msra.mxu0 %v2680
    %2700 = vmatmul.bf16.gmra.mxu0 %v2690
    %v2701 = vpop.f32.mrf.mxu0
    %v2702 = vadd.f32 %v2663, %v2701
    %v2703 = vpop.f32.mrf.mxu0
    %v2704 = vadd.f32 %v2663, %v2703
    %2705 = vdwg.mxu0
    %v2706 = vadd.f32 %v2627, %v2702
    %v2707 = vadd.f32 %v2628, %v2704
    %v2708 = vsel %vm137, %v2706, 0.0
    %2709 = vadd.xlane.f32.xlu0 %v2708
    %v2710 = vpop.xlane.xlu0 %2709
    %v2711 = vsel %vm137, %v2707, 0.0
    %2712 = vadd.xlane.f32.xlu0 %v2711
    %v2713 = vpop.xlane.xlu0 %2712
    %v2714 = vmul.f32 %v2710, %v2584
    %v2715 = vmul.f32 %v2713, %v2584
    %v2716 = vsub.f32 %v2706, %v2714
    %v2717 = vsub.f32 %v2707, %v2715
    %v2718 = vmul.f32 %v2716, %v2716
    %v2719 = vmul.f32 %v2717, %v2717
    %v2720 = vsel %vm137, %v2718, 0.0
    %2721 = vadd.xlane.f32.xlu0 %v2720
    %v2722 = vpop.xlane.xlu0 %2721
    %v2723 = vsel %vm137, %v2719, 0.0
    %2724 = vadd.xlane.f32.xlu0 %v2723
    %v2725 = vpop.xlane.xlu0 %2724
    %v2726 = vmul.f32 %v2722, %v2584
    %v2727 = vmul.f32 %v2725, %v2584
    %v2728 = vadd.f32 %v2726, 1e-05
    %v2729 = vadd.f32 %v2727, 1e-05
    %v2730 = vrsqrt.pop %v2728
    %v2731 = vmul.f32 %v2730, %v2728
    %v2732 = vmul.f32 %v2731, %v2730
    %v2733 = vmul.f32 0.5, %v2732
    %v2734 = vsub.f32 1.5, %v2733
    %v2735 = vmul.f32 %v2730, %v2734
    %vm2736 = vweird.f32 %v2728
    %vm2737 = vweird.f32 %v2730
    %vm2738 = vmor %vm2736, %vm2737
    %v2739 = vsel %vm2738, %v2730, %v2735
    %v2740 = vrsqrt.pop %v2729
    %v2741 = vmul.f32 %v2740, %v2729
    %v2742 = vmul.f32 %v2741, %v2740
    %v2743 = vmul.f32 0.5, %v2742
    %v2744 = vsub.f32 1.5, %v2743
    %v2745 = vmul.f32 %v2740, %v2744
    %vm2746 = vweird.f32 %v2729
    %vm2747 = vweird.f32 %v2740
    %vm2748 = vmor %vm2746, %vm2747
    %v2749 = vsel %vm2748, %v2740, %v2745
    %v2750 = vmul.f32 %v2716, %v2739
    %v2751 = vmul.f32 %v2717, %v2749
    %v2752 = vperm.slane %v75, 6
    %v2753 = vmul.f32 %v2750, %v2752
    %v2754 = vmul.f32 %v2751, %v2752
    %v2755 = vperm.slane %v75, 7
    %v2756 = vadd.f32 %v2753, %v2755
    %v2757 = vadd.f32 %v2754, %v2755
    %v2758 = vpack.c.bf16 %v2757, %v2756
    %v2760 = vsel %vm137, %v2758, 0
    %2762 = vmatpush.bf16.msra.mxu0 0
    %2763 = vmatpush.bf16.msra.mxu0 0
    %2764 = vmatpush.bf16.msra.mxu0 0
    %2765 = vmatpush.bf16.msra.mxu0 0
    %2766 = vmatpush.bf16.msra.mxu0 0
    %2767 = vmatpush.bf16.msra.mxu0 0
    %2768 = vmatpush.bf16.msra.mxu0 %v134
    %2769 = vmatpush.bf16.msra.mxu0 %v133
    %2770 = vmatmul.bf16.gmra.mxu0 %v2760
    %v2771 = vpop.f32.mrf.mxu0
    %v2772 = vadd.f32 %v124, %v2771
    %v2773 = vpop.f32.mrf.mxu0
    %v2774 = vadd.f32 %v124, %v2773
    %2775 = vdwg.mxu0
    %2778 = vrot.lane.b32.xlu0 %v2772, 120
    %v2779 = vpop.permute.xlu0 %2778
    %2780 = vrot.lane.b32.xlu0 %v2774, 120
    %v2781 = vpop.permute.xlu0 %2780
    %2784 = vrot.lane.b32.xlu0 %v2772, 112
    %v2785 = vpop.permute.xlu0 %2784
    %2786 = vrot.lane.b32.xlu0 %v2774, 112
    %v2787 = vpop.permute.xlu0 %2786
    %2790 = vrot.lane.b32.xlu0 %v2772, 104
    %v2791 = vpop.permute.xlu0 %2790
    %2792 = vrot.lane.b32.xlu0 %v2774, 104
    %v2793 = vpop.permute.xlu0 %2792
    %v2796 = vrot.slane %v2785, 4
    %v2797 = vsel %vm176, %v2796, %v2772
    %v2798 = vrot.slane %v2772, 4
    %v2799 = vsel %vm176, %v2785, %v2798
    %v2801 = vunpack.c.l.s4 1983009808
    %v2802 = vunpack.c.0.s8 %v2801
    %v2803 = vperm.slane %v2797, %v2802
    %v2805 = vunpack.c.l.s4 1983009808
    %v2806 = vunpack.c.0.s8 %v2805
    %v2807 = vperm.slane %v2799, %v2806
    %v2808 = vrot.slane %v2791, 4
    %v2809 = vsel %vm176, %v2808, %v2779
    %v2810 = vrot.slane %v2779, 4
    %v2811 = vsel %vm176, %v2791, %v2810
    %v2813 = vunpack.c.l.s4 1983009808
    %v2814 = vunpack.c.0.s8 %v2813
    %v2815 = vperm.slane %v2809, %v2814
    %v2817 = vunpack.c.l.s4 1983009808
    %v2818 = vunpack.c.0.s8 %v2817
    %v2819 = vperm.slane %v2811, %v2818
    %v2820 = vrot.slane %v2815, 4
    %v2821 = vsel %vm176, %v2820, %v2803
    %v2822 = vrot.slane %v2803, 4
    %v2823 = vsel %vm176, %v2815, %v2822
    %v2825 = vunpack.c.l.s4 1934713408
    %v2826 = vunpack.c.0.s8 %v2825
    %v2827 = vperm.slane %v2821, %v2826
    %v2829 = vunpack.c.l.s4 1934713408
    %v2830 = vunpack.c.0.s8 %v2829
    %v2831 = vperm.slane %v2823, %v2830
    %v2832 = vrot.slane %v2819, 4
    %v2833 = vsel %vm176, %v2832, %v2807
    %v2834 = vrot.slane %v2807, 4
    %v2835 = vsel %vm176, %v2819, %v2834
    %v2837 = vunpack.c.l.s4 1934713408
    %v2838 = vunpack.c.0.s8 %v2837
    %v2839 = vperm.slane %v2833, %v2838
    %v2841 = vunpack.c.l.s4 1934713408
    %v2842 = vunpack.c.0.s8 %v2841
    %v2843 = vperm.slane %v2835, %v2842
    %v2844 = vrot.slane %v2827, 4
    %v2845 = vsel %vm176, 0.0, %v2844
    %v2846 = vrot.slane %v2831, 4
    %v2847 = vsel %vm176, 0.0, %v2846
    %v2848 = vrot.slane %v2839, 4
    %v2849 = vsel %vm176, 0.0, %v2848
    %v2850 = vrot.slane %v2843, 4
    %v2851 = vsel %vm176, 0.0, %v2850
    %v2852 = vrot.slane %v2787, 4
    %v2853 = vsel %vm176, %v2852, %v2774
    %v2854 = vrot.slane %v2774, 4
    %v2855 = vsel %vm176, %v2787, %v2854
    %v2857 = vunpack.c.l.s4 1983009808
    %v2858 = vunpack.c.0.s8 %v2857
    %v2859 = vperm.slane %v2853, %v2858
    %v2861 = vunpack.c.l.s4 1983009808
    %v2862 = vunpack.c.0.s8 %v2861
    %v2863 = vperm.slane %v2855, %v2862
    %v2864 = vrot.slane %v2793, 4
    %v2865 = vsel %vm176, %v2864, %v2781
    %v2866 = vrot.slane %v2781, 4
    %v2867 = vsel %vm176, %v2793, %v2866
    %v2869 = vunpack.c.l.s4 1983009808
    %v2870 = vunpack.c.0.s8 %v2869
    %v2871 = vperm.slane %v2865, %v2870
    %v2873 = vunpack.c.l.s4 1983009808
    %v2874 = vunpack.c.0.s8 %v2873
    %v2875 = vperm.slane %v2867, %v2874
    %v2876 = vrot.slane %v2871, 4
    %v2877 = vsel %vm176, %v2876, %v2859
    %v2878 = vrot.slane %v2859, 4
    %v2879 = vsel %vm176, %v2871, %v2878
    %v2881 = vunpack.c.l.s4 1934713408
    %v2882 = vunpack.c.0.s8 %v2881
    %v2883 = vperm.slane %v2877, %v2882
    %v2885 = vunpack.c.l.s4 1934713408
    %v2886 = vunpack.c.0.s8 %v2885
    %v2887 = vperm.slane %v2879, %v2886
    %v2888 = vrot.slane %v2875, 4
    %v2889 = vsel %vm176, %v2888, %v2863
    %v2890 = vrot.slane %v2863, 4
    %v2891 = vsel %vm176, %v2875, %v2890
    %v2893 = vunpack.c.l.s4 1934713408
    %v2894 = vunpack.c.0.s8 %v2893
    %v2895 = vperm.slane %v2889, %v2894
    %v2897 = vunpack.c.l.s4 1934713408
    %v2898 = vunpack.c.0.s8 %v2897
    %v2899 = vperm.slane %v2891, %v2898
    %v2900 = vrot.slane %v2883, 4
    %v2901 = vsel %vm176, 0.0, %v2900
    %v2902 = vrot.slane %v2887, 4
    %v2903 = vsel %vm176, 0.0, %v2902
    %v2904 = vrot.slane %v2895, 4
    %v2905 = vsel %vm176, 0.0, %v2904
    %v2906 = vrot.slane %v2899, 4
    %v2907 = vsel %vm176, 0.0, %v2906
    %v2908 = vpack.c.bf16 %v2827, %v2827
    %v2909 = vpack.c.bf16 %v2845, %v2845
    %v2910 = vpack.c.bf16 %v2831, %v2831
    %v2911 = vpack.c.bf16 %v2847, %v2847
    %v2912 = vpack.c.bf16 %v2839, %v2839
    %v2913 = vpack.c.bf16 %v2849, %v2849
    %v2914 = vpack.c.bf16 %v2843, %v2843
    %v2915 = vpack.c.bf16 %v2851, %v2851
    %v2916 = vpack.c.bf16 %v2883, %v2883
    %v2917 = vpack.c.bf16 %v2901, %v2901
    %v2918 = vpack.c.bf16 %v2887, %v2887
    %v2919 = vpack.c.bf16 %v2903, %v2903
    %v2920 = vpack.c.bf16 %v2895, %v2895
    %v2921 = vpack.c.bf16 %v2905, %v2905
    %v2922 = vpack.c.bf16 %v2899, %v2899
    %v2923 = vpack.c.bf16 %v2907, %v2907
    %2924 = vrot.lane.b32.xlu0 %v2772, 96
    %v2925 = vpop.permute.xlu0 %2924
    %2926 = vrot.lane.b32.xlu0 %v2774, 96
    %v2927 = vpop.permute.xlu0 %2926
    %2928 = vrot.lane.b32.xlu0 %v2779, 96
    %v2929 = vpop.permute.xlu0 %2928
    %2930 = vrot.lane.b32.xlu0 %v2781, 96
    %v2931 = vpop.permute.xlu0 %2930
    %2932 = vrot.lane.b32.xlu0 %v2785, 96
    %v2933 = vpop.permute.xlu0 %2932
    %2934 = vrot.lane.b32.xlu0 %v2787, 96
    %v2935 = vpop.permute.xlu0 %2934
    %2936 = vrot.lane.b32.xlu0 %v2791, 96
    %v2937 = vpop.permute.xlu0 %2936
    %2938 = vrot.lane.b32.xlu0 %v2793, 96
    %v2939 = vpop.permute.xlu0 %2938
    %v2948 = vrot.slane %v2933, 4
    %v2949 = vsel %vm176, %v2948, %v2925
    %v2950 = vrot.slane %v2925, 4
    %v2951 = vsel %vm176, %v2933, %v2950
    %v2953 = vunpack.c.l.s4 1983009808
    %v2954 = vunpack.c.0.s8 %v2953
    %v2955 = vperm.slane %v2949, %v2954
    %v2957 = vunpack.c.l.s4 1983009808
    %v2958 = vunpack.c.0.s8 %v2957
    %v2959 = vperm.slane %v2951, %v2958
    %v2960 = vrot.slane %v2937, 4
    %v2961 = vsel %vm176, %v2960, %v2929
    %v2962 = vrot.slane %v2929, 4
    %v2963 = vsel %vm176, %v2937, %v2962
    %v2965 = vunpack.c.l.s4 1983009808
    %v2966 = vunpack.c.0.s8 %v2965
    %v2967 = vperm.slane %v2961, %v2966
    %v2969 = vunpack.c.l.s4 1983009808
    %v2970 = vunpack.c.0.s8 %v2969
    %v2971 = vperm.slane %v2963, %v2970
    %v2972 = vrot.slane %v2967, 4
    %v2973 = vsel %vm176, %v2972, %v2955
    %v2974 = vrot.slane %v2955, 4
    %v2975 = vsel %vm176, %v2967, %v2974
    %v2977 = vunpack.c.l.s4 1934713408
    %v2978 = vunpack.c.0.s8 %v2977
    %v2979 = vperm.slane %v2973, %v2978
    %v2981 = vunpack.c.l.s4 1934713408
    %v2982 = vunpack.c.0.s8 %v2981
    %v2983 = vperm.slane %v2975, %v2982
    %v2984 = vrot.slane %v2971, 4
    %v2985 = vsel %vm176, %v2984, %v2959
    %v2986 = vrot.slane %v2959, 4
    %v2987 = vsel %vm176, %v2971, %v2986
    %v2989 = vunpack.c.l.s4 1934713408
    %v2990 = vunpack.c.0.s8 %v2989
    %v2991 = vperm.slane %v2985, %v2990
    %v2993 = vunpack.c.l.s4 1934713408
    %v2994 = vunpack.c.0.s8 %v2993
    %v2995 = vperm.slane %v2987, %v2994
    %v2996 = vrot.slane %v2979, 4
    %v2997 = vsel %vm176, 0.0, %v2996
    %v2998 = vrot.slane %v2983, 4
    %v2999 = vsel %vm176, 0.0, %v2998
    %v3000 = vrot.slane %v2991, 4
    %v3001 = vsel %vm176, 0.0, %v3000
    %v3002 = vrot.slane %v2995, 4
    %v3003 = vsel %vm176, 0.0, %v3002
    %v3004 = vrot.slane %v2935, 4
    %v3005 = vsel %vm176, %v3004, %v2927
    %v3006 = vrot.slane %v2927, 4
    %v3007 = vsel %vm176, %v2935, %v3006
    %v3009 = vunpack.c.l.s4 1983009808
    %v3010 = vunpack.c.0.s8 %v3009
    %v3011 = vperm.slane %v3005, %v3010
    %v3013 = vunpack.c.l.s4 1983009808
    %v3014 = vunpack.c.0.s8 %v3013
    %v3015 = vperm.slane %v3007, %v3014
    %v3016 = vrot.slane %v2939, 4
    %v3017 = vsel %vm176, %v3016, %v2931
    %v3018 = vrot.slane %v2931, 4
    %v3019 = vsel %vm176, %v2939, %v3018
    %v3021 = vunpack.c.l.s4 1983009808
    %v3022 = vunpack.c.0.s8 %v3021
    %v3023 = vperm.slane %v3017, %v3022
    %v3025 = vunpack.c.l.s4 1983009808
    %v3026 = vunpack.c.0.s8 %v3025
    %v3027 = vperm.slane %v3019, %v3026
    %v3028 = vrot.slane %v3023, 4
    %v3029 = vsel %vm176, %v3028, %v3011
    %v3030 = vrot.slane %v3011, 4
    %v3031 = vsel %vm176, %v3023, %v3030
    %v3033 = vunpack.c.l.s4 1934713408
    %v3034 = vunpack.c.0.s8 %v3033
    %v3035 = vperm.slane %v3029, %v3034
    %v3037 = vunpack.c.l.s4 1934713408
    %v3038 = vunpack.c.0.s8 %v3037
    %v3039 = vperm.slane %v3031, %v3038
    %v3040 = vrot.slane %v3027, 4
    %v3041 = vsel %vm176, %v3040, %v3015
    %v3042 = vrot.slane %v3015, 4
    %v3043 = vsel %vm176, %v3027, %v3042
    %v3045 = vunpack.c.l.s4 1934713408
    %v3046 = vunpack.c.0.s8 %v3045
    %v3047 = vperm.slane %v3041, %v3046
    %v3049 = vunpack.c.l.s4 1934713408
    %v3050 = vunpack.c.0.s8 %v3049
    %v3051 = vperm.slane %v3043, %v3050
    %v3052 = vrot.slane %v3035, 4
    %v3053 = vsel %vm176, 0.0, %v3052
    %v3054 = vrot.slane %v3039, 4
    %v3055 = vsel %vm176, 0.0, %v3054
    %v3056 = vrot.slane %v3047, 4
    %v3057 = vsel %vm176, 0.0, %v3056
    %v3058 = vrot.slane %v3051, 4
    %v3059 = vsel %vm176, 0.0, %v3058
    %v3060 = vpack.c.bf16 %v2979, %v2979
    %v3061 = vpack.c.bf16 %v2997, %v2997
    %v3062 = vpack.c.bf16 %v2983, %v2983
    %v3063 = vpack.c.bf16 %v2999, %v2999
    %v3064 = vpack.c.bf16 %v2991, %v2991
    %v3065 = vpack.c.bf16 %v3001, %v3001
    %v3066 = vpack.c.bf16 %v2995, %v2995
    %v3067 = vpack.c.bf16 %v3003, %v3003
    %v3068 = vpack.c.bf16 %v3035, %v3035
    %v3069 = vpack.c.bf16 %v3053, %v3053
    %v3070 = vpack.c.bf16 %v3039, %v3039
    %v3071 = vpack.c.bf16 %v3055, %v3055
    %v3072 = vpack.c.bf16 %v3047, %v3047
    %v3073 = vpack.c.bf16 %v3057, %v3057
    %v3074 = vpack.c.bf16 %v3051, %v3051
    %v3075 = vpack.c.bf16 %v3059, %v3059
    %3076 = vrot.lane.b32.xlu0 %v2772, 64
    %v3077 = vpop.permute.xlu0 %3076
    %3078 = vrot.lane.b32.xlu0 %v2774, 64
    %v3079 = vpop.permute.xlu0 %3078
    %3080 = vrot.lane.b32.xlu0 %v2779, 64
    %v3081 = vpop.permute.xlu0 %3080
    %3082 = vrot.lane.b32.xlu0 %v2781, 64
    %v3083 = vpop.permute.xlu0 %3082
    %3084 = vrot.lane.b32.xlu0 %v2785, 64
    %v3085 = vpop.permute.xlu0 %3084
    %3086 = vrot.lane.b32.xlu0 %v2787, 64
    %v3087 = vpop.permute.xlu0 %3086
    %3088 = vrot.lane.b32.xlu0 %v2791, 64
    %v3089 = vpop.permute.xlu0 %3088
    %3090 = vrot.lane.b32.xlu0 %v2793, 64
    %v3091 = vpop.permute.xlu0 %3090
    %v3100 = vrot.slane %v3085, 4
    %v3101 = vsel %vm176, %v3100, %v3077
    %v3102 = vrot.slane %v3077, 4
    %v3103 = vsel %vm176, %v3085, %v3102
    %v3105 = vunpack.c.l.s4 1983009808
    %v3106 = vunpack.c.0.s8 %v3105
    %v3107 = vperm.slane %v3101, %v3106
    %v3109 = vunpack.c.l.s4 1983009808
    %v3110 = vunpack.c.0.s8 %v3109
    %v3111 = vperm.slane %v3103, %v3110
    %v3112 = vrot.slane %v3089, 4
    %v3113 = vsel %vm176, %v3112, %v3081
    %v3114 = vrot.slane %v3081, 4
    %v3115 = vsel %vm176, %v3089, %v3114
    %v3117 = vunpack.c.l.s4 1983009808
    %v3118 = vunpack.c.0.s8 %v3117
    %v3119 = vperm.slane %v3113, %v3118
    %v3121 = vunpack.c.l.s4 1983009808
    %v3122 = vunpack.c.0.s8 %v3121
    %v3123 = vperm.slane %v3115, %v3122
    %v3124 = vrot.slane %v3119, 4
    %v3125 = vsel %vm176, %v3124, %v3107
    %v3126 = vrot.slane %v3107, 4
    %v3127 = vsel %vm176, %v3119, %v3126
    %v3129 = vunpack.c.l.s4 1934713408
    %v3130 = vunpack.c.0.s8 %v3129
    %v3131 = vperm.slane %v3125, %v3130
    %v3133 = vunpack.c.l.s4 1934713408
    %v3134 = vunpack.c.0.s8 %v3133
    %v3135 = vperm.slane %v3127, %v3134
    %v3136 = vrot.slane %v3123, 4
    %v3137 = vsel %vm176, %v3136, %v3111
    %v3138 = vrot.slane %v3111, 4
    %v3139 = vsel %vm176, %v3123, %v3138
    %v3141 = vunpack.c.l.s4 1934713408
    %v3142 = vunpack.c.0.s8 %v3141
    %v3143 = vperm.slane %v3137, %v3142
    %v3145 = vunpack.c.l.s4 1934713408
    %v3146 = vunpack.c.0.s8 %v3145
    %v3147 = vperm.slane %v3139, %v3146
    %v3148 = vrot.slane %v3131, 4
    %v3149 = vsel %vm176, 0.0, %v3148
    %v3150 = vrot.slane %v3135, 4
    %v3151 = vsel %vm176, 0.0, %v3150
    %v3152 = vrot.slane %v3143, 4
    %v3153 = vsel %vm176, 0.0, %v3152
    %v3154 = vrot.slane %v3147, 4
    %v3155 = vsel %vm176, 0.0, %v3154
    %v3156 = vrot.slane %v3087, 4
    %v3157 = vsel %vm176, %v3156, %v3079
    %v3158 = vrot.slane %v3079, 4
    %v3159 = vsel %vm176, %v3087, %v3158
    %v3161 = vunpack.c.l.s4 1983009808
    %v3162 = vunpack.c.0.s8 %v3161
    %v3163 = vperm.slane %v3157, %v3162
    %v3165 = vunpack.c.l.s4 1983009808
    %v3166 = vunpack.c.0.s8 %v3165
    %v3167 = vperm.slane %v3159, %v3166
    %v3168 = vrot.slane %v3091, 4
    %v3169 = vsel %vm176, %v3168, %v3083
    %v3170 = vrot.slane %v3083, 4
    %v3171 = vsel %vm176, %v3091, %v3170
    %v3173 = vunpack.c.l.s4 1983009808
    %v3174 = vunpack.c.0.s8 %v3173
    %v3175 = vperm.slane %v3169, %v3174
    %v3177 = vunpack.c.l.s4 1983009808
    %v3178 = vunpack.c.0.s8 %v3177
    %v3179 = vperm.slane %v3171, %v3178
    %v3180 = vrot.slane %v3175, 4
    %v3181 = vsel %vm176, %v3180, %v3163
    %v3182 = vrot.slane %v3163, 4
    %v3183 = vsel %vm176, %v3175, %v3182
    %v3185 = vunpack.c.l.s4 1934713408
    %v3186 = vunpack.c.0.s8 %v3185
    %v3187 = vperm.slane %v3181, %v3186
    %v3189 = vunpack.c.l.s4 1934713408
    %v3190 = vunpack.c.0.s8 %v3189
    %v3191 = vperm.slane %v3183, %v3190
    %v3192 = vrot.slane %v3179, 4
    %v3193 = vsel %vm176, %v3192, %v3167
    %v3194 = vrot.slane %v3167, 4
    %v3195 = vsel %vm176, %v3179, %v3194
    %v3197 = vunpack.c.l.s4 1934713408
    %v3198 = vunpack.c.0.s8 %v3197
    %v3199 = vperm.slane %v3193, %v3198
    %v3201 = vunpack.c.l.s4 1934713408
    %v3202 = vunpack.c.0.s8 %v3201
    %v3203 = vperm.slane %v3195, %v3202
    %v3204 = vrot.slane %v3187, 4
    %v3205 = vsel %vm176, 0.0, %v3204
    %v3206 = vrot.slane %v3191, 4
    %v3207 = vsel %vm176, 0.0, %v3206
    %v3208 = vrot.slane %v3199, 4
    %v3209 = vsel %vm176, 0.0, %v3208
    %v3210 = vrot.slane %v3203, 4
    %v3211 = vsel %vm176, 0.0, %v3210
    %v3212 = vpack.c.bf16 %v3131, %v3131
    %v3213 = vpack.c.bf16 %v3149, %v3149
    %v3214 = vpack.c.bf16 %v3135, %v3135
    %v3215 = vpack.c.bf16 %v3151, %v3151
    %v3216 = vpack.c.bf16 %v3143, %v3143
    %v3217 = vpack.c.bf16 %v3153, %v3153
    %v3218 = vpack.c.bf16 %v3147, %v3147
    %v3219 = vpack.c.bf16 %v3155, %v3155
    %v3220 = vpack.c.bf16 %v3187, %v3187
    %v3221 = vpack.c.bf16 %v3205, %v3205
    %v3222 = vpack.c.bf16 %v3191, %v3191
    %v3223 = vpack.c.bf16 %v3207, %v3207
    %v3224 = vpack.c.bf16 %v3199, %v3199
    %v3225 = vpack.c.bf16 %v3209, %v3209
    %v3226 = vpack.c.bf16 %v3203, %v3203
    %v3227 = vpack.c.bf16 %v3211, %v3211
    %v3228 = vrot.slane %v2912, 4
    %v3229 = vsel %vm609, %v3228, %v2908
    %v3231 = vunpack.c.l.s4 1983009808
    %v3232 = vunpack.c.0.s8 %v3231
    %v3233 = vperm.slane %v3229, %v3232
    %v3234 = vrot.slane %v2914, 4
    %v3235 = vsel %vm609, %v3234, %v2910
    %v3237 = vunpack.c.l.s4 1983009808
    %v3238 = vunpack.c.0.s8 %v3237
    %v3239 = vperm.slane %v3235, %v3238
    %v3240 = vrot.slane %v3239, 4
    %v3241 = vsel %vm609, %v3240, %v3233
    %v3243 = vunpack.c.l.s4 1934713408
    %v3244 = vunpack.c.0.s8 %v3243
    %v3245 = vperm.slane %v3241, %v3244
    %v3246 = vrot.slane %v3245, 4
    %v3247 = vsel %vm609, 0, %v3246
    %v3248 = vrot.slane %v2913, 4
    %v3249 = vsel %vm609, %v3248, %v2909
    %v3251 = vunpack.c.l.s4 1983009808
    %v3252 = vunpack.c.0.s8 %v3251
    %v3253 = vperm.slane %v3249, %v3252
    %v3254 = vrot.slane %v2915, 4
    %v3255 = vsel %vm609, %v3254, %v2911
    %v3257 = vunpack.c.l.s4 1983009808
    %v3258 = vunpack.c.0.s8 %v3257
    %v3259 = vperm.slane %v3255, %v3258
    %v3260 = vrot.slane %v3259, 4
    %v3261 = vsel %vm609, %v3260, %v3253
    %v3263 = vunpack.c.l.s4 1934713408
    %v3264 = vunpack.c.0.s8 %v3263
    %v3265 = vperm.slane %v3261, %v3264
    %v3266 = vrot.slane %v3265, 4
    %v3267 = vsel %vm609, 0, %v3266
    %v3268 = vrot.slane %v2920, 4
    %v3269 = vsel %vm609, %v3268, %v2916
    %v3271 = vunpack.c.l.s4 1983009808
    %v3272 = vunpack.c.0.s8 %v3271
    %v3273 = vperm.slane %v3269, %v3272
    %v3274 = vrot.slane %v2922, 4
    %v3275 = vsel %vm609, %v3274, %v2918
    %v3277 = vunpack.c.l.s4 1983009808
    %v3278 = vunpack.c.0.s8 %v3277
    %v3279 = vperm.slane %v3275, %v3278
    %v3280 = vrot.slane %v3279, 4
    %v3281 = vsel %vm609, %v3280, %v3273
    %v3283 = vunpack.c.l.s4 1934713408
    %v3284 = vunpack.c.0.s8 %v3283
    %v3285 = vperm.slane %v3281, %v3284
    %v3286 = vrot.slane %v3285, 4
    %v3287 = vsel %vm609, 0, %v3286
    %v3288 = vrot.slane %v2921, 4
    %v3289 = vsel %vm609, %v3288, %v2917
    %v3291 = vunpack.c.l.s4 1983009808
    %v3292 = vunpack.c.0.s8 %v3291
    %v3293 = vperm.slane %v3289, %v3292
    %v3294 = vrot.slane %v2923, 4
    %v3295 = vsel %vm609, %v3294, %v2919
    %v3297 = vunpack.c.l.s4 1983009808
    %v3298 = vunpack.c.0.s8 %v3297
    %v3299 = vperm.slane %v3295, %v3298
    %v3300 = vrot.slane %v3299, 4
    %v3301 = vsel %vm609, %v3300, %v3293
    %v3303 = vunpack.c.l.s4 1934713408
    %v3304 = vunpack.c.0.s8 %v3303
    %v3305 = vperm.slane %v3301, %v3304
    %v3306 = vrot.slane %v3305, 4
    %v3307 = vsel %vm609, 0, %v3306
    %v3310 = vpack.i.b16 %v3265, %v3245
    %v3311 = vshrl.u32 %v3245, 16
    %v3312 = vshrl.u32 %v3265, 16
    %v3313 = vpack.i.b16 %v3312, %v3311
    %v3316 = vpack.i.b16 %v3267, %v3247
    %v3317 = vshrl.u32 %v3247, 16
    %v3318 = vshrl.u32 %v3267, 16
    %v3319 = vpack.i.b16 %v3318, %v3317
    %v3322 = vpack.i.b16 %v3305, %v3285
    %v3323 = vshrl.u32 %v3285, 16
    %v3324 = vshrl.u32 %v3305, 16
    %v3325 = vpack.i.b16 %v3324, %v3323
    %v3328 = vpack.i.b16 %v3307, %v3287
    %v3329 = vshrl.u32 %v3287, 16
    %v3330 = vshrl.u32 %v3307, 16
    %v3331 = vpack.i.b16 %v3330, %v3329
    %3332 = vxpose.xlu0.c.b16.start [1/8] %v3060, 128
    %3333 = vxpose.xlu0.c.b16.cont [2/8] 0, 128
    %3334 = vxpose.xlu0.c.b16.cont [3/8] 0, 128
    %3335 = vxpose.xlu0.c.b16.cont [4/8] 0, 128
    %3336 = vxpose.xlu0.c.b16.cont [5/8] 0, 128
    %3337 = vxpose.xlu0.c.b16.cont [6/8] 0, 128
    %3338 = vxpose.xlu0.c.b16.cont [7/8] 0, 128
    %3339 = vxpose.xlu0.c.b16.end [8/8] 0, 128
    %v3340 = vpop.trf.xlu0
    %v3341 = vpop.trf.xlu0
    %v3342 = vpop.trf.xlu0
    %v3343 = vpop.trf.xlu0
    %v3344 = vpop.trf.xlu0
    %v3345 = vpop.trf.xlu0
    %v3346 = vpop.trf.xlu0
    %v3347 = vpop.trf.xlu0
    %3348 = vxpose.xlu0.c.b16.start [1/8] %v3061, 128
    %3349 = vxpose.xlu0.c.b16.cont [2/8] 0, 128
    %3350 = vxpose.xlu0.c.b16.cont [3/8] 0, 128
    %3351 = vxpose.xlu0.c.b16.cont [4/8] 0, 128
    %3352 = vxpose.xlu0.c.b16.cont [5/8] 0, 128
    %3353 = vxpose.xlu0.c.b16.cont [6/8] 0, 128
    %3354 = vxpose.xlu0.c.b16.cont [7/8] 0, 128
    %3355 = vxpose.xlu0.c.b16.end [8/8] 0, 128
    %v3356 = vpop.trf.xlu0
    %v3357 = vpop.trf.xlu0
    %v3358 = vpop.trf.xlu0
    %v3359 = vpop.trf.xlu0
    %v3360 = vpop.trf.xlu0
    %v3361 = vpop.trf.xlu0
    %v3362 = vpop.trf.xlu0
    %v3363 = vpop.trf.xlu0
    %3364 = vxpose.xlu0.c.b16.start [1/8] %v3062, 128
    %3365 = vxpose.xlu0.c.b16.cont [2/8] 0, 128
    %3366 = vxpose.xlu0.c.b16.cont [3/8] 0, 128
    %3367 = vxpose.xlu0.c.b16.cont [4/8] 0, 128
    %3368 = vxpose.xlu0.c.b16.cont [5/8] 0, 128
    %3369 = vxpose.xlu0.c.b16.cont [6/8] 0, 128
    %3370 = vxpose.xlu0.c.b16.cont [7/8] 0, 128
    %3371 = vxpose.xlu0.c.b16.end [8/8] 0, 128
    %v3372 = vpop.trf.xlu0
    %v3373 = vpop.trf.xlu0
    %v3374 = vpop.trf.xlu0
    %v3375 = vpop.trf.xlu0
    %v3376 = vpop.trf.xlu0
    %v3377 = vpop.trf.xlu0
    %v3378 = vpop.trf.xlu0
    %v3379 = vpop.trf.xlu0
    %3380 = vxpose.xlu0.c.b16.start [1/8] %v3063, 128
    %3381 = vxpose.xlu0.c.b16.cont [2/8] 0, 128
    %3382 = vxpose.xlu0.c.b16.cont [3/8] 0, 128
    %3383 = vxpose.xlu0.c.b16.cont [4/8] 0, 128
    %3384 = vxpose.xlu0.c.b16.cont [5/8] 0, 128
    %3385 = vxpose.xlu0.c.b16.cont [6/8] 0, 128
    %3386 = vxpose.xlu0.c.b16.cont [7/8] 0, 128
    %3387 = vxpose.xlu0.c.b16.end [8/8] 0, 128
    %v3388 = vpop.trf.xlu0
    %v3389 = vpop.trf.xlu0
    %v3390 = vpop.trf.xlu0
    %v3391 = vpop.trf.xlu0
    %v3392 = vpop.trf.xlu0
    %v3393 = vpop.trf.xlu0
    %v3394 = vpop.trf.xlu0
    %v3395 = vpop.trf.xlu0
    %3396 = vxpose.xlu0.c.b16.start [1/8] %v3064, 128
    %3397 = vxpose.xlu0.c.b16.cont [2/8] 0, 128
    %3398 = vxpose.xlu0.c.b16.cont [3/8] 0, 128
    %3399 = vxpose.xlu0.c.b16.cont [4/8] 0, 128
    %3400 = vxpose.xlu0.c.b16.cont [5/8] 0, 128
    %3401 = vxpose.xlu0.c.b16.cont [6/8] 0, 128
    %3402 = vxpose.xlu0.c.b16.cont [7/8] 0, 128
    %3403 = vxpose.xlu0.c.b16.end [8/8] 0, 128
    %v3404 = vpop.trf.xlu0
    %v3405 = vpop.trf.xlu0
    %v3406 = vpop.trf.xlu0
    %v3407 = vpop.trf.xlu0
    %v3408 = vpop.trf.xlu0
    %v3409 = vpop.trf.xlu0
    %v3410 = vpop.trf.xlu0
    %v3411 = vpop.trf.xlu0
    %3412 = vxpose.xlu0.c.b16.start [1/8] %v3065, 128
    %3413 = vxpose.xlu0.c.b16.cont [2/8] 0, 128
    %3414 = vxpose.xlu0.c.b16.cont [3/8] 0, 128
    %3415 = vxpose.xlu0.c.b16.cont [4/8] 0, 128
    %3416 = vxpose.xlu0.c.b16.cont [5/8] 0, 128
    %3417 = vxpose.xlu0.c.b16.cont [6/8] 0, 128
    %3418 = vxpose.xlu0.c.b16.cont [7/8] 0, 128
    %3419 = vxpose.xlu0.c.b16.end [8/8] 0, 128
    %v3420 = vpop.trf.xlu0
    %v3421 = vpop.trf.xlu0
    %v3422 = vpop.trf.xlu0
    %v3423 = vpop.trf.xlu0
    %v3424 = vpop.trf.xlu0
    %v3425 = vpop.trf.xlu0
    %v3426 = vpop.trf.xlu0
    %v3427 = vpop.trf.xlu0
    %3428 = vxpose.xlu0.c.b16.start [1/8] %v3066, 128
    %3429 = vxpose.xlu0.c.b16.cont [2/8] 0, 128
    %3430 = vxpose.xlu0.c.b16.cont [3/8] 0, 128
    %3431 = vxpose.xlu0.c.b16.cont [4/8] 0, 128
    %3432 = vxpose.xlu0.c.b16.cont [5/8] 0, 128
    %3433 = vxpose.xlu0.c.b16.cont [6/8] 0, 128
    %3434 = vxpose.xlu0.c.b16.cont [7/8] 0, 128
    %3435 = vxpose.xlu0.c.b16.end [8/8] 0, 128
    %v3436 = vpop.trf.xlu0
    %v3437 = vpop.trf.xlu0
    %v3438 = vpop.trf.xlu0
    %v3439 = vpop.trf.xlu0
    %v3440 = vpop.trf.xlu0
    %v3441 = vpop.trf.xlu0
    %v3442 = vpop.trf.xlu0
    %v3443 = vpop.trf.xlu0
    %3444 = vxpose.xlu0.c.b16.start [1/8] %v3067, 128
    %3445 = vxpose.xlu0.c.b16.cont [2/8] 0, 128
    %3446 = vxpose.xlu0.c.b16.cont [3/8] 0, 128
    %3447 = vxpose.xlu0.c.b16.cont [4/8] 0, 128
    %3448 = vxpose.xlu0.c.b16.cont [5/8] 0, 128
    %3449 = vxpose.xlu0.c.b16.cont [6/8] 0, 128
    %3450 = vxpose.xlu0.c.b16.cont [7/8] 0, 128
    %3451 = vxpose.xlu0.c.b16.end [8/8] 0, 128
    %v3452 = vpop.trf.xlu0
    %v3453 = vpop.trf.xlu0
    %v3454 = vpop.trf.xlu0
    %v3455 = vpop.trf.xlu0
    %v3456 = vpop.trf.xlu0
    %v3457 = vpop.trf.xlu0
    %v3458 = vpop.trf.xlu0
    %v3459 = vpop.trf.xlu0
    %3460 = vxpose.xlu0.c.b16.start [1/8] %v3068, 128
    %3461 = vxpose.xlu0.c.b16.cont [2/8] 0, 128
    %3462 = vxpose.xlu0.c.b16.cont [3/8] 0, 128
    %3463 = vxpose.xlu0.c.b16.cont [4/8] 0, 128
    %3464 = vxpose.xlu0.c.b16.cont [5/8] 0, 128
    %3465 = vxpose.xlu0.c.b16.cont [6/8] 0, 128
    %3466 = vxpose.xlu0.c.b16.cont [7/8] 0, 128
    %3467 = vxpose.xlu0.c.b16.end [8/8] 0, 128
    %v3468 = vpop.trf.xlu0
    %v3469 = vpop.trf.xlu0
    %v3470 = vpop.trf.xlu0
    %v3471 = vpop.trf.xlu0
    %v3472 = vpop.trf.xlu0
    %v3473 = vpop.trf.xlu0
    %v3474 = vpop.trf.xlu0
    %v3475 = vpop.trf.xlu0
    %3476 = vxpose.xlu0.c.b16.start [1/8] %v3069, 128
    %3477 = vxpose.xlu0.c.b16.cont [2/8] 0, 128
    %3478 = vxpose.xlu0.c.b16.cont [3/8] 0, 128
    %3479 = vxpose.xlu0.c.b16.cont [4/8] 0, 128
    %3480 = vxpose.xlu0.c.b16.cont [5/8] 0, 128
    %3481 = vxpose.xlu0.c.b16.cont [6/8] 0, 128
    %3482 = vxpose.xlu0.c.b16.cont [7/8] 0, 128
    %3483 = vxpose.xlu0.c.b16.end [8/8] 0, 128
    %v3484 = vpop.trf.xlu0
    %v3485 = vpop.trf.xlu0
    %v3486 = vpop.trf.xlu0
    %v3487 = vpop.trf.xlu0
    %v3488 = vpop.trf.xlu0
    %v3489 = vpop.trf.xlu0
    %v3490 = vpop.trf.xlu0
    %v3491 = vpop.trf.xlu0
    %3492 = vxpose.xlu0.c.b16.start [1/8] %v3070, 128
    %3493 = vxpose.xlu0.c.b16.cont [2/8] 0, 128
    %3494 = vxpose.xlu0.c.b16.cont [3/8] 0, 128
    %3495 = vxpose.xlu0.c.b16.cont [4/8] 0, 128
    %3496 = vxpose.xlu0.c.b16.cont [5/8] 0, 128
    %3497 = vxpose.xlu0.c.b16.cont [6/8] 0, 128
    %3498 = vxpose.xlu0.c.b16.cont [7/8] 0, 128
    %3499 = vxpose.xlu0.c.b16.end [8/8] 0, 128
    %v3500 = vpop.trf.xlu0
    %v3501 = vpop.trf.xlu0
    %v3502 = vpop.trf.xlu0
    %v3503 = vpop.trf.xlu0
    %v3504 = vpop.trf.xlu0
    %v3505 = vpop.trf.xlu0
    %v3506 = vpop.trf.xlu0
    %v3507 = vpop.trf.xlu0
    %3508 = vxpose.xlu0.c.b16.start [1/8] %v3071, 128
    %3509 = vxpose.xlu0.c.b16.cont [2/8] 0, 128
    %3510 = vxpose.xlu0.c.b16.cont [3/8] 0, 128
    %3511 = vxpose.xlu0.c.b16.cont [4/8] 0, 128
    %3512 = vxpose.xlu0.c.b16.cont [5/8] 0, 128
    %3513 = vxpose.xlu0.c.b16.cont [6/8] 0, 128
    %3514 = vxpose.xlu0.c.b16.cont [7/8] 0, 128
    %3515 = vxpose.xlu0.c.b16.end [8/8] 0, 128
    %v3516 = vpop.trf.xlu0
    %v3517 = vpop.trf.xlu0
    %v3518 = vpop.trf.xlu0
    %v3519 = vpop.trf.xlu0
    %v3520 = vpop.trf.xlu0
    %v3521 = vpop.trf.xlu0
    %v3522 = vpop.trf.xlu0
    %v3523 = vpop.trf.xlu0
    %3524 = vxpose.xlu0.c.b16.start [1/8] %v3072, 128
    %3525 = vxpose.xlu0.c.b16.cont [2/8] 0, 128
    %3526 = vxpose.xlu0.c.b16.cont [3/8] 0, 128
    %3527 = vxpose.xlu0.c.b16.cont [4/8] 0, 128
    %3528 = vxpose.xlu0.c.b16.cont [5/8] 0, 128
    %3529 = vxpose.xlu0.c.b16.cont [6/8] 0, 128
    %3530 = vxpose.xlu0.c.b16.cont [7/8] 0, 128
    %3531 = vxpose.xlu0.c.b16.end [8/8] 0, 128
    %v3532 = vpop.trf.xlu0
    %v3533 = vpop.trf.xlu0
    %v3534 = vpop.trf.xlu0
    %v3535 = vpop.trf.xlu0
    %v3536 = vpop.trf.xlu0
    %v3537 = vpop.trf.xlu0
    %v3538 = vpop.trf.xlu0
    %v3539 = vpop.trf.xlu0
    %3540 = vxpose.xlu0.c.b16.start [1/8] %v3073, 128
    %3541 = vxpose.xlu0.c.b16.cont [2/8] 0, 128
    %3542 = vxpose.xlu0.c.b16.cont [3/8] 0, 128
    %3543 = vxpose.xlu0.c.b16.cont [4/8] 0, 128
    %3544 = vxpose.xlu0.c.b16.cont [5/8] 0, 128
    %3545 = vxpose.xlu0.c.b16.cont [6/8] 0, 128
    %3546 = vxpose.xlu0.c.b16.cont [7/8] 0, 128
    %3547 = vxpose.xlu0.c.b16.end [8/8] 0, 128
    %v3548 = vpop.trf.xlu0
    %v3549 = vpop.trf.xlu0
    %v3550 = vpop.trf.xlu0
    %v3551 = vpop.trf.xlu0
    %v3552 = vpop.trf.xlu0
    %v3553 = vpop.trf.xlu0
    %v3554 = vpop.trf.xlu0
    %v3555 = vpop.trf.xlu0
    %3556 = vxpose.xlu0.c.b16.start [1/8] %v3074, 128
    %3557 = vxpose.xlu0.c.b16.cont [2/8] 0, 128
    %3558 = vxpose.xlu0.c.b16.cont [3/8] 0, 128
    %3559 = vxpose.xlu0.c.b16.cont [4/8] 0, 128
    %3560 = vxpose.xlu0.c.b16.cont [5/8] 0, 128
    %3561 = vxpose.xlu0.c.b16.cont [6/8] 0, 128
    %3562 = vxpose.xlu0.c.b16.cont [7/8] 0, 128
    %3563 = vxpose.xlu0.c.b16.end [8/8] 0, 128
    %v3564 = vpop.trf.xlu0
    %v3565 = vpop.trf.xlu0
    %v3566 = vpop.trf.xlu0
    %v3567 = vpop.trf.xlu0
    %v3568 = vpop.trf.xlu0
    %v3569 = vpop.trf.xlu0
    %v3570 = vpop.trf.xlu0
    %v3571 = vpop.trf.xlu0
    %3572 = vxpose.xlu0.c.b16.start [1/8] %v3075, 128
    %3573 = vxpose.xlu0.c.b16.cont [2/8] 0, 128
    %3574 = vxpose.xlu0.c.b16.cont [3/8] 0, 128
    %3575 = vxpose.xlu0.c.b16.cont [4/8] 0, 128
    %3576 = vxpose.xlu0.c.b16.cont [5/8] 0, 128
    %3577 = vxpose.xlu0.c.b16.cont [6/8] 0, 128
    %3578 = vxpose.xlu0.c.b16.cont [7/8] 0, 128
    %3579 = vxpose.xlu0.c.b16.end [8/8] 0, 128
    %v3580 = vpop.trf.xlu0
    %v3581 = vpop.trf.xlu0
    %v3582 = vpop.trf.xlu0
    %v3583 = vpop.trf.xlu0
    %v3584 = vpop.trf.xlu0
    %v3585 = vpop.trf.xlu0
    %v3586 = vpop.trf.xlu0
    %v3587 = vpop.trf.xlu0
    %v3588 = vrot.slane %v3404, 4
    %v3589 = vsel %vm609, %v3588, %v3340
    %v3591 = vunpack.c.l.s4 1983009808
    %v3592 = vunpack.c.0.s8 %v3591
    %v3593 = vperm.slane %v3589, %v3592
    %v3594 = vrot.slane %v3436, 4
    %v3595 = vsel %vm609, %v3594, %v3372
    %v3597 = vunpack.c.l.s4 1983009808
    %v3598 = vunpack.c.0.s8 %v3597
    %v3599 = vperm.slane %v3595, %v3598
    %v3600 = vrot.slane %v3532, 4
    %v3601 = vsel %vm609, %v3600, %v3468
    %v3603 = vunpack.c.l.s4 1983009808
    %v3604 = vunpack.c.0.s8 %v3603
    %v3605 = vperm.slane %v3601, %v3604
    %v3606 = vrot.slane %v3564, 4
    %v3607 = vsel %vm609, %v3606, %v3500
    %v3609 = vunpack.c.l.s4 1983009808
    %v3610 = vunpack.c.0.s8 %v3609
    %v3611 = vperm.slane %v3607, %v3610
    %v3612 = vrot.slane %v3599, 4
    %v3613 = vsel %vm609, %v3612, %v3593
    %v3614 = vrot.slane %v3593, 4
    %v3615 = vsel %vm609, %v3599, %v3614
    %v3617 = vunpack.c.l.s4 1934713408
    %v3618 = vunpack.c.0.s8 %v3617
    %v3619 = vperm.slane %v3613, %v3618
    %v3621 = vunpack.c.l.s4 1934713408
    %v3622 = vunpack.c.0.s8 %v3621
    %v3623 = vperm.slane %v3615, %v3622
    %v3624 = vrot.slane %v3611, 4
    %v3625 = vsel %vm609, %v3624, %v3605
    %v3626 = vrot.slane %v3605, 4
    %v3627 = vsel %vm609, %v3611, %v3626
    %v3629 = vunpack.c.l.s4 1934713408
    %v3630 = vunpack.c.0.s8 %v3629
    %v3631 = vperm.slane %v3625, %v3630
    %v3633 = vunpack.c.l.s4 1934713408
    %v3634 = vunpack.c.0.s8 %v3633
    %v3635 = vperm.slane %v3627, %v3634
    %v3636 = vrot.slane %v3631, 4
    %v3637 = vsel %vm609, %v3636, %v3619
    %v3638 = vrot.slane %v3619, 4
    %v3639 = vsel %vm609, %v3631, %v3638
    %v3640 = vrot.slane %v3635, 4
    %v3641 = vsel %vm609, %v3640, %v3623
    %v3642 = vrot.slane %v3623, 4
    %v3643 = vsel %vm609, %v3635, %v3642
    %v3644 = vrot.slane %v3420, 4
    %v3645 = vsel %vm609, %v3644, %v3356
    %v3647 = vunpack.c.l.s4 1983009808
    %v3648 = vunpack.c.0.s8 %v3647
    %v3649 = vperm.slane %v3645, %v3648
    %v3650 = vrot.slane %v3452, 4
    %v3651 = vsel %vm609, %v3650, %v3388
    %v3653 = vunpack.c.l.s4 1983009808
    %v3654 = vunpack.c.0.s8 %v3653
    %v3655 = vperm.slane %v3651, %v3654
    %v3656 = vrot.slane %v3548, 4
    %v3657 = vsel %vm609, %v3656, %v3484
    %v3659 = vunpack.c.l.s4 1983009808
    %v3660 = vunpack.c.0.s8 %v3659
    %v3661 = vperm.slane %v3657, %v3660
    %v3662 = vrot.slane %v3580, 4
    %v3663 = vsel %vm609, %v3662, %v3516
    %v3665 = vunpack.c.l.s4 1983009808
    %v3666 = vunpack.c.0.s8 %v3665
    %v3667 = vperm.slane %v3663, %v3666
    %v3668 = vrot.slane %v3655, 4
    %v3669 = vsel %vm609, %v3668, %v3649
    %v3670 = vrot.slane %v3649, 4
    %v3671 = vsel %vm609, %v3655, %v3670
    %v3673 = vunpack.c.l.s4 1934713408
    %v3674 = vunpack.c.0.s8 %v3673
    %v3675 = vperm.slane %v3669, %v3674
    %v3677 = vunpack.c.l.s4 1934713408
    %v3678 = vunpack.c.0.s8 %v3677
    %v3679 = vperm.slane %v3671, %v3678
    %v3680 = vrot.slane %v3667, 4
    %v3681 = vsel %vm609, %v3680, %v3661
    %v3682 = vrot.slane %v3661, 4
    %v3683 = vsel %vm609, %v3667, %v3682
    %v3685 = vunpack.c.l.s4 1934713408
    %v3686 = vunpack.c.0.s8 %v3685
    %v3687 = vperm.slane %v3681, %v3686
    %v3689 = vunpack.c.l.s4 1934713408
    %v3690 = vunpack.c.0.s8 %v3689
    %v3691 = vperm.slane %v3683, %v3690
    %v3692 = vrot.slane %v3687, 4
    %v3693 = vsel %vm609, %v3692, %v3675
    %v3694 = vrot.slane %v3675, 4
    %v3695 = vsel %vm609, %v3687, %v3694
    %v3696 = vrot.slane %v3691, 4
    %v3697 = vsel %vm609, %v3696, %v3679
    %v3698 = vrot.slane %v3679, 4
    %v3699 = vsel %vm609, %v3691, %v3698
    %v3702 = vpack.i.b16 %v3693, %v3637
    %v3704 = vshrl.u32 %v3637, 16
    %v3705 = vshrl.u32 %v3693, 16
    %v3706 = vpack.i.b16 %v3705, %v3704
    %v3710 = vpack.i.b16 %v3695, %v3639
    %v3712 = vshrl.u32 %v3639, 16
    %v3713 = vshrl.u32 %v3695, 16
    %v3714 = vpack.i.b16 %v3713, %v3712
    %v3718 = vpack.i.b16 %v3697, %v3641
    %v3720 = vshrl.u32 %v3641, 16
    %v3721 = vshrl.u32 %v3697, 16
    %v3722 = vpack.i.b16 %v3721, %v3720
    %v3726 = vpack.i.b16 %v3699, %v3643
    %v3728 = vshrl.u32 %v3643, 16
    %v3729 = vshrl.u32 %v3699, 16
    %v3730 = vpack.i.b16 %v3729, %v3728
    %3732 = vxpose.xlu0.c.b16.start [1/8] %v3702, 128
    %3733 = vxpose.xlu0.c.b16.cont [2/8] 0, 128
    %3734 = vxpose.xlu0.c.b16.cont [3/8] 0, 128
    %3735 = vxpose.xlu0.c.b16.cont [4/8] 0, 128
    %3736 = vxpose.xlu0.c.b16.cont [5/8] 0, 128
    %3737 = vxpose.xlu0.c.b16.cont [6/8] 0, 128
    %3738 = vxpose.xlu0.c.b16.cont [7/8] 0, 128
    %3739 = vxpose.xlu0.c.b16.end [8/8] 0, 128
    %v3740 = vpop.trf.xlu0
    %v3741 = vpop.trf.xlu0
    %v3742 = vpop.trf.xlu0
    %v3743 = vpop.trf.xlu0
    %v3744 = vpop.trf.xlu0
    %v3745 = vpop.trf.xlu0
    %v3746 = vpop.trf.xlu0
    %v3747 = vpop.trf.xlu0
    %3748 = vxpose.xlu0.c.b16.start [1/8] %v3706, 128
    %3749 = vxpose.xlu0.c.b16.cont [2/8] 0, 128
    %3750 = vxpose.xlu0.c.b16.cont [3/8] 0, 128
    %3751 = vxpose.xlu0.c.b16.cont [4/8] 0, 128
    %3752 = vxpose.xlu0.c.b16.cont [5/8] 0, 128
    %3753 = vxpose.xlu0.c.b16.cont [6/8] 0, 128
    %3754 = vxpose.xlu0.c.b16.cont [7/8] 0, 128
    %3755 = vxpose.xlu0.c.b16.end [8/8] 0, 128
    %v3756 = vpop.trf.xlu0
    %v3757 = vpop.trf.xlu0
    %v3758 = vpop.trf.xlu0
    %v3759 = vpop.trf.xlu0
    %v3760 = vpop.trf.xlu0
    %v3761 = vpop.trf.xlu0
    %v3762 = vpop.trf.xlu0
    %v3763 = vpop.trf.xlu0
    %3764 = vxpose.xlu0.c.b16.start [1/8] %v3710, 128
    %3765 = vxpose.xlu0.c.b16.cont [2/8] 0, 128
    %3766 = vxpose.xlu0.c.b16.cont [3/8] 0, 128
    %3767 = vxpose.xlu0.c.b16.cont [4/8] 0, 128
    %3768 = vxpose.xlu0.c.b16.cont [5/8] 0, 128
    %3769 = vxpose.xlu0.c.b16.cont [6/8] 0, 128
    %3770 = vxpose.xlu0.c.b16.cont [7/8] 0, 128
    %3771 = vxpose.xlu0.c.b16.end [8/8] 0, 128
    %v3772 = vpop.trf.xlu0
    %v3773 = vpop.trf.xlu0
    %v3774 = vpop.trf.xlu0
    %v3775 = vpop.trf.xlu0
    %v3776 = vpop.trf.xlu0
    %v3777 = vpop.trf.xlu0
    %v3778 = vpop.trf.xlu0
    %v3779 = vpop.trf.xlu0
    %3780 = vxpose.xlu0.c.b16.start [1/8] %v3714, 128
    %3781 = vxpose.xlu0.c.b16.cont [2/8] 0, 128
    %3782 = vxpose.xlu0.c.b16.cont [3/8] 0, 128
    %3783 = vxpose.xlu0.c.b16.cont [4/8] 0, 128
    %3784 = vxpose.xlu0.c.b16.cont [5/8] 0, 128
    %3785 = vxpose.xlu0.c.b16.cont [6/8] 0, 128
    %3786 = vxpose.xlu0.c.b16.cont [7/8] 0, 128
    %3787 = vxpose.xlu0.c.b16.end [8/8] 0, 128
    %v3788 = vpop.trf.xlu0
    %v3789 = vpop.trf.xlu0
    %v3790 = vpop.trf.xlu0
    %v3791 = vpop.trf.xlu0
    %v3792 = vpop.trf.xlu0
    %v3793 = vpop.trf.xlu0
    %v3794 = vpop.trf.xlu0
    %v3795 = vpop.trf.xlu0
    %3796 = vxpose.xlu0.c.b16.start [1/8] %v3718, 128
    %3797 = vxpose.xlu0.c.b16.cont [2/8] 0, 128
    %3798 = vxpose.xlu0.c.b16.cont [3/8] 0, 128
    %3799 = vxpose.xlu0.c.b16.cont [4/8] 0, 128
    %3800 = vxpose.xlu0.c.b16.cont [5/8] 0, 128
    %3801 = vxpose.xlu0.c.b16.cont [6/8] 0, 128
    %3802 = vxpose.xlu0.c.b16.cont [7/8] 0, 128
    %3803 = vxpose.xlu0.c.b16.end [8/8] 0, 128
    %v3804 = vpop.trf.xlu0
    %v3805 = vpop.trf.xlu0
    %v3806 = vpop.trf.xlu0
    %v3807 = vpop.trf.xlu0
    %v3808 = vpop.trf.xlu0
    %v3809 = vpop.trf.xlu0
    %v3810 = vpop.trf.xlu0
    %v3811 = vpop.trf.xlu0
    %3812 = vxpose.xlu0.c.b16.start [1/8] %v3722, 128
    %3813 = vxpose.xlu0.c.b16.cont [2/8] 0, 128
    %3814 = vxpose.xlu0.c.b16.cont [3/8] 0, 128
    %3815 = vxpose.xlu0.c.b16.cont [4/8] 0, 128
    %3816 = vxpose.xlu0.c.b16.cont [5/8] 0, 128
    %3817 = vxpose.xlu0.c.b16.cont [6/8] 0, 128
    %3818 = vxpose.xlu0.c.b16.cont [7/8] 0, 128
    %3819 = vxpose.xlu0.c.b16.end [8/8] 0, 128
    %v3820 = vpop.trf.xlu0
    %v3821 = vpop.trf.xlu0
    %v3822 = vpop.trf.xlu0
    %v3823 = vpop.trf.xlu0
    %v3824 = vpop.trf.xlu0
    %v3825 = vpop.trf.xlu0
    %v3826 = vpop.trf.xlu0
    %v3827 = vpop.trf.xlu0
    %3828 = vxpose.xlu0.c.b16.start [1/8] %v3726, 128
    %3829 = vxpose.xlu0.c.b16.cont [2/8] 0, 128
    %3830 = vxpose.xlu0.c.b16.cont [3/8] 0, 128
    %3831 = vxpose.xlu0.c.b16.cont [4/8] 0, 128
    %3832 = vxpose.xlu0.c.b16.cont [5/8] 0, 128
    %3833 = vxpose.xlu0.c.b16.cont [6/8] 0, 128
    %3834 = vxpose.xlu0.c.b16.cont [7/8] 0, 128
    %3835 = vxpose.xlu0.c.b16.end [8/8] 0, 128
    %v3836 = vpop.trf.xlu0
    %v3837 = vpop.trf.xlu0
    %v3838 = vpop.trf.xlu0
    %v3839 = vpop.trf.xlu0
    %v3840 = vpop.trf.xlu0
    %v3841 = vpop.trf.xlu0
    %v3842 = vpop.trf.xlu0
    %v3843 = vpop.trf.xlu0
    %3844 = vxpose.xlu0.c.b16.start [1/8] %v3730, 128
    %3845 = vxpose.xlu0.c.b16.cont [2/8] 0, 128
    %3846 = vxpose.xlu0.c.b16.cont [3/8] 0, 128
    %3847 = vxpose.xlu0.c.b16.cont [4/8] 0, 128
    %3848 = vxpose.xlu0.c.b16.cont [5/8] 0, 128
    %3849 = vxpose.xlu0.c.b16.cont [6/8] 0, 128
    %3850 = vxpose.xlu0.c.b16.cont [7/8] 0, 128
    %3851 = vxpose.xlu0.c.b16.end [8/8] 0, 128
    %v3852 = vpop.trf.xlu0
    %v3853 = vpop.trf.xlu0
    %v3854 = vpop.trf.xlu0
    %v3855 = vpop.trf.xlu0
    %v3856 = vpop.trf.xlu0
    %v3857 = vpop.trf.xlu0
    %v3858 = vpop.trf.xlu0
    %v3859 = vpop.trf.xlu0
    %v3860 = vrot.slane %v3804, 4
    %v3861 = vsel %vm609, %v3860, %v3740
    %v3863 = vunpack.c.l.s4 1983009808
    %v3864 = vunpack.c.0.s8 %v3863
    %v3865 = vperm.slane %v3861, %v3864
    %v3866 = vrot.slane %v3836, 4
    %v3867 = vsel %vm609, %v3866, %v3772
    %v3869 = vunpack.c.l.s4 1983009808
    %v3870 = vunpack.c.0.s8 %v3869
    %v3871 = vperm.slane %v3867, %v3870
    %v3872 = vrot.slane %v3871, 4
    %v3873 = vsel %vm609, %v3872, %v3865
    %v3875 = vunpack.c.l.s4 1934713408
    %v3876 = vunpack.c.0.s8 %v3875
    %v3877 = vperm.slane %v3873, %v3876
    %v3878 = vrot.slane %v3877, 4
    %v3879 = vsel %vm609, 0, %v3878
    %v3880 = vrot.slane %v3820, 4
    %v3881 = vsel %vm609, %v3880, %v3756
    %v3883 = vunpack.c.l.s4 1983009808
    %v3884 = vunpack.c.0.s8 %v3883
    %v3885 = vperm.slane %v3881, %v3884
    %v3886 = vrot.slane %v3852, 4
    %v3887 = vsel %vm609, %v3886, %v3788
    %v3889 = vunpack.c.l.s4 1983009808
    %v3890 = vunpack.c.0.s8 %v3889
    %v3891 = vperm.slane %v3887, %v3890
    %v3892 = vrot.slane %v3891, 4
    %v3893 = vsel %vm609, %v3892, %v3885
    %v3895 = vunpack.c.l.s4 1934713408
    %v3896 = vunpack.c.0.s8 %v3895
    %v3897 = vperm.slane %v3893, %v3896
    %v3898 = vrot.slane %v3897, 4
    %v3899 = vsel %vm609, 0, %v3898
    %v3902 = vpack.i.b16 %v3897, %v3877
    %v3903 = vshrl.u32 %v3877, 16
    %v3904 = vshrl.u32 %v3897, 16
    %v3905 = vpack.i.b16 %v3904, %v3903
    %v3908 = vpack.i.b16 %v3899, %v3879
    %v3909 = vshrl.u32 %v3879, 16
    %v3910 = vshrl.u32 %v3899, 16
    %v3911 = vpack.i.b16 %v3910, %v3909
    %v3912 = vunpack.c.l.b16 %v3310
    %v3913 = vunpack.c.l.b16 %v3322
    %v3914 = vpack.c.b16 %v3913, %v3912
    %v3916 = vsel %vm1296, %v3914, 0
    %v3919 = vsel %vm1300, %v3902, 0
    %3921 = vmatpush.bf16.msra.mxu0 0
    %3922 = vmatpush.bf16.msra.mxu0 0
    %3923 = vmatpush.bf16.msra.mxu0 0
    %3924 = vmatpush.bf16.msra.mxu0 0
    %3925 = vmatpush.bf16.msra.mxu0 0
    %3926 = vmatpush.bf16.msra.mxu0 0
    %3927 = vmatpush.bf16.msra.mxu0 0
    %3928 = vmatpush.bf16.msra.mxu0 %v3919
    %3929 = vmatmul.bf16.gmra.mxu0 %v3916
    %v3930 = vpop.f32.mrf.mxu0
    %v3931 = vadd.f32 %v119, %v3930
    %v3932 = vpop.f32.mrf.mxu0
    %v3933 = vadd.f32 %v120, %v3932
    %3934 = vdwg.mxu0
    %v3935 = vunpack.c.l.b16 %v3313
    %v3936 = vunpack.c.l.b16 %v3325
    %v3937 = vpack.c.b16 %v3936, %v3935
    %v3939 = vsel %vm1296, %v3937, 0
    %v3942 = vsel %vm1300, %v3905, 0
    %3944 = vmatpush.bf16.msra.mxu0 0
    %3945 = vmatpush.bf16.msra.mxu0 0
    %3946 = vmatpush.bf16.msra.mxu0 0
    %3947 = vmatpush.bf16.msra.mxu0 0
    %3948 = vmatpush.bf16.msra.mxu0 0
    %3949 = vmatpush.bf16.msra.mxu0 0
    %3950 = vmatpush.bf16.msra.mxu0 0
    %3951 = vmatpush.bf16.msra.mxu0 %v3942
    %3952 = vmatmul.bf16.gmra.mxu0 %v3939
    %v3953 = vpop.f32.mrf.mxu0
    %v3954 = vadd.f32 %v119, %v3953
    %v3955 = vpop.f32.mrf.mxu0
    %v3956 = vadd.f32 %v120, %v3955
    %3957 = vdwg.mxu0
    %v3958 = vunpack.c.l.b16 %v3316
    %v3959 = vunpack.c.l.b16 %v3328
    %v3960 = vpack.c.b16 %v3959, %v3958
    %v3962 = vsel %vm1296, %v3960, 0
    %v3965 = vsel %vm1300, %v3908, 0
    %3967 = vmatpush.bf16.msra.mxu0 0
    %3968 = vmatpush.bf16.msra.mxu0 0
    %3969 = vmatpush.bf16.msra.mxu0 0
    %3970 = vmatpush.bf16.msra.mxu0 0
    %3971 = vmatpush.bf16.msra.mxu0 0
    %3972 = vmatpush.bf16.msra.mxu0 0
    %3973 = vmatpush.bf16.msra.mxu0 0
    %3974 = vmatpush.bf16.msra.mxu0 %v3965
    %3975 = vmatmul.bf16.gmra.mxu0 %v3962
    %v3976 = vpop.f32.mrf.mxu0
    %v3977 = vadd.f32 %v119, %v3976
    %v3978 = vpop.f32.mrf.mxu0
    %v3979 = vadd.f32 %v120, %v3978
    %3980 = vdwg.mxu0
    %v3981 = vunpack.c.l.b16 %v3319
    %v3982 = vunpack.c.l.b16 %v3331
    %v3983 = vpack.c.b16 %v3982, %v3981
    %v3985 = vsel %vm1296, %v3983, 0
    %v3988 = vsel %vm1300, %v3911, 0
    %3990 = vmatpush.bf16.msra.mxu0 0
    %3991 = vmatpush.bf16.msra.mxu0 0
    %3992 = vmatpush.bf16.msra.mxu0 0
    %3993 = vmatpush.bf16.msra.mxu0 0
    %3994 = vmatpush.bf16.msra.mxu0 0
    %3995 = vmatpush.bf16.msra.mxu0 0
    %3996 = vmatpush.bf16.msra.mxu0 0
    %3997 = vmatpush.bf16.msra.mxu0 %v3988
    %3998 = vmatmul.bf16.gmra.mxu0 %v3985
    %v3999 = vpop.f32.mrf.mxu0
    %v4000 = vadd.f32 %v119, %v3999
    %v4001 = vpop.f32.mrf.mxu0
    %v4002 = vadd.f32 %v120, %v4001
    %4003 = vdwg.mxu0
    %v4004 = vsel %vm1387, %v3931, -inf
    %4005 = vmax.xlane.f32.xlu0 %v4004
    %v4006 = vpop.xlane.xlu0 %4005
    %v4007 = vsel %vm1387, %v3933, -inf
    %4008 = vmax.xlane.f32.xlu0 %v4007
    %v4009 = vpop.xlane.xlu0 %4008
    %v4010 = vsel %vm1387, %v3954, -inf
    %4011 = vmax.xlane.f32.xlu0 %v4010
    %v4012 = vpop.xlane.xlu0 %4011
    %v4013 = vsel %vm1387, %v3956, -inf
    %4014 = vmax.xlane.f32.xlu0 %v4013
    %v4015 = vpop.xlane.xlu0 %4014
    %v4016 = vsel %vm1387, %v3977, -inf
    %4017 = vmax.xlane.f32.xlu0 %v4016
    %v4018 = vpop.xlane.xlu0 %4017
    %v4019 = vsel %vm1387, %v3979, -inf
    %4020 = vmax.xlane.f32.xlu0 %v4019
    %v4021 = vpop.xlane.xlu0 %4020
    %v4022 = vsel %vm1387, %v4000, -inf
    %4023 = vmax.xlane.f32.xlu0 %v4022
    %v4024 = vpop.xlane.xlu0 %4023
    %v4025 = vsel %vm1387, %v4002, -inf
    %4026 = vmax.xlane.f32.xlu0 %v4025
    %v4027 = vpop.xlane.xlu0 %4026
    %v4028 = vsub.f32 %v3931, %v4006
    %v4029 = vsub.f32 %v3933, %v4009
    %v4030 = vsub.f32 %v3954, %v4012
    %v4031 = vsub.f32 %v3956, %v4015
    %v4032 = vsub.f32 %v3977, %v4018
    %v4033 = vsub.f32 %v3979, %v4021
    %v4034 = vsub.f32 %v4000, %v4024
    %v4035 = vsub.f32 %v4002, %v4027
    %v4036 = vmul.f32 %v4028, 1.442695
    %v4037 = vpow.pop %v4036
    %v4038 = vmul.f32 %v4029, 1.442695
    %v4039 = vpow.pop %v4038
    %v4040 = vmul.f32 %v4030, 1.442695
    %v4041 = vpow.pop %v4040
    %v4042 = vmul.f32 %v4031, 1.442695
    %v4043 = vpow.pop %v4042
    %v4044 = vmul.f32 %v4032, 1.442695
    %v4045 = vpow.pop %v4044
    %v4046 = vmul.f32 %v4033, 1.442695
    %v4047 = vpow.pop %v4046
    %v4048 = vmul.f32 %v4034, 1.442695
    %v4049 = vpow.pop %v4048
    %v4050 = vmul.f32 %v4035, 1.442695
    %v4051 = vpow.pop %v4050
    %v4052 = vsel %vm1387, %v4037, 0.0
    %4053 = vadd.xlane.f32.xlu0 %v4052
    %v4054 = vpop.xlane.xlu0 %4053
    %v4055 = vsel %vm1387, %v4039, 0.0
    %4056 = vadd.xlane.f32.xlu0 %v4055
    %v4057 = vpop.xlane.xlu0 %4056
    %v4058 = vsel %vm1387, %v4041, 0.0
    %4059 = vadd.xlane.f32.xlu0 %v4058
    %v4060 = vpop.xlane.xlu0 %4059
    %v4061 = vsel %vm1387, %v4043, 0.0
    %4062 = vadd.xlane.f32.xlu0 %v4061
    %v4063 = vpop.xlane.xlu0 %4062
    %v4064 = vsel %vm1387, %v4045, 0.0
    %4065 = vadd.xlane.f32.xlu0 %v4064
    %v4066 = vpop.xlane.xlu0 %4065
    %v4067 = vsel %vm1387, %v4047, 0.0
    %4068 = vadd.xlane.f32.xlu0 %v4067
    %v4069 = vpop.xlane.xlu0 %4068
    %v4070 = vsel %vm1387, %v4049, 0.0
    %4071 = vadd.xlane.f32.xlu0 %v4070
    %v4072 = vpop.xlane.xlu0 %4071
    %v4073 = vsel %vm1387, %v4051, 0.0
    %4074 = vadd.xlane.f32.xlu0 %v4073
    %v4075 = vpop.xlane.xlu0 %4074
    %v4076 = vrcp.pop %v4054
    %v4077 = vrcp.pop %v4057
    %v4078 = vrcp.pop %v4060
    %v4079 = vrcp.pop %v4063
    %v4080 = vrcp.pop %v4066
    %v4081 = vrcp.pop %v4069
    %v4082 = vrcp.pop %v4072
    %v4083 = vrcp.pop %v4075
    %v4084 = vmul.f32 %v4037, %v4076
    %v4085 = vmul.f32 %v4039, %v4077
    %v4086 = vmul.f32 %v4041, %v4078
    %v4087 = vmul.f32 %v4043, %v4079
    %v4088 = vmul.f32 %v4045, %v4080
    %v4089 = vmul.f32 %v4047, %v4081
    %v4090 = vmul.f32 %v4049, %v4082
    %v4091 = vmul.f32 %v4051, %v4083
    %v4092 = vpack.c.bf16 %v4084, %v4084
    %v4093 = vpack.c.bf16 %v4085, %v4085
    %v4094 = vpack.c.bf16 %v4086, %v4086
    %v4095 = vpack.c.bf16 %v4087, %v4087
    %v4096 = vpack.c.bf16 %v4088, %v4088
    %v4097 = vpack.c.bf16 %v4089, %v4089
    %v4098 = vpack.c.bf16 %v4090, %v4090
    %v4099 = vpack.c.bf16 %v4091, %v4091
    %4100 = vxpose.xlu0.c.b16.start [1/8] %v3212, 128
    %4101 = vxpose.xlu0.c.b16.cont [2/8] 0, 128
    %4102 = vxpose.xlu0.c.b16.cont [3/8] 0, 128
    %4103 = vxpose.xlu0.c.b16.cont [4/8] 0, 128
    %4104 = vxpose.xlu0.c.b16.cont [5/8] 0, 128
    %4105 = vxpose.xlu0.c.b16.cont [6/8] 0, 128
    %4106 = vxpose.xlu0.c.b16.cont [7/8] 0, 128
    %4107 = vxpose.xlu0.c.b16.end [8/8] 0, 128
    %v4108 = vpop.trf.xlu0
    %v4109 = vpop.trf.xlu0
    %v4110 = vpop.trf.xlu0
    %v4111 = vpop.trf.xlu0
    %v4112 = vpop.trf.xlu0
    %v4113 = vpop.trf.xlu0
    %v4114 = vpop.trf.xlu0
    %v4115 = vpop.trf.xlu0
    %4116 = vxpose.xlu0.c.b16.start [1/8] %v3213, 128
    %4117 = vxpose.xlu0.c.b16.cont [2/8] 0, 128
    %4118 = vxpose.xlu0.c.b16.cont [3/8] 0, 128
    %4119 = vxpose.xlu0.c.b16.cont [4/8] 0, 128
    %4120 = vxpose.xlu0.c.b16.cont [5/8] 0, 128
    %4121 = vxpose.xlu0.c.b16.cont [6/8] 0, 128
    %4122 = vxpose.xlu0.c.b16.cont [7/8] 0, 128
    %4123 = vxpose.xlu0.c.b16.end [8/8] 0, 128
    %v4124 = vpop.trf.xlu0
    %v4125 = vpop.trf.xlu0
    %v4126 = vpop.trf.xlu0
    %v4127 = vpop.trf.xlu0
    %v4128 = vpop.trf.xlu0
    %v4129 = vpop.trf.xlu0
    %v4130 = vpop.trf.xlu0
    %v4131 = vpop.trf.xlu0
    %4132 = vxpose.xlu0.c.b16.start [1/8] %v3214, 128
    %4133 = vxpose.xlu0.c.b16.cont [2/8] 0, 128
    %4134 = vxpose.xlu0.c.b16.cont [3/8] 0, 128
    %4135 = vxpose.xlu0.c.b16.cont [4/8] 0, 128
    %4136 = vxpose.xlu0.c.b16.cont [5/8] 0, 128
    %4137 = vxpose.xlu0.c.b16.cont [6/8] 0, 128
    %4138 = vxpose.xlu0.c.b16.cont [7/8] 0, 128
    %4139 = vxpose.xlu0.c.b16.end [8/8] 0, 128
    %v4140 = vpop.trf.xlu0
    %v4141 = vpop.trf.xlu0
    %v4142 = vpop.trf.xlu0
    %v4143 = vpop.trf.xlu0
    %v4144 = vpop.trf.xlu0
    %v4145 = vpop.trf.xlu0
    %v4146 = vpop.trf.xlu0
    %v4147 = vpop.trf.xlu0
    %4148 = vxpose.xlu0.c.b16.start [1/8] %v3215, 128
    %4149 = vxpose.xlu0.c.b16.cont [2/8] 0, 128
    %4150 = vxpose.xlu0.c.b16.cont [3/8] 0, 128
    %4151 = vxpose.xlu0.c.b16.cont [4/8] 0, 128
    %4152 = vxpose.xlu0.c.b16.cont [5/8] 0, 128
    %4153 = vxpose.xlu0.c.b16.cont [6/8] 0, 128
    %4154 = vxpose.xlu0.c.b16.cont [7/8] 0, 128
    %4155 = vxpose.xlu0.c.b16.end [8/8] 0, 128
    %v4156 = vpop.trf.xlu0
    %v4157 = vpop.trf.xlu0
    %v4158 = vpop.trf.xlu0
    %v4159 = vpop.trf.xlu0
    %v4160 = vpop.trf.xlu0
    %v4161 = vpop.trf.xlu0
    %v4162 = vpop.trf.xlu0
    %v4163 = vpop.trf.xlu0
    %4164 = vxpose.xlu0.c.b16.start [1/8] %v3216, 128
    %4165 = vxpose.xlu0.c.b16.cont [2/8] 0, 128
    %4166 = vxpose.xlu0.c.b16.cont [3/8] 0, 128
    %4167 = vxpose.xlu0.c.b16.cont [4/8] 0, 128
    %4168 = vxpose.xlu0.c.b16.cont [5/8] 0, 128
    %4169 = vxpose.xlu0.c.b16.cont [6/8] 0, 128
    %4170 = vxpose.xlu0.c.b16.cont [7/8] 0, 128
    %4171 = vxpose.xlu0.c.b16.end [8/8] 0, 128
    %v4172 = vpop.trf.xlu0
    %v4173 = vpop.trf.xlu0
    %v4174 = vpop.trf.xlu0
    %v4175 = vpop.trf.xlu0
    %v4176 = vpop.trf.xlu0
    %v4177 = vpop.trf.xlu0
    %v4178 = vpop.trf.xlu0
    %v4179 = vpop.trf.xlu0
    %4180 = vxpose.xlu0.c.b16.start [1/8] %v3217, 128
    %4181 = vxpose.xlu0.c.b16.cont [2/8] 0, 128
    %4182 = vxpose.xlu0.c.b16.cont [3/8] 0, 128
    %4183 = vxpose.xlu0.c.b16.cont [4/8] 0, 128
    %4184 = vxpose.xlu0.c.b16.cont [5/8] 0, 128
    %4185 = vxpose.xlu0.c.b16.cont [6/8] 0, 128
    %4186 = vxpose.xlu0.c.b16.cont [7/8] 0, 128
    %4187 = vxpose.xlu0.c.b16.end [8/8] 0, 128
    %v4188 = vpop.trf.xlu0
    %v4189 = vpop.trf.xlu0
    %v4190 = vpop.trf.xlu0
    %v4191 = vpop.trf.xlu0
    %v4192 = vpop.trf.xlu0
    %v4193 = vpop.trf.xlu0
    %v4194 = vpop.trf.xlu0
    %v4195 = vpop.trf.xlu0
    %4196 = vxpose.xlu0.c.b16.start [1/8] %v3218, 128
    %4197 = vxpose.xlu0.c.b16.cont [2/8] 0, 128
    %4198 = vxpose.xlu0.c.b16.cont [3/8] 0, 128
    %4199 = vxpose.xlu0.c.b16.cont [4/8] 0, 128
    %4200 = vxpose.xlu0.c.b16.cont [5/8] 0, 128
    %4201 = vxpose.xlu0.c.b16.cont [6/8] 0, 128
    %4202 = vxpose.xlu0.c.b16.cont [7/8] 0, 128
    %4203 = vxpose.xlu0.c.b16.end [8/8] 0, 128
    %v4204 = vpop.trf.xlu0
    %v4205 = vpop.trf.xlu0
    %v4206 = vpop.trf.xlu0
    %v4207 = vpop.trf.xlu0
    %v4208 = vpop.trf.xlu0
    %v4209 = vpop.trf.xlu0
    %v4210 = vpop.trf.xlu0
    %v4211 = vpop.trf.xlu0
    %4212 = vxpose.xlu0.c.b16.start [1/8] %v3219, 128
    %4213 = vxpose.xlu0.c.b16.cont [2/8] 0, 128
    %4214 = vxpose.xlu0.c.b16.cont [3/8] 0, 128
    %4215 = vxpose.xlu0.c.b16.cont [4/8] 0, 128
    %4216 = vxpose.xlu0.c.b16.cont [5/8] 0, 128
    %4217 = vxpose.xlu0.c.b16.cont [6/8] 0, 128
    %4218 = vxpose.xlu0.c.b16.cont [7/8] 0, 128
    %4219 = vxpose.xlu0.c.b16.end [8/8] 0, 128
    %v4220 = vpop.trf.xlu0
    %v4221 = vpop.trf.xlu0
    %v4222 = vpop.trf.xlu0
    %v4223 = vpop.trf.xlu0
    %v4224 = vpop.trf.xlu0
    %v4225 = vpop.trf.xlu0
    %v4226 = vpop.trf.xlu0
    %v4227 = vpop.trf.xlu0
    %4228 = vxpose.xlu0.c.b16.start [1/8] %v3220, 128
    %4229 = vxpose.xlu0.c.b16.cont [2/8] 0, 128
    %4230 = vxpose.xlu0.c.b16.cont [3/8] 0, 128
    %4231 = vxpose.xlu0.c.b16.cont [4/8] 0, 128
    %4232 = vxpose.xlu0.c.b16.cont [5/8] 0, 128
    %4233 = vxpose.xlu0.c.b16.cont [6/8] 0, 128
    %4234 = vxpose.xlu0.c.b16.cont [7/8] 0, 128
    %4235 = vxpose.xlu0.c.b16.end [8/8] 0, 128
    %v4236 = vpop.trf.xlu0
    %v4237 = vpop.trf.xlu0
    %v4238 = vpop.trf.xlu0
    %v4239 = vpop.trf.xlu0
    %v4240 = vpop.trf.xlu0
    %v4241 = vpop.trf.xlu0
    %v4242 = vpop.trf.xlu0
    %v4243 = vpop.trf.xlu0
    %4244 = vxpose.xlu0.c.b16.start [1/8] %v3221, 128
    %4245 = vxpose.xlu0.c.b16.cont [2/8] 0, 128
    %4246 = vxpose.xlu0.c.b16.cont [3/8] 0, 128
    %4247 = vxpose.xlu0.c.b16.cont [4/8] 0, 128
    %4248 = vxpose.xlu0.c.b16.cont [5/8] 0, 128
    %4249 = vxpose.xlu0.c.b16.cont [6/8] 0, 128
    %4250 = vxpose.xlu0.c.b16.cont [7/8] 0, 128
    %4251 = vxpose.xlu0.c.b16.end [8/8] 0, 128
    %v4252 = vpop.trf.xlu0
    %v4253 = vpop.trf.xlu0
    %v4254 = vpop.trf.xlu0
    %v4255 = vpop.trf.xlu0
    %v4256 = vpop.trf.xlu0
    %v4257 = vpop.trf.xlu0
    %v4258 = vpop.trf.xlu0
    %v4259 = vpop.trf.xlu0
    %4260 = vxpose.xlu0.c.b16.start [1/8] %v3222, 128
    %4261 = vxpose.xlu0.c.b16.cont [2/8] 0, 128
    %4262 = vxpose.xlu0.c.b16.cont [3/8] 0, 128
    %4263 = vxpose.xlu0.c.b16.cont [4/8] 0, 128
    %4264 = vxpose.xlu0.c.b16.cont [5/8] 0, 128
    %4265 = vxpose.xlu0.c.b16.cont [6/8] 0, 128
    %4266 = vxpose.xlu0.c.b16.cont [7/8] 0, 128
    %4267 = vxpose.xlu0.c.b16.end [8/8] 0, 128
    %v4268 = vpop.trf.xlu0
    %v4269 = vpop.trf.xlu0
    %v4270 = vpop.trf.xlu0
    %v4271 = vpop.trf.xlu0
    %v4272 = vpop.trf.xlu0
    %v4273 = vpop.trf.xlu0
    %v4274 = vpop.trf.xlu0
    %v4275 = vpop.trf.xlu0
    %4276 = vxpose.xlu0.c.b16.start [1/8] %v3223, 128
    %4277 = vxpose.xlu0.c.b16.cont [2/8] 0, 128
    %4278 = vxpose.xlu0.c.b16.cont [3/8] 0, 128
    %4279 = vxpose.xlu0.c.b16.cont [4/8] 0, 128
    %4280 = vxpose.xlu0.c.b16.cont [5/8] 0, 128
    %4281 = vxpose.xlu0.c.b16.cont [6/8] 0, 128
    %4282 = vxpose.xlu0.c.b16.cont [7/8] 0, 128
    %4283 = vxpose.xlu0.c.b16.end [8/8] 0, 128
    %v4284 = vpop.trf.xlu0
    %v4285 = vpop.trf.xlu0
    %v4286 = vpop.trf.xlu0
    %v4287 = vpop.trf.xlu0
    %v4288 = vpop.trf.xlu0
    %v4289 = vpop.trf.xlu0
    %v4290 = vpop.trf.xlu0
    %v4291 = vpop.trf.xlu0
    %4292 = vxpose.xlu0.c.b16.start [1/8] %v3224, 128
    %4293 = vxpose.xlu0.c.b16.cont [2/8] 0, 128
    %4294 = vxpose.xlu0.c.b16.cont [3/8] 0, 128
    %4295 = vxpose.xlu0.c.b16.cont [4/8] 0, 128
    %4296 = vxpose.xlu0.c.b16.cont [5/8] 0, 128
    %4297 = vxpose.xlu0.c.b16.cont [6/8] 0, 128
    %4298 = vxpose.xlu0.c.b16.cont [7/8] 0, 128
    %4299 = vxpose.xlu0.c.b16.end [8/8] 0, 128
    %v4300 = vpop.trf.xlu0
    %v4301 = vpop.trf.xlu0
    %v4302 = vpop.trf.xlu0
    %v4303 = vpop.trf.xlu0
    %v4304 = vpop.trf.xlu0
    %v4305 = vpop.trf.xlu0
    %v4306 = vpop.trf.xlu0
    %v4307 = vpop.trf.xlu0
    %4308 = vxpose.xlu0.c.b16.start [1/8] %v3225, 128
    %4309 = vxpose.xlu0.c.b16.cont [2/8] 0, 128
    %4310 = vxpose.xlu0.c.b16.cont [3/8] 0, 128
    %4311 = vxpose.xlu0.c.b16.cont [4/8] 0, 128
    %4312 = vxpose.xlu0.c.b16.cont [5/8] 0, 128
    %4313 = vxpose.xlu0.c.b16.cont [6/8] 0, 128
    %4314 = vxpose.xlu0.c.b16.cont [7/8] 0, 128
    %4315 = vxpose.xlu0.c.b16.end [8/8] 0, 128
    %v4316 = vpop.trf.xlu0
    %v4317 = vpop.trf.xlu0
    %v4318 = vpop.trf.xlu0
    %v4319 = vpop.trf.xlu0
    %v4320 = vpop.trf.xlu0
    %v4321 = vpop.trf.xlu0
    %v4322 = vpop.trf.xlu0
    %v4323 = vpop.trf.xlu0
    %4324 = vxpose.xlu0.c.b16.start [1/8] %v3226, 128
    %4325 = vxpose.xlu0.c.b16.cont [2/8] 0, 128
    %4326 = vxpose.xlu0.c.b16.cont [3/8] 0, 128
    %4327 = vxpose.xlu0.c.b16.cont [4/8] 0, 128
    %4328 = vxpose.xlu0.c.b16.cont [5/8] 0, 128
    %4329 = vxpose.xlu0.c.b16.cont [6/8] 0, 128
    %4330 = vxpose.xlu0.c.b16.cont [7/8] 0, 128
    %4331 = vxpose.xlu0.c.b16.end [8/8] 0, 128
    %v4332 = vpop.trf.xlu0
    %v4333 = vpop.trf.xlu0
    %v4334 = vpop.trf.xlu0
    %v4335 = vpop.trf.xlu0
    %v4336 = vpop.trf.xlu0
    %v4337 = vpop.trf.xlu0
    %v4338 = vpop.trf.xlu0
    %v4339 = vpop.trf.xlu0
    %4340 = vxpose.xlu0.c.b16.start [1/8] %v3227, 128
    %4341 = vxpose.xlu0.c.b16.cont [2/8] 0, 128
    %4342 = vxpose.xlu0.c.b16.cont [3/8] 0, 128
    %4343 = vxpose.xlu0.c.b16.cont [4/8] 0, 128
    %4344 = vxpose.xlu0.c.b16.cont [5/8] 0, 128
    %4345 = vxpose.xlu0.c.b16.cont [6/8] 0, 128
    %4346 = vxpose.xlu0.c.b16.cont [7/8] 0, 128
    %4347 = vxpose.xlu0.c.b16.end [8/8] 0, 128
    %v4348 = vpop.trf.xlu0
    %v4349 = vpop.trf.xlu0
    %v4350 = vpop.trf.xlu0
    %v4351 = vpop.trf.xlu0
    %v4352 = vpop.trf.xlu0
    %v4353 = vpop.trf.xlu0
    %v4354 = vpop.trf.xlu0
    %v4355 = vpop.trf.xlu0
    %v4356 = vrot.slane %v4172, 4
    %v4357 = vsel %vm609, %v4356, %v4108
    %v4359 = vunpack.c.l.s4 1983009808
    %v4360 = vunpack.c.0.s8 %v4359
    %v4361 = vperm.slane %v4357, %v4360
    %v4362 = vrot.slane %v4204, 4
    %v4363 = vsel %vm609, %v4362, %v4140
    %v4365 = vunpack.c.l.s4 1983009808
    %v4366 = vunpack.c.0.s8 %v4365
    %v4367 = vperm.slane %v4363, %v4366
    %v4368 = vrot.slane %v4300, 4
    %v4369 = vsel %vm609, %v4368, %v4236
    %v4371 = vunpack.c.l.s4 1983009808
    %v4372 = vunpack.c.0.s8 %v4371
    %v4373 = vperm.slane %v4369, %v4372
    %v4374 = vrot.slane %v4332, 4
    %v4375 = vsel %vm609, %v4374, %v4268
    %v4377 = vunpack.c.l.s4 1983009808
    %v4378 = vunpack.c.0.s8 %v4377
    %v4379 = vperm.slane %v4375, %v4378
    %v4380 = vrot.slane %v4367, 4
    %v4381 = vsel %vm609, %v4380, %v4361
    %v4382 = vrot.slane %v4361, 4
    %v4383 = vsel %vm609, %v4367, %v4382
    %v4385 = vunpack.c.l.s4 1934713408
    %v4386 = vunpack.c.0.s8 %v4385
    %v4387 = vperm.slane %v4381, %v4386
    %v4389 = vunpack.c.l.s4 1934713408
    %v4390 = vunpack.c.0.s8 %v4389
    %v4391 = vperm.slane %v4383, %v4390
    %v4392 = vrot.slane %v4379, 4
    %v4393 = vsel %vm609, %v4392, %v4373
    %v4394 = vrot.slane %v4373, 4
    %v4395 = vsel %vm609, %v4379, %v4394
    %v4397 = vunpack.c.l.s4 1934713408
    %v4398 = vunpack.c.0.s8 %v4397
    %v4399 = vperm.slane %v4393, %v4398
    %v4401 = vunpack.c.l.s4 1934713408
    %v4402 = vunpack.c.0.s8 %v4401
    %v4403 = vperm.slane %v4395, %v4402
    %v4404 = vrot.slane %v4399, 4
    %v4405 = vsel %vm609, %v4404, %v4387
    %v4406 = vrot.slane %v4387, 4
    %v4407 = vsel %vm609, %v4399, %v4406
    %v4408 = vrot.slane %v4403, 4
    %v4409 = vsel %vm609, %v4408, %v4391
    %v4410 = vrot.slane %v4391, 4
    %v4411 = vsel %vm609, %v4403, %v4410
    %v4412 = vrot.slane %v4188, 4
    %v4413 = vsel %vm609, %v4412, %v4124
    %v4415 = vunpack.c.l.s4 1983009808
    %v4416 = vunpack.c.0.s8 %v4415
    %v4417 = vperm.slane %v4413, %v4416
    %v4418 = vrot.slane %v4220, 4
    %v4419 = vsel %vm609, %v4418, %v4156
    %v4421 = vunpack.c.l.s4 1983009808
    %v4422 = vunpack.c.0.s8 %v4421
    %v4423 = vperm.slane %v4419, %v4422
    %v4424 = vrot.slane %v4316, 4
    %v4425 = vsel %vm609, %v4424, %v4252
    %v4427 = vunpack.c.l.s4 1983009808
    %v4428 = vunpack.c.0.s8 %v4427
    %v4429 = vperm.slane %v4425, %v4428
    %v4430 = vrot.slane %v4348, 4
    %v4431 = vsel %vm609, %v4430, %v4284
    %v4433 = vunpack.c.l.s4 1983009808
    %v4434 = vunpack.c.0.s8 %v4433
    %v4435 = vperm.slane %v4431, %v4434
    %v4436 = vrot.slane %v4423, 4
    %v4437 = vsel %vm609, %v4436, %v4417
    %v4438 = vrot.slane %v4417, 4
    %v4439 = vsel %vm609, %v4423, %v4438
    %v4441 = vunpack.c.l.s4 1934713408
    %v4442 = vunpack.c.0.s8 %v4441
    %v4443 = vperm.slane %v4437, %v4442
    %v4445 = vunpack.c.l.s4 1934713408
    %v4446 = vunpack.c.0.s8 %v4445
    %v4447 = vperm.slane %v4439, %v4446
    %v4448 = vrot.slane %v4435, 4
    %v4449 = vsel %vm609, %v4448, %v4429
    %v4450 = vrot.slane %v4429, 4
    %v4451 = vsel %vm609, %v4435, %v4450
    %v4453 = vunpack.c.l.s4 1934713408
    %v4454 = vunpack.c.0.s8 %v4453
    %v4455 = vperm.slane %v4449, %v4454
    %v4457 = vunpack.c.l.s4 1934713408
    %v4458 = vunpack.c.0.s8 %v4457
    %v4459 = vperm.slane %v4451, %v4458
    %v4460 = vrot.slane %v4455, 4
    %v4461 = vsel %vm609, %v4460, %v4443
    %v4462 = vrot.slane %v4443, 4
    %v4463 = vsel %vm609, %v4455, %v4462
    %v4464 = vrot.slane %v4459, 4
    %v4465 = vsel %vm609, %v4464, %v4447
    %v4466 = vrot.slane %v4447, 4
    %v4467 = vsel %vm609, %v4459, %v4466
    %v4470 = vpack.i.b16 %v4461, %v4405
    %v4472 = vshrl.u32 %v4405, 16
    %v4473 = vshrl.u32 %v4461, 16
    %v4474 = vpack.i.b16 %v4473, %v4472
    %v4478 = vpack.i.b16 %v4463, %v4407
    %v4480 = vshrl.u32 %v4407, 16
    %v4481 = vshrl.u32 %v4463, 16
    %v4482 = vpack.i.b16 %v4481, %v4480
    %v4486 = vpack.i.b16 %v4465, %v4409
    %v4488 = vshrl.u32 %v4409, 16
    %v4489 = vshrl.u32 %v4465, 16
    %v4490 = vpack.i.b16 %v4489, %v4488
    %v4494 = vpack.i.b16 %v4467, %v4411
    %v4496 = vshrl.u32 %v4411, 16
    %v4497 = vshrl.u32 %v4467, 16
    %v4498 = vpack.i.b16 %v4497, %v4496
    %4500 = vxpose.xlu0.c.b16.start [1/8] %v4470, 128
    %4501 = vxpose.xlu0.c.b16.cont [2/8] 0, 128
    %4502 = vxpose.xlu0.c.b16.cont [3/8] 0, 128
    %4503 = vxpose.xlu0.c.b16.cont [4/8] 0, 128
    %4504 = vxpose.xlu0.c.b16.cont [5/8] 0, 128
    %4505 = vxpose.xlu0.c.b16.cont [6/8] 0, 128
    %4506 = vxpose.xlu0.c.b16.cont [7/8] 0, 128
    %4507 = vxpose.xlu0.c.b16.end [8/8] 0, 128
    %v4508 = vpop.trf.xlu0
    %v4509 = vpop.trf.xlu0
    %v4510 = vpop.trf.xlu0
    %v4511 = vpop.trf.xlu0
    %v4512 = vpop.trf.xlu0
    %v4513 = vpop.trf.xlu0
    %v4514 = vpop.trf.xlu0
    %v4515 = vpop.trf.xlu0
    %4516 = vxpose.xlu0.c.b16.start [1/8] %v4474, 128
    %4517 = vxpose.xlu0.c.b16.cont [2/8] 0, 128
    %4518 = vxpose.xlu0.c.b16.cont [3/8] 0, 128
    %4519 = vxpose.xlu0.c.b16.cont [4/8] 0, 128
    %4520 = vxpose.xlu0.c.b16.cont [5/8] 0, 128
    %4521 = vxpose.xlu0.c.b16.cont [6/8] 0, 128
    %4522 = vxpose.xlu0.c.b16.cont [7/8] 0, 128
    %4523 = vxpose.xlu0.c.b16.end [8/8] 0, 128
    %v4524 = vpop.trf.xlu0
    %v4525 = vpop.trf.xlu0
    %v4526 = vpop.trf.xlu0
    %v4527 = vpop.trf.xlu0
    %v4528 = vpop.trf.xlu0
    %v4529 = vpop.trf.xlu0
    %v4530 = vpop.trf.xlu0
    %v4531 = vpop.trf.xlu0
    %4532 = vxpose.xlu0.c.b16.start [1/8] %v4478, 128
    %4533 = vxpose.xlu0.c.b16.cont [2/8] 0, 128
    %4534 = vxpose.xlu0.c.b16.cont [3/8] 0, 128
    %4535 = vxpose.xlu0.c.b16.cont [4/8] 0, 128
    %4536 = vxpose.xlu0.c.b16.cont [5/8] 0, 128
    %4537 = vxpose.xlu0.c.b16.cont [6/8] 0, 128
    %4538 = vxpose.xlu0.c.b16.cont [7/8] 0, 128
    %4539 = vxpose.xlu0.c.b16.end [8/8] 0, 128
    %v4540 = vpop.trf.xlu0
    %v4541 = vpop.trf.xlu0
    %v4542 = vpop.trf.xlu0
    %v4543 = vpop.trf.xlu0
    %v4544 = vpop.trf.xlu0
    %v4545 = vpop.trf.xlu0
    %v4546 = vpop.trf.xlu0
    %v4547 = vpop.trf.xlu0
    %4548 = vxpose.xlu0.c.b16.start [1/8] %v4482, 128
    %4549 = vxpose.xlu0.c.b16.cont [2/8] 0, 128
    %4550 = vxpose.xlu0.c.b16.cont [3/8] 0, 128
    %4551 = vxpose.xlu0.c.b16.cont [4/8] 0, 128
    %4552 = vxpose.xlu0.c.b16.cont [5/8] 0, 128
    %4553 = vxpose.xlu0.c.b16.cont [6/8] 0, 128
    %4554 = vxpose.xlu0.c.b16.cont [7/8] 0, 128
    %4555 = vxpose.xlu0.c.b16.end [8/8] 0, 128
    %v4556 = vpop.trf.xlu0
    %v4557 = vpop.trf.xlu0
    %v4558 = vpop.trf.xlu0
    %v4559 = vpop.trf.xlu0
    %v4560 = vpop.trf.xlu0
    %v4561 = vpop.trf.xlu0
    %v4562 = vpop.trf.xlu0
    %v4563 = vpop.trf.xlu0
    %4564 = vxpose.xlu0.c.b16.start [1/8] %v4486, 128
    %4565 = vxpose.xlu0.c.b16.cont [2/8] 0, 128
    %4566 = vxpose.xlu0.c.b16.cont [3/8] 0, 128
    %4567 = vxpose.xlu0.c.b16.cont [4/8] 0, 128
    %4568 = vxpose.xlu0.c.b16.cont [5/8] 0, 128
    %4569 = vxpose.xlu0.c.b16.cont [6/8] 0, 128
    %4570 = vxpose.xlu0.c.b16.cont [7/8] 0, 128
    %4571 = vxpose.xlu0.c.b16.end [8/8] 0, 128
    %v4572 = vpop.trf.xlu0
    %v4573 = vpop.trf.xlu0
    %v4574 = vpop.trf.xlu0
    %v4575 = vpop.trf.xlu0
    %v4576 = vpop.trf.xlu0
    %v4577 = vpop.trf.xlu0
    %v4578 = vpop.trf.xlu0
    %v4579 = vpop.trf.xlu0
    %4580 = vxpose.xlu0.c.b16.start [1/8] %v4490, 128
    %4581 = vxpose.xlu0.c.b16.cont [2/8] 0, 128
    %4582 = vxpose.xlu0.c.b16.cont [3/8] 0, 128
    %4583 = vxpose.xlu0.c.b16.cont [4/8] 0, 128
    %4584 = vxpose.xlu0.c.b16.cont [5/8] 0, 128
    %4585 = vxpose.xlu0.c.b16.cont [6/8] 0, 128
    %4586 = vxpose.xlu0.c.b16.cont [7/8] 0, 128
    %4587 = vxpose.xlu0.c.b16.end [8/8] 0, 128
    %v4588 = vpop.trf.xlu0
    %v4589 = vpop.trf.xlu0
    %v4590 = vpop.trf.xlu0
    %v4591 = vpop.trf.xlu0
    %v4592 = vpop.trf.xlu0
    %v4593 = vpop.trf.xlu0
    %v4594 = vpop.trf.xlu0
    %v4595 = vpop.trf.xlu0
    %4596 = vxpose.xlu0.c.b16.start [1/8] %v4494, 128
    %4597 = vxpose.xlu0.c.b16.cont [2/8] 0, 128
    %4598 = vxpose.xlu0.c.b16.cont [3/8] 0, 128
    %4599 = vxpose.xlu0.c.b16.cont [4/8] 0, 128
    %4600 = vxpose.xlu0.c.b16.cont [5/8] 0, 128
    %4601 = vxpose.xlu0.c.b16.cont [6/8] 0, 128
    %4602 = vxpose.xlu0.c.b16.cont [7/8] 0, 128
    %4603 = vxpose.xlu0.c.b16.end [8/8] 0, 128
    %v4604 = vpop.trf.xlu0
    %v4605 = vpop.trf.xlu0
    %v4606 = vpop.trf.xlu0
    %v4607 = vpop.trf.xlu0
    %v4608 = vpop.trf.xlu0
    %v4609 = vpop.trf.xlu0
    %v4610 = vpop.trf.xlu0
    %v4611 = vpop.trf.xlu0
    %4612 = vxpose.xlu0.c.b16.start [1/8] %v4498, 128
    %4613 = vxpose.xlu0.c.b16.cont [2/8] 0, 128
    %4614 = vxpose.xlu0.c.b16.cont [3/8] 0, 128
    %4615 = vxpose.xlu0.c.b16.cont [4/8] 0, 128
    %4616 = vxpose.xlu0.c.b16.cont [5/8] 0, 128
    %4617 = vxpose.xlu0.c.b16.cont [6/8] 0, 128
    %4618 = vxpose.xlu0.c.b16.cont [7/8] 0, 128
    %4619 = vxpose.xlu0.c.b16.end [8/8] 0, 128
    %v4620 = vpop.trf.xlu0
    %v4621 = vpop.trf.xlu0
    %v4622 = vpop.trf.xlu0
    %v4623 = vpop.trf.xlu0
    %v4624 = vpop.trf.xlu0
    %v4625 = vpop.trf.xlu0
    %v4626 = vpop.trf.xlu0
    %v4627 = vpop.trf.xlu0
    %v4628 = vrot.slane %v4572, 4
    %v4629 = vsel %vm609, %v4628, %v4508
    %v4631 = vunpack.c.l.s4 1983009808
    %v4632 = vunpack.c.0.s8 %v4631
    %v4633 = vperm.slane %v4629, %v4632
    %v4634 = vrot.slane %v4604, 4
    %v4635 = vsel %vm609, %v4634, %v4540
    %v4637 = vunpack.c.l.s4 1983009808
    %v4638 = vunpack.c.0.s8 %v4637
    %v4639 = vperm.slane %v4635, %v4638
    %v4640 = vrot.slane %v4639, 4
    %v4641 = vsel %vm609, %v4640, %v4633
    %v4643 = vunpack.c.l.s4 1934713408
    %v4644 = vunpack.c.0.s8 %v4643
    %v4645 = vperm.slane %v4641, %v4644
    %v4646 = vrot.slane %v4645, 4
    %v4647 = vsel %vm609, 0, %v4646
    %v4648 = vrot.slane %v4588, 4
    %v4649 = vsel %vm609, %v4648, %v4524
    %v4651 = vunpack.c.l.s4 1983009808
    %v4652 = vunpack.c.0.s8 %v4651
    %v4653 = vperm.slane %v4649, %v4652
    %v4654 = vrot.slane %v4620, 4
    %v4655 = vsel %vm609, %v4654, %v4556
    %v4657 = vunpack.c.l.s4 1983009808
    %v4658 = vunpack.c.0.s8 %v4657
    %v4659 = vperm.slane %v4655, %v4658
    %v4660 = vrot.slane %v4659, 4
    %v4661 = vsel %vm609, %v4660, %v4653
    %v4663 = vunpack.c.l.s4 1934713408
    %v4664 = vunpack.c.0.s8 %v4663
    %v4665 = vperm.slane %v4661, %v4664
    %v4666 = vrot.slane %v4665, 4
    %v4667 = vsel %vm609, 0, %v4666
    %v4670 = vpack.i.b16 %v4665, %v4645
    %v4671 = vshrl.u32 %v4645, 16
    %v4672 = vshrl.u32 %v4665, 16
    %v4673 = vpack.i.b16 %v4672, %v4671
    %v4676 = vpack.i.b16 %v4667, %v4647
    %v4677 = vshrl.u32 %v4647, 16
    %v4678 = vshrl.u32 %v4667, 16
    %v4679 = vpack.i.b16 %v4678, %v4677
    %v4682 = vunpack.c.l.b16 %v4092
    %v4683 = vunpack.c.l.b16 %v4093
    %v4684 = vpack.c.b16 %v4683, %v4682
    %v4686 = vsel %vm1387, %v4670, 0
    %v4689 = vsel %vm1387, %v4684, 0
    %4691 = vmatpush.bf16.xpose.msra.mxu0 0
    %4692 = vmatpush.bf16.xpose.msra.mxu0 0
    %4693 = vmatpush.bf16.xpose.msra.mxu0 0
    %4694 = vmatpush.bf16.xpose.msra.mxu0 0
    %4695 = vmatpush.bf16.xpose.msra.mxu0 0
    %4696 = vmatpush.bf16.xpose.msra.mxu0 0
    %4697 = vmatpush.bf16.xpose.msra.mxu0 0
    %4698 = vmatpush.bf16.xpose.msra.mxu0 %v4689
    %4699 = vmatmul.bf16.gmra.mxu0 %v4686
    %v4700 = vpop.f32.mrf.mxu0
    %v4701 = vadd.f32 0.0, %v4700
    %v4702 = vpop.f32.mrf.mxu0
    %4703 = vdwg.mxu0
    %v4706 = vunpack.c.l.b16 %v4094
    %v4707 = vunpack.c.l.b16 %v4095
    %v4708 = vpack.c.b16 %v4707, %v4706
    %v4710 = vsel %vm1387, %v4673, 0
    %v4713 = vsel %vm1387, %v4708, 0
    %4715 = vmatpush.bf16.xpose.msra.mxu0 0
    %4716 = vmatpush.bf16.xpose.msra.mxu0 0
    %4717 = vmatpush.bf16.xpose.msra.mxu0 0
    %4718 = vmatpush.bf16.xpose.msra.mxu0 0
    %4719 = vmatpush.bf16.xpose.msra.mxu0 0
    %4720 = vmatpush.bf16.xpose.msra.mxu0 0
    %4721 = vmatpush.bf16.xpose.msra.mxu0 0
    %4722 = vmatpush.bf16.xpose.msra.mxu0 %v4713
    %4723 = vmatmul.bf16.gmra.mxu0 %v4710
    %v4724 = vpop.f32.mrf.mxu0
    %v4725 = vadd.f32 0.0, %v4724
    %v4726 = vpop.f32.mrf.mxu0
    %4727 = vdwg.mxu0
    %v4730 = vunpack.c.l.b16 %v4096
    %v4731 = vunpack.c.l.b16 %v4097
    %v4732 = vpack.c.b16 %v4731, %v4730
    %v4734 = vsel %vm1387, %v4676, 0
    %v4737 = vsel %vm1387, %v4732, 0
    %4739 = vmatpush.bf16.xpose.msra.mxu0 0
    %4740 = vmatpush.bf16.xpose.msra.mxu0 0
    %4741 = vmatpush.bf16.xpose.msra.mxu0 0
    %4742 = vmatpush.bf16.xpose.msra.mxu0 0
    %4743 = vmatpush.bf16.xpose.msra.mxu0 0
    %4744 = vmatpush.bf16.xpose.msra.mxu0 0
    %4745 = vmatpush.bf16.xpose.msra.mxu0 0
    %4746 = vmatpush.bf16.xpose.msra.mxu0 %v4737
    %4747 = vmatmul.bf16.gmra.mxu0 %v4734
    %v4748 = vpop.f32.mrf.mxu0
    %v4749 = vadd.f32 0.0, %v4748
    %v4750 = vpop.f32.mrf.mxu0
    %4751 = vdwg.mxu0
    %v4754 = vunpack.c.l.b16 %v4098
    %v4755 = vunpack.c.l.b16 %v4099
    %v4756 = vpack.c.b16 %v4755, %v4754
    %v4758 = vsel %vm1387, %v4679, 0
    %v4761 = vsel %vm1387, %v4756, 0
    %4763 = vmatpush.bf16.xpose.msra.mxu0 0
    %4764 = vmatpush.bf16.xpose.msra.mxu0 0
    %4765 = vmatpush.bf16.xpose.msra.mxu0 0
    %4766 = vmatpush.bf16.xpose.msra.mxu0 0
    %4767 = vmatpush.bf16.xpose.msra.mxu0 0
    %4768 = vmatpush.bf16.xpose.msra.mxu0 0
    %4769 = vmatpush.bf16.xpose.msra.mxu0 0
    %4770 = vmatpush.bf16.xpose.msra.mxu0 %v4761
    %4771 = vmatmul.bf16.gmra.mxu0 %v4758
    %v4772 = vpop.f32.mrf.mxu0
    %v4773 = vadd.f32 0.0, %v4772
    %v4774 = vpop.f32.mrf.mxu0
    %4775 = vdwg.mxu0
    %4776 = vxpose.xlu0.b32.start [1/16] %v4701, 128
    %4777 = vxpose.xlu0.b32.cont [2/16] 0.0, 128
    %4778 = vxpose.xlu0.b32.cont [3/16] 0.0, 128
    %4779 = vxpose.xlu0.b32.cont [4/16] 0.0, 128
    %4780 = vxpose.xlu0.b32.cont [5/16] 0.0, 128
    %4781 = vxpose.xlu0.b32.cont [6/16] 0.0, 128
    %4782 = vxpose.xlu0.b32.cont [7/16] 0.0, 128
    %4783 = vxpose.xlu0.b32.cont [8/16] 0.0, 128
    %4784 = vxpose.xlu0.b32.cont [9/16] 0.0, 128
    %4785 = vxpose.xlu0.b32.cont [10/16] 0.0, 128
    %4786 = vxpose.xlu0.b32.cont [11/16] 0.0, 128
    %4787 = vxpose.xlu0.b32.cont [12/16] 0.0, 128
    %4788 = vxpose.xlu0.b32.cont [13/16] 0.0, 128
    %4789 = vxpose.xlu0.b32.cont [14/16] 0.0, 128
    %4790 = vxpose.xlu0.b32.cont [15/16] 0.0, 128
    %4791 = vxpose.xlu0.b32.end [16/16] 0.0, 128
    %v4792 = vpop.trf.xlu0
    %v4793 = vpop.trf.xlu0
    %v4794 = vpop.trf.xlu0
    %v4795 = vpop.trf.xlu0
    %v4796 = vpop.trf.xlu0
    %v4797 = vpop.trf.xlu0
    %v4798 = vpop.trf.xlu0
    %v4799 = vpop.trf.xlu0
    %v4800 = vpop.trf.xlu0
    %v4801 = vpop.trf.xlu0
    %v4802 = vpop.trf.xlu0
    %v4803 = vpop.trf.xlu0
    %v4804 = vpop.trf.xlu0
    %v4805 = vpop.trf.xlu0
    %v4806 = vpop.trf.xlu0
    %v4807 = vpop.trf.xlu0
    %4808 = vxpose.xlu0.b32.start [1/16] %v4725, 128
    %4809 = vxpose.xlu0.b32.cont [2/16] 0.0, 128
    %4810 = vxpose.xlu0.b32.cont [3/16] 0.0, 128
    %4811 = vxpose.xlu0.b32.cont [4/16] 0.0, 128
    %4812 = vxpose.xlu0.b32.cont [5/16] 0.0, 128
    %4813 = vxpose.xlu0.b32.cont [6/16] 0.0, 128
    %4814 = vxpose.xlu0.b32.cont [7/16] 0.0, 128
    %4815 = vxpose.xlu0.b32.cont [8/16] 0.0, 128
    %4816 = vxpose.xlu0.b32.cont [9/16] 0.0, 128
    %4817 = vxpose.xlu0.b32.cont [10/16] 0.0, 128
    %4818 = vxpose.xlu0.b32.cont [11/16] 0.0, 128
    %4819 = vxpose.xlu0.b32.cont [12/16] 0.0, 128
    %4820 = vxpose.xlu0.b32.cont [13/16] 0.0, 128
    %4821 = vxpose.xlu0.b32.cont [14/16] 0.0, 128
    %4822 = vxpose.xlu0.b32.cont [15/16] 0.0, 128
    %4823 = vxpose.xlu0.b32.end [16/16] 0.0, 128
    %v4824 = vpop.trf.xlu0
    %v4825 = vpop.trf.xlu0
    %v4826 = vpop.trf.xlu0
    %v4827 = vpop.trf.xlu0
    %v4828 = vpop.trf.xlu0
    %v4829 = vpop.trf.xlu0
    %v4830 = vpop.trf.xlu0
    %v4831 = vpop.trf.xlu0
    %v4832 = vpop.trf.xlu0
    %v4833 = vpop.trf.xlu0
    %v4834 = vpop.trf.xlu0
    %v4835 = vpop.trf.xlu0
    %v4836 = vpop.trf.xlu0
    %v4837 = vpop.trf.xlu0
    %v4838 = vpop.trf.xlu0
    %v4839 = vpop.trf.xlu0
    %4840 = vxpose.xlu0.b32.start [1/16] %v4749, 128
    %4841 = vxpose.xlu0.b32.cont [2/16] 0.0, 128
    %4842 = vxpose.xlu0.b32.cont [3/16] 0.0, 128
    %4843 = vxpose.xlu0.b32.cont [4/16] 0.0, 128
    %4844 = vxpose.xlu0.b32.cont [5/16] 0.0, 128
    %4845 = vxpose.xlu0.b32.cont [6/16] 0.0, 128
    %4846 = vxpose.xlu0.b32.cont [7/16] 0.0, 128
    %4847 = vxpose.xlu0.b32.cont [8/16] 0.0, 128
    %4848 = vxpose.xlu0.b32.cont [9/16] 0.0, 128
    %4849 = vxpose.xlu0.b32.cont [10/16] 0.0, 128
    %4850 = vxpose.xlu0.b32.cont [11/16] 0.0, 128
    %4851 = vxpose.xlu0.b32.cont [12/16] 0.0, 128
    %4852 = vxpose.xlu0.b32.cont [13/16] 0.0, 128
    %4853 = vxpose.xlu0.b32.cont [14/16] 0.0, 128
    %4854 = vxpose.xlu0.b32.cont [15/16] 0.0, 128
    %4855 = vxpose.xlu0.b32.end [16/16] 0.0, 128
    %v4856 = vpop.trf.xlu0
    %v4857 = vpop.trf.xlu0
    %v4858 = vpop.trf.xlu0
    %v4859 = vpop.trf.xlu0
    %v4860 = vpop.trf.xlu0
    %v4861 = vpop.trf.xlu0
    %v4862 = vpop.trf.xlu0
    %v4863 = vpop.trf.xlu0
    %v4864 = vpop.trf.xlu0
    %v4865 = vpop.trf.xlu0
    %v4866 = vpop.trf.xlu0
    %v4867 = vpop.trf.xlu0
    %v4868 = vpop.trf.xlu0
    %v4869 = vpop.trf.xlu0
    %v4870 = vpop.trf.xlu0
    %v4871 = vpop.trf.xlu0
    %4872 = vxpose.xlu0.b32.start [1/16] %v4773, 128
    %4873 = vxpose.xlu0.b32.cont [2/16] 0.0, 128
    %4874 = vxpose.xlu0.b32.cont [3/16] 0.0, 128
    %4875 = vxpose.xlu0.b32.cont [4/16] 0.0, 128
    %4876 = vxpose.xlu0.b32.cont [5/16] 0.0, 128
    %4877 = vxpose.xlu0.b32.cont [6/16] 0.0, 128
    %4878 = vxpose.xlu0.b32.cont [7/16] 0.0, 128
    %4879 = vxpose.xlu0.b32.cont [8/16] 0.0, 128
    %4880 = vxpose.xlu0.b32.cont [9/16] 0.0, 128
    %4881 = vxpose.xlu0.b32.cont [10/16] 0.0, 128
    %4882 = vxpose.xlu0.b32.cont [11/16] 0.0, 128
    %4883 = vxpose.xlu0.b32.cont [12/16] 0.0, 128
    %4884 = vxpose.xlu0.b32.cont [13/16] 0.0, 128
    %4885 = vxpose.xlu0.b32.cont [14/16] 0.0, 128
    %4886 = vxpose.xlu0.b32.cont [15/16] 0.0, 128
    %4887 = vxpose.xlu0.b32.end [16/16] 0.0, 128
    %v4888 = vpop.trf.xlu0
    %v4889 = vpop.trf.xlu0
    %v4890 = vpop.trf.xlu0
    %v4891 = vpop.trf.xlu0
    %v4892 = vpop.trf.xlu0
    %v4893 = vpop.trf.xlu0
    %v4894 = vpop.trf.xlu0
    %v4895 = vpop.trf.xlu0
    %v4896 = vpop.trf.xlu0
    %v4897 = vpop.trf.xlu0
    %v4898 = vpop.trf.xlu0
    %v4899 = vpop.trf.xlu0
    %v4900 = vpop.trf.xlu0
    %v4901 = vpop.trf.xlu0
    %v4902 = vpop.trf.xlu0
    %v4903 = vpop.trf.xlu0
    %v4904 = vrot.slane %v4856, 4
    %v4905 = vsel %vm176, %v4904, %v4792
    %v4906 = vrot.slane %v4792, 4
    %v4907 = vsel %vm176, %v4856, %v4906
    %v4909 = vunpack.c.l.s4 1983009808
    %v4910 = vunpack.c.0.s8 %v4909
    %v4911 = vperm.slane %v4905, %v4910
    %v4913 = vunpack.c.l.s4 1983009808
    %v4914 = vunpack.c.0.s8 %v4913
    %v4915 = vperm.slane %v4907, %v4914
    %v4916 = vrot.slane %v4888, 4
    %v4917 = vsel %vm176, %v4916, %v4824
    %v4918 = vrot.slane %v4824, 4
    %v4919 = vsel %vm176, %v4888, %v4918
    %v4921 = vunpack.c.l.s4 1983009808
    %v4922 = vunpack.c.0.s8 %v4921
    %v4923 = vperm.slane %v4917, %v4922
    %v4925 = vunpack.c.l.s4 1983009808
    %v4926 = vunpack.c.0.s8 %v4925
    %v4927 = vperm.slane %v4919, %v4926
    %v4928 = vrot.slane %v4923, 4
    %v4929 = vsel %vm176, %v4928, %v4911
    %v4930 = vrot.slane %v4911, 4
    %v4931 = vsel %vm176, %v4923, %v4930
    %v4933 = vunpack.c.l.s4 1934713408
    %v4934 = vunpack.c.0.s8 %v4933
    %v4935 = vperm.slane %v4929, %v4934
    %v4937 = vunpack.c.l.s4 1934713408
    %v4938 = vunpack.c.0.s8 %v4937
    %v4939 = vperm.slane %v4931, %v4938
    %v4940 = vrot.slane %v4927, 4
    %v4941 = vsel %vm176, %v4940, %v4915
    %v4942 = vrot.slane %v4915, 4
    %v4943 = vsel %vm176, %v4927, %v4942
    %v4945 = vunpack.c.l.s4 1934713408
    %v4946 = vunpack.c.0.s8 %v4945
    %v4947 = vperm.slane %v4941, %v4946
    %v4949 = vunpack.c.l.s4 1934713408
    %v4950 = vunpack.c.0.s8 %v4949
    %v4951 = vperm.slane %v4943, %v4950
    %v4952 = vrot.slane %v4935, 4
    %v4953 = vsel %vm176, 0.0, %v4952
    %v4954 = vrot.slane %v4939, 4
    %v4955 = vsel %vm176, 0.0, %v4954
    %v4956 = vrot.slane %v4947, 4
    %v4957 = vsel %vm176, 0.0, %v4956
    %v4958 = vrot.slane %v4951, 4
    %v4959 = vsel %vm176, 0.0, %v4958
    %v4960 = vrot.slane %v4857, 4
    %v4961 = vsel %vm176, %v4960, %v4793
    %v4962 = vrot.slane %v4793, 4
    %v4963 = vsel %vm176, %v4857, %v4962
    %v4965 = vunpack.c.l.s4 1983009808
    %v4966 = vunpack.c.0.s8 %v4965
    %v4967 = vperm.slane %v4961, %v4966
    %v4969 = vunpack.c.l.s4 1983009808
    %v4970 = vunpack.c.0.s8 %v4969
    %v4971 = vperm.slane %v4963, %v4970
    %v4972 = vrot.slane %v4889, 4
    %v4973 = vsel %vm176, %v4972, %v4825
    %v4974 = vrot.slane %v4825, 4
    %v4975 = vsel %vm176, %v4889, %v4974
    %v4977 = vunpack.c.l.s4 1983009808
    %v4978 = vunpack.c.0.s8 %v4977
    %v4979 = vperm.slane %v4973, %v4978
    %v4981 = vunpack.c.l.s4 1983009808
    %v4982 = vunpack.c.0.s8 %v4981
    %v4983 = vperm.slane %v4975, %v4982
    %v4984 = vrot.slane %v4979, 4
    %v4985 = vsel %vm176, %v4984, %v4967
    %v4986 = vrot.slane %v4967, 4
    %v4987 = vsel %vm176, %v4979, %v4986
    %v4989 = vunpack.c.l.s4 1934713408
    %v4990 = vunpack.c.0.s8 %v4989
    %v4991 = vperm.slane %v4985, %v4990
    %v4993 = vunpack.c.l.s4 1934713408
    %v4994 = vunpack.c.0.s8 %v4993
    %v4995 = vperm.slane %v4987, %v4994
    %v4996 = vrot.slane %v4983, 4
    %v4997 = vsel %vm176, %v4996, %v4971
    %v4998 = vrot.slane %v4971, 4
    %v4999 = vsel %vm176, %v4983, %v4998
    %v5001 = vunpack.c.l.s4 1934713408
    %v5002 = vunpack.c.0.s8 %v5001
    %v5003 = vperm.slane %v4997, %v5002
    %v5005 = vunpack.c.l.s4 1934713408
    %v5006 = vunpack.c.0.s8 %v5005
    %v5007 = vperm.slane %v4999, %v5006
    %v5008 = vrot.slane %v4991, 4
    %v5009 = vsel %vm176, 0.0, %v5008
    %v5010 = vrot.slane %v4995, 4
    %v5011 = vsel %vm176, 0.0, %v5010
    %v5012 = vrot.slane %v5003, 4
    %v5013 = vsel %vm176, 0.0, %v5012
    %v5014 = vrot.slane %v5007, 4
    %v5015 = vsel %vm176, 0.0, %v5014
    %v5016 = vsel %vm176, %v4954, %v4935
    %v5018 = vunpack.c.l.s4 1983009808
    %v5019 = vunpack.c.0.s8 %v5018
    %v5020 = vperm.slane %v5016, %v5019
    %v5021 = vrot.slane %v4955, 4
    %v5022 = vsel %vm176, %v5021, %v4953
    %v5024 = vunpack.c.l.s4 1983009808
    %v5025 = vunpack.c.0.s8 %v5024
    %v5026 = vperm.slane %v5022, %v5025
    %v5027 = vsel %vm176, %v4958, %v4947
    %v5029 = vunpack.c.l.s4 1983009808
    %v5030 = vunpack.c.0.s8 %v5029
    %v5031 = vperm.slane %v5027, %v5030
    %v5032 = vrot.slane %v4959, 4
    %v5033 = vsel %vm176, %v5032, %v4957
    %v5035 = vunpack.c.l.s4 1983009808
    %v5036 = vunpack.c.0.s8 %v5035
    %v5037 = vperm.slane %v5033, %v5036
    %v5038 = vrot.slane %v5026, 4
    %v5039 = vsel %vm176, %v5038, %v5020
    %v5040 = vrot.slane %v5020, 4
    %v5041 = vsel %vm176, %v5026, %v5040
    %v5043 = vunpack.c.l.s4 1934713408
    %v5044 = vunpack.c.0.s8 %v5043
    %v5045 = vperm.slane %v5039, %v5044
    %v5047 = vunpack.c.l.s4 1934713408
    %v5048 = vunpack.c.0.s8 %v5047
    %v5049 = vperm.slane %v5041, %v5048
    %v5050 = vrot.slane %v5037, 4
    %v5051 = vsel %vm176, %v5050, %v5031
    %v5052 = vrot.slane %v5031, 4
    %v5053 = vsel %vm176, %v5037, %v5052
    %v5055 = vunpack.c.l.s4 1934713408
    %v5056 = vunpack.c.0.s8 %v5055
    %v5057 = vperm.slane %v5051, %v5056
    %v5059 = vunpack.c.l.s4 1934713408
    %v5060 = vunpack.c.0.s8 %v5059
    %v5061 = vperm.slane %v5053, %v5060
    %v5062 = vrot.slane %v5057, 4
    %v5063 = vsel %vm176, %v5062, %v5045
    %v5064 = vrot.slane %v5045, 4
    %v5065 = vsel %vm176, %v5057, %v5064
    %v5066 = vrot.slane %v5061, 4
    %v5067 = vsel %vm176, %v5066, %v5049
    %v5068 = vrot.slane %v5049, 4
    %v5069 = vsel %vm176, %v5061, %v5068
    %v5070 = vsel %vm176, %v5010, %v4991
    %v5072 = vunpack.c.l.s4 1983009808
    %v5073 = vunpack.c.0.s8 %v5072
    %v5074 = vperm.slane %v5070, %v5073
    %v5075 = vrot.slane %v5011, 4
    %v5076 = vsel %vm176, %v5075, %v5009
    %v5078 = vunpack.c.l.s4 1983009808
    %v5079 = vunpack.c.0.s8 %v5078
    %v5080 = vperm.slane %v5076, %v5079
    %v5081 = vsel %vm176, %v5014, %v5003
    %v5083 = vunpack.c.l.s4 1983009808
    %v5084 = vunpack.c.0.s8 %v5083
    %v5085 = vperm.slane %v5081, %v5084
    %v5086 = vrot.slane %v5015, 4
    %v5087 = vsel %vm176, %v5086, %v5013
    %v5089 = vunpack.c.l.s4 1983009808
    %v5090 = vunpack.c.0.s8 %v5089
    %v5091 = vperm.slane %v5087, %v5090
    %v5092 = vrot.slane %v5080, 4
    %v5093 = vsel %vm176, %v5092, %v5074
    %v5094 = vrot.slane %v5074, 4
    %v5095 = vsel %vm176, %v5080, %v5094
    %v5097 = vunpack.c.l.s4 1934713408
    %v5098 = vunpack.c.0.s8 %v5097
    %v5099 = vperm.slane %v5093, %v5098
    %v5101 = vunpack.c.l.s4 1934713408
    %v5102 = vunpack.c.0.s8 %v5101
    %v5103 = vperm.slane %v5095, %v5102
    %v5104 = vrot.slane %v5091, 4
    %v5105 = vsel %vm176, %v5104, %v5085
    %v5106 = vrot.slane %v5085, 4
    %v5107 = vsel %vm176, %v5091, %v5106
    %v5109 = vunpack.c.l.s4 1934713408
    %v5110 = vunpack.c.0.s8 %v5109
    %v5111 = vperm.slane %v5105, %v5110
    %v5113 = vunpack.c.l.s4 1934713408
    %v5114 = vunpack.c.0.s8 %v5113
    %v5115 = vperm.slane %v5107, %v5114
    %v5116 = vrot.slane %v5111, 4
    %v5117 = vsel %vm176, %v5116, %v5099
    %v5118 = vrot.slane %v5099, 4
    %v5119 = vsel %vm176, %v5111, %v5118
    %v5120 = vrot.slane %v5115, 4
    %v5121 = vsel %vm176, %v5120, %v5103
    %v5122 = vrot.slane %v5103, 4
    %v5123 = vsel %vm176, %v5115, %v5122
    %5126 = vrot.lane.b32.xlu0 %v5065, 8
    %v5127 = vpop.permute.xlu0 %5126
    %5128 = vrot.lane.b32.xlu0 %v5119, 8
    %v5129 = vpop.permute.xlu0 %5128
    %5134 = vrot.lane.b32.xlu0 %v5067, 16
    %v5135 = vpop.permute.xlu0 %5134
    %5136 = vrot.lane.b32.xlu0 %v5121, 16
    %v5137 = vpop.permute.xlu0 %5136
    %5142 = vrot.lane.b32.xlu0 %v5069, 24
    %v5143 = vpop.permute.xlu0 %5142
    %5144 = vrot.lane.b32.xlu0 %v5123, 24
    %v5145 = vpop.permute.xlu0 %5144
    %v5148 = vsel %vm1296, %v5063, %v5127
    %v5149 = vsel %vm1296, %v5117, %v5129
    %v5150 = vsel %vm1387, %v5148, %v5135
    %v5151 = vsel %vm1387, %v5149, %v5137
    %v5152 = vsel %vm2536, %v5150, %v5143
    %v5153 = vsel %vm2536, %v5151, %v5145
    %v5154 = vpack.c.bf16 %v5153, %v5152
    %v5156 = vsel %vm137, %v5154, 0
    %5158 = vmatpush.bf16.msra.mxu0 0
    %5159 = vmatpush.bf16.msra.mxu0 0
    %5160 = vmatpush.bf16.msra.mxu0 0
    %5161 = vmatpush.bf16.msra.mxu0 0
    %5162 = vmatpush.bf16.msra.mxu0 0
    %5163 = vmatpush.bf16.msra.mxu0 0
    %5164 = vmatpush.bf16.msra.mxu0 %v2550
    %5165 = vmatpush.bf16.msra.mxu0 %v2549
    %5166 = vmatmul.bf16.gmra.mxu0 %v5156
    %v5167 = vpop.f32.mrf.mxu0
    %v5168 = vadd.f32 %v2540, %v5167
    %v5169 = vpop.f32.mrf.mxu0
    %v5170 = vadd.f32 %v2540, %v5169
    %5171 = vdwg.mxu0
    %v5172 = vadd.f32 %v2756, %v5168
    %v5173 = vadd.f32 %v2757, %v5170
    %v5174 = vsel %vm137, %v5172, 0.0
    %5175 = vadd.xlane.f32.xlu0 %v5174
    %v5176 = vpop.xlane.xlu0 %5175
    %v5177 = vsel %vm137, %v5173, 0.0
    %5178 = vadd.xlane.f32.xlu0 %v5177
    %v5179 = vpop.xlane.xlu0 %5178
    %v5180 = vmul.f32 %v5176, %v2584
    %v5181 = vmul.f32 %v5179, %v2584
    %v5182 = vsub.f32 %v5172, %v5180
    %v5183 = vsub.f32 %v5173, %v5181
    %v5184 = vmul.f32 %v5182, %v5182
    %v5185 = vmul.f32 %v5183, %v5183
    %v5186 = vsel %vm137, %v5184, 0.0
    %5187 = vadd.xlane.f32.xlu0 %v5186
    %v5188 = vpop.xlane.xlu0 %5187
    %v5189 = vsel %vm137, %v5185, 0.0
    %5190 = vadd.xlane.f32.xlu0 %v5189
    %v5191 = vpop.xlane.xlu0 %5190
    %v5192 = vmul.f32 %v5188, %v2584
    %v5193 = vmul.f32 %v5191, %v2584
    %v5194 = vadd.f32 %v5192, 1e-05
    %v5195 = vadd.f32 %v5193, 1e-05
    %v5196 = vrsqrt.pop %v5194
    %v5197 = vmul.f32 %v5196, %v5194
    %v5198 = vmul.f32 %v5197, %v5196
    %v5199 = vmul.f32 0.5, %v5198
    %v5200 = vsub.f32 1.5, %v5199
    %v5201 = vmul.f32 %v5196, %v5200
    %vm5202 = vweird.f32 %v5194
    %vm5203 = vweird.f32 %v5196
    %vm5204 = vmor %vm5202, %vm5203
    %v5205 = vsel %vm5204, %v5196, %v5201
    %v5206 = vrsqrt.pop %v5195
    %v5207 = vmul.f32 %v5206, %v5195
    %v5208 = vmul.f32 %v5207, %v5206
    %v5209 = vmul.f32 0.5, %v5208
    %v5210 = vsub.f32 1.5, %v5209
    %v5211 = vmul.f32 %v5206, %v5210
    %vm5212 = vweird.f32 %v5195
    %vm5213 = vweird.f32 %v5206
    %vm5214 = vmor %vm5212, %vm5213
    %v5215 = vsel %vm5214, %v5206, %v5211
    %v5216 = vmul.f32 %v5182, %v5205
    %v5217 = vmul.f32 %v5183, %v5215
    %v5218 = vmul.f32 %v5216, %v2623
    %v5219 = vmul.f32 %v5217, %v2623
    %v5220 = vadd.f32 %v5218, %v2626
    %v5221 = vadd.f32 %v5219, %v2626
    %v5222 = vpack.c.bf16 %v5221, %v5220
    %v5224 = vsel %vm137, %v5222, 0
    %5226 = vmatpush.bf16.msra.mxu0 0
    %5227 = vmatpush.bf16.msra.mxu0 0
    %5228 = vmatpush.bf16.msra.mxu0 0
    %5229 = vmatpush.bf16.msra.mxu0 0
    %5230 = vmatpush.bf16.msra.mxu0 0
    %5231 = vmatpush.bf16.msra.mxu0 0
    %5232 = vmatpush.bf16.msra.mxu0 %v2640
    %5233 = vmatpush.bf16.msra.mxu0 %v2639
    %5234 = vmatmul.bf16.gmra.mxu0 %v5224
    %v5235 = vpop.f32.mrf.mxu0
    %v5236 = vadd.f32 %v2630, %v5235
    %v5237 = vpop.f32.mrf.mxu0
    %v5238 = vadd.f32 %v2630, %v5237
    %5239 = vdwg.mxu0
    %v5240 = vmax.f32 %v5236, 0.0
    %v5241 = vmax.f32 %v5238, 0.0
    %v5242 = vpack.c.bf16 %v5241, %v5240
    %v5244 = vsel %vm2688, %v5242, 0
    %5246 = vmatpush.bf16.msra.mxu0 0
    %5247 = vmatpush.bf16.msra.mxu0 0
    %5248 = vmatpush.bf16.msra.mxu0 0
    %5249 = vmatpush.bf16.msra.mxu0 0
    %5250 = vmatpush.bf16.msra.mxu0 %v2683
    %5251 = vmatpush.bf16.msra.mxu0 %v2682
    %5252 = vmatpush.bf16.msra.mxu0 %v2681
    %5253 = vmatpush.bf16.msra.mxu0 %v2680
    %5254 = vmatmul.bf16.gmra.mxu0 %v5244
    %v5255 = vpop.f32.mrf.mxu0
    %v5256 = vadd.f32 %v2663, %v5255
    %v5257 = vpop.f32.mrf.mxu0
    %v5258 = vadd.f32 %v2663, %v5257
    %5259 = vdwg.mxu0
    %v5260 = vadd.f32 %v5220, %v5256
    %v5261 = vadd.f32 %v5221, %v5258
    %v5262 = vsel %vm137, %v5260, 0.0
    %5263 = vadd.xlane.f32.xlu0 %v5262
    %v5264 = vpop.xlane.xlu0 %5263
    %v5265 = vsel %vm137, %v5261, 0.0
    %5266 = vadd.xlane.f32.xlu0 %v5265
    %v5267 = vpop.xlane.xlu0 %5266
    %v5268 = vmul.f32 %v5264, %v2584
    %v5269 = vmul.f32 %v5267, %v2584
    %v5270 = vsub.f32 %v5260, %v5268
    %v5271 = vsub.f32 %v5261, %v5269
    %v5272 = vmul.f32 %v5270, %v5270
    %v5273 = vmul.f32 %v5271, %v5271
    %v5274 = vsel %vm137, %v5272, 0.0
    %5275 = vadd.xlane.f32.xlu0 %v5274
    %v5276 = vpop.xlane.xlu0 %5275
    %v5277 = vsel %vm137, %v5273, 0.0
    %5278 = vadd.xlane.f32.xlu0 %v5277
    %v5279 = vpop.xlane.xlu0 %5278
    %v5280 = vmul.f32 %v5276, %v2584
    %v5281 = vmul.f32 %v5279, %v2584
    %v5282 = vadd.f32 %v5280, 1e-05
    %v5283 = vadd.f32 %v5281, 1e-05
    %v5284 = vrsqrt.pop %v5282
    %v5285 = vmul.f32 %v5284, %v5282
    %v5286 = vmul.f32 %v5285, %v5284
    %v5287 = vmul.f32 0.5, %v5286
    %v5288 = vsub.f32 1.5, %v5287
    %v5289 = vmul.f32 %v5284, %v5288
    %vm5290 = vweird.f32 %v5282
    %vm5291 = vweird.f32 %v5284
    %vm5292 = vmor %vm5290, %vm5291
    %v5293 = vsel %vm5292, %v5284, %v5289
    %v5294 = vrsqrt.pop %v5283
    %v5295 = vmul.f32 %v5294, %v5283
    %v5296 = vmul.f32 %v5295, %v5294
    %v5297 = vmul.f32 0.5, %v5296
    %v5298 = vsub.f32 1.5, %v5297
    %v5299 = vmul.f32 %v5294, %v5298
    %vm5300 = vweird.f32 %v5283
    %vm5301 = vweird.f32 %v5294
    %vm5302 = vmor %vm5300, %vm5301
    %v5303 = vsel %vm5302, %v5294, %v5299
    %v5304 = vmul.f32 %v5270, %v5293
    %v5305 = vmul.f32 %v5271, %v5303
    %v5306 = vmul.f32 %v5304, %v2752
    %v5307 = vmul.f32 %v5305, %v2752
    %v5308 = vadd.f32 %v5306, %v2755
    %v5309 = vadd.f32 %v5307, %v2755
    %5310 = vst.msk [vmem:[#allocation7] sm:$0xff] %vm137, %v5308
    %5311 = vst.msk [vmem:[#allocation7 + $0x8] sm:$0xff] %vm137, %v5309
    // Predicated region
    $region34: #{tpu_custom_call.1} parent=1 // pred_check
      _
    $region35: #{tpu_custom_call.1} parent=1 // pred_check_branch
      %5313 = sbr.rel (0) target = $region37
    $region36: #{tpu_custom_call.1} parent=1 // pred_region
      %5315 = vsyncadd [#allocation4], 0
      %s5316 = sshll.u32 [#allocation7], 4
      %s5317 = int_to_ptr.vmem [resolvable:$true] %s5316
      %s5318 = sshll.u32 %s6, 4
      %s5319 = int_to_ptr.hbm [resolvable:$true] %s5318
      %5324 = dma.vmem_to_hbm [thread:$0]  %s5317, 256, %s5319, [#allocation4], 128, 128, 8
    $region37: #{tpu_custom_call.1} parent=1 // pred_fallthru
      _
    // Predicated region
    $region38: #{tpu_custom_call.1} parent=1 // pred_check
      _
    $region39: #{tpu_custom_call.1} parent=1 // pred_check_branch
      %5326 = sbr.rel (0) target = $region41
    $region40: #{tpu_custom_call.1} parent=1 // pred_region
      %5328 = dma.done [#allocation4], 256
    $region41: #{tpu_custom_call.1} parent=1 // pred_fallthru
      _
    %5329 = vsyncpa [#allocation3], 1
    %5330 = vsyncpa [#allocation6], 1
    %5331 = vsyncpa [#allocation4], 1

</llo_original>
